<compile_context>
chip_gen: v5e
topology: v5e:2x2
jax: 0.10.0
libtpu: 0.0.40
codegen_flags: <defaults>
</compile_context>

<pallas_src>
import math

import jax
import jax.numpy as jnp
from jax import lax
from jax.experimental import pallas as pl
from jax.experimental.pallas import tpu as pltpu


def _vmem_limit_bytes():
    """Per-generation VMEM budget: ~75% of physical, capped at 100 MiB.

    v5e/v6e (128 MiB) -> 96 MiB, v7x (64 MiB) -> 48 MiB. Conservative fallback
    if the hardware query is unavailable or returns something implausible.
    """
    mib = 1024 * 1024
    try:
        cap = int(pltpu.get_tpu_info().vmem_capacity_bytes)
    except Exception:
        return 48 * mib
    if cap < 32 * mib or cap > 256 * mib:
        return 48 * mib
    return int(min(0.75 * cap, 100 * mib))


# ----------------------------------------------------------------------------
# Kernel 1: fused Q/K/V projection, emitted directly in head-split layout.
#   x_ref   : [row_tile, H]         bf16
#   w_ref   : [3*NH, H, d]          bf16  (1/sqrt(d) folded into the Q heads)
#   b_ref   : [3*NH, 1, d]          f32   (1/sqrt(d) folded into the Q heads)
#   out_ref : [3*NH, row_tile, d]   bf16  -> qkv3[j] = x @ W_j + b_j
# Per-head dots trade some MXU lane occupancy (d < 128) for zero in-kernel
# relayout; the projection is a small fraction of total time vs. attention.
# ----------------------------------------------------------------------------
def qkv_proj_kernel(x_ref, w_ref, b_ref, out_ref):
    x = x_ref[...]                            # bf16, MXU-native
    n_slots = w_ref.shape[0]                  # 3 * num_heads (static)
    for j in range(n_slots):
        y = jnp.dot(x, w_ref[j], preferred_element_type=jnp.float32)
        out_ref[j] = (y + b_ref[j]).astype(out_ref.dtype)


# ----------------------------------------------------------------------------
# Kernel 2: per-(batch, head) flash attention with additive mask (online softmax).
#   grid = (B, NH, S//q_tile, S//kv_tile), kv axis innermost / "arbitrary".
#   q_ref    : [1, q_tile, d]   bf16 (scale already folded into W_q)
#   k_ref    : [1, kv_tile, d]  bf16
#   v_ref    : [1, kv_tile, d]  bf16
#   mask_ref : [1, 1, kv_tile]  f32  (additive, e.g. 0 / -10000)
#   o_ref    : [1, 1, q_tile, d]
# ----------------------------------------------------------------------------
def flash_attn_kernel(q_ref, k_ref, v_ref, mask_ref, o_ref, m_sc, l_sc, acc_sc):
    ki = pl.program_id(3)

    @pl.when(ki == 0)
    def _():
        m_sc[...] = jnp.full(m_sc.shape, -jnp.inf, jnp.float32)
        l_sc[...] = jnp.zeros(l_sc.shape, jnp.float32)
        acc_sc[...] = jnp.zeros(acc_sc.shape, jnp.float32)

    q = q_ref[0]                              # [q_tile, d]  bf16
    k = k_ref[0]                              # [kv_tile, d] bf16
    v = v_ref[0]                              # [kv_tile, d] bf16

    # scores = q @ k^T on the MXU (bf16 operands, f32 accumulate)
    s = lax.dot_general(q, k, (((1,), (1,)), ((), ())),
                        preferred_element_type=jnp.float32)
    s = s + mask_ref[0]                       # (1, kv_tile) broadcast over q rows

    m_prev = m_sc[...]
    m_new = jnp.maximum(m_prev, jnp.max(s, axis=-1, keepdims=True))
    alpha = jnp.exp(m_prev - m_new)
    # exp of the big score tile in bf16 (fast EUP path on v6e/v7x; upcast on v5e)
    p = jnp.exp((s - m_new).astype(jnp.bfloat16))

    l_sc[...] = alpha * l_sc[...] + jnp.sum(p.astype(jnp.float32),
                                            axis=-1, keepdims=True)
    acc_sc[...] = alpha * acc_sc[...] + jnp.dot(p, v,
                                                preferred_element_type=jnp.float32)
    m_sc[...] = m_new

    @pl.when(ki == pl.num_programs(3) - 1)
    def _():
        inv = pl.reciprocal(l_sc[...], approx=True)
        o_ref[0, 0, :, :] = (acc_sc[...] * inv).astype(o_ref.dtype)


# ----------------------------------------------------------------------------
# JAX wrapper reproducing TfSelfAttention.forward (eval mode: dropout = identity)
# ----------------------------------------------------------------------------
def tf_self_attention(hidden_states, attention_mask, params, *, num_heads,
                      row_tile=512, q_tile=256, kv_tile=512):
    B, S, H = hidden_states.shape
    assert H % num_heads == 0
    NH = num_heads
    d = H // NH
    N = B * S

    row_tile = min(row_tile, N)
    q_tile = min(q_tile, S)
    kv_tile = min(kv_tile, S)
    assert N % row_tile == 0 and S % q_tile == 0 and S % kv_tile == 0

    vmem_limit = _vmem_limit_bytes()
    out_dtype = hidden_states.dtype

    # ---- one-time parameter prep: head-split layout, bf16, scale folded into Q --
    w = params["w_qkv"]                          # [H, 3H], columns = [Q | K | V]
    bias = params["b_qkv"].reshape(3 * H)        # f32
    scale = jnp.concatenate([jnp.full((NH,), 1.0 / math.sqrt(d), jnp.float32),
                             jnp.ones((2 * NH,), jnp.float32)])
    w3 = w.reshape(H, 3 * NH, d).transpose(1, 0, 2) * scale[:, None, None]
    b3 = bias.reshape(3 * NH, 1, d) * scale[:, None, None]
    w3 = w3.astype(jnp.bfloat16)
    b3 = b3.astype(jnp.float32)

    x2d = hidden_states.reshape(N, H).astype(jnp.bfloat16)

    # ---- fused QKV projection: qkv3[sec*NH + h, b*S + s, :] ---------------------
    qkv3 = pl.pallas_call(
        qkv_proj_kernel,
        out_shape=jax.ShapeDtypeStruct((3 * NH, N, d), jnp.bfloat16),
        grid_spec=pltpu.PrefetchScalarGridSpec(
            num_scalar_prefetch=0,
            grid=(N // row_tile,),
            in_specs=[
                pl.BlockSpec((row_tile, H), lambda i: (i, 0)),        # x rows
                pl.BlockSpec((3 * NH, H, d), lambda i: (0, 0, 0)),    # W (resident)
                pl.BlockSpec((3 * NH, 1, d), lambda i: (0, 0, 0)),    # bias
            ],
            out_specs=pl.BlockSpec((3 * NH, row_tile, d), lambda i: (0, i, 0)),
        ),
        compiler_params=pltpu.CompilerParams(
            dimension_semantics=("parallel",),
            vmem_limit_bytes=vmem_limit),
    )(x2d, w3, b3)

    # ---- additive attention mask: one value per (batch, key) --------------------
    am = attention_mask
    if am.ndim == 4:
        assert am.shape[1] == 1 and am.shape[2] == 1, (
            "only broadcastable [B,1,1,S] masks are supported")
        am = am.reshape(B, S)
    assert am.shape == (B, S)
    mask3 = am.reshape(B, 1, S).astype(jnp.float32)

    sq, sk = S // q_tile, S // kv_tile

    # ---- flash attention: grid over (batch, head, q tile, kv tile) --------------
    ctx = pl.pallas_call(
        flash_attn_kernel,
        out_shape=jax.ShapeDtypeStruct((B, NH, S, d), out_dtype),
        grid_spec=pltpu.PrefetchScalarGridSpec(
            num_scalar_prefetch=0,
            grid=(B, NH, sq, sk),
            in_specs=[
                # q / k / v read straight out of the fused head-split qkv3 buffer
                pl.BlockSpec((1, q_tile, d),
                             lambda bi, hi, qi, ki: (hi, bi * sq + qi, 0)),
                pl.BlockSpec((1, kv_tile, d),
                             lambda bi, hi, qi, ki: (NH + hi, bi * sk + ki, 0)),
                pl.BlockSpec((1, kv_tile, d),
                             lambda bi, hi, qi, ki: (2 * NH + hi, bi * sk + ki, 0)),
                pl.BlockSpec((1, 1, kv_tile),
                             lambda bi, hi, qi, ki: (bi, 0, ki)),
            ],
            out_specs=pl.BlockSpec((1, 1, q_tile, d),
                                   lambda bi, hi, qi, ki: (bi, hi, qi, 0)),
            scratch_shapes=[
                pltpu.VMEM((q_tile, 1), jnp.float32),   # running max
                pltpu.VMEM((q_tile, 1), jnp.float32),   # running denom
                pltpu.VMEM((q_tile, d), jnp.float32),   # output accumulator
            ],
        ),
        compiler_params=pltpu.CompilerParams(
            dimension_semantics=("parallel", "parallel", "parallel", "arbitrary"),
            vmem_limit_bytes=vmem_limit),
    )(qkv3, qkv3, qkv3, mask3)

    # TODO(synk): attention-probs dropout not applied (eval/inference semantics);
    # a train-mode version would draw a mask with pltpu.prng_seed/prng_random_bits.
    # TODO(synk): the final head-merge is one XLA transpose; a lane-dense in-kernel
    # merge needs d >= 128 (here d < 128) to be expressible with valid BlockSpecs.
    return ctx.transpose(0, 2, 1, 3).reshape(B, S, H)


# ----------------------------------------------------------------------------
# Synthetic parameters (nn.Linear weights pre-transposed so kernel does x @ W)
# ----------------------------------------------------------------------------
def make_params(key, hidden_size):
    ks = jax.random.split(key, 4)
    scale = 0.02
    wq = scale * jax.random.normal(ks[0], (hidden_size, hidden_size))
    wk = scale * jax.random.normal(ks[1], (hidden_size, hidden_size))
    wv = scale * jax.random.normal(ks[2], (hidden_size, hidden_size))
    b = scale * jax.random.normal(ks[3], (3 * hidden_size,))
    return {
        "w_qkv": jnp.concatenate([wq, wk, wv], axis=1).astype(jnp.float32),
        "b_qkv": b.reshape(1, 3 * hidden_size).astype(jnp.float32),
    }


def _reference(hidden_states, attention_mask, params, num_heads):
    """Pure-JAX f32 reference matching the PyTorch forward."""
    B, S, H = hidden_states.shape
    d = H // num_heads
    qkv = hidden_states @ params["w_qkv"] + params["b_qkv"][0]
    q, k, v = qkv[..., :H], qkv[..., H:2 * H], qkv[..., 2 * H:]

    def heads(t):
        return t.reshape(B, S, num_heads, d).transpose(0, 2, 1, 3)

    q, k, v = heads(q), heads(k), heads(v)
    scores = jnp.einsum('bhqd,bhkd->bhqk', q, k) / math.sqrt(d)
    scores = scores + attention_mask.reshape(B, 1, 1, S)
    probs = jax.nn.softmax(scores, axis=-1)
    ctx = jnp.einsum('bhqk,bhkd->bhqd', probs, v)
    return ctx.transpose(0, 2, 1, 3).reshape(B, S, H)


if __name__ == "__main__":
    B, S, H, NH = 2, 128, 128, 4
    key = jax.random.PRNGKey(0)
    k_x, k_p = jax.random.split(key, 2)

    hidden_states = jax.random.normal(k_x, (B, S, H), jnp.float32)
    # standard additive BERT mask: 0 = attend, -10000 = masked; batch 1 masks the tail
    valid = jnp.arange(S)[None, :] < jnp.array([S, S - 16])[:, None]
    attention_mask = jnp.where(valid, 0.0, -10000.0).astype(jnp.float32)
    attention_mask = attention_mask.reshape(B, 1, 1, S)

    params = make_params(k_p, H)

    out = tf_self_attention(hidden_states, attention_mask, params, num_heads=NH)
    out = jax.block_until_ready(out)

    ref = _reference(hidden_states, attention_mask, params, NH)
    assert out.shape == (B, S, H)
    max_err = float(jnp.max(jnp.abs(out - ref)))
    # bf16 MXU / bf16 exp path -> loosened tolerance vs the f32 reference
    assert max_err < 2e-2, max_err

    print("KERNEL_OK")
</pallas_src>

<mosaic_0001>
module attributes {stable_mosaic.version = 11 : i64} {
  func.func @qkv_proj_kernel(%arg0: i32, %arg1: memref<256x128xbf16, #tpu.memory_space<vmem>>, %arg2: memref<12x128x32xbf16, #tpu.memory_space<vmem>>, %arg3: memref<12x1x32xf32, #tpu.memory_space<vmem>>, %arg4: memref<12x256x32xbf16, #tpu.memory_space<vmem>>) attributes {dimension_semantics = [#tpu.dimension_semantics<parallel>], iteration_bounds = array<i64: 1>, scalar_prefetch = 0 : i64, scratch_operands = 0 : i64, tpu.core_type = #tpu.core_type<tc>, window_params = [{transform_indices = @transform_0, window_bounds = array<i64: 256, 128>}, {pipeline_mode = #tpu.pipeline_mode<synchronous>, transform_indices = @transform_1, window_bounds = array<i64: 12, 128, 32>}, {pipeline_mode = #tpu.pipeline_mode<synchronous>, transform_indices = @transform_2, window_bounds = array<i64: 12, 1, 32>}, {transform_indices = @transform_3, window_bounds = array<i64: 12, 256, 32>}]} {
    %c0 = arith.constant 0 : index
    %c0_0 = arith.constant 0 : index
    %0 = vector.load %arg1[%c0, %c0_0] : memref<256x128xbf16, #tpu.memory_space<vmem>>, vector<256x128xbf16>
    %c0_1 = arith.constant 0 : index
    %c0_2 = arith.constant 0 : index
    %c0_3 = arith.constant 0 : index
    %1 = vector.load %arg2[%c0_1, %c0_2, %c0_3] : memref<12x128x32xbf16, #tpu.memory_space<vmem>>, vector<1x128x32xbf16>
    %2 = vector.shape_cast %1 : vector<1x128x32xbf16> to vector<128x32xbf16>
    %cst = arith.constant dense<0.000000e+00> : vector<256x32xf32>
    %3 = tpu.matmul %0, %2, %cst {dimension_numbers = #tpu.dot_dimension_numbers<[1], [0], [0], [1], [0, 0, 1, 1], [], []>} : vector<256x128xbf16>, vector<128x32xbf16>, vector<256x32xf32> -> vector<256x32xf32>
    %c0_4 = arith.constant 0 : index
    %c0_5 = arith.constant 0 : index
    %c0_6 = arith.constant 0 : index
    %4 = vector.load %arg3[%c0_4, %c0_5, %c0_6] : memref<12x1x32xf32, #tpu.memory_space<vmem>>, vector<1x1x32xf32>
    %5 = vector.shape_cast %4 : vector<1x1x32xf32> to vector<1x32xf32>
    %6 = vector.broadcast %5 : vector<1x32xf32> to vector<256x32xf32>
    %7 = arith.addf %3, %6 : vector<256x32xf32>
    %8 = arith.truncf %7 : vector<256x32xf32> to vector<256x32xbf16>
    %c0_7 = arith.constant 0 : index
    %c0_8 = arith.constant 0 : index
    %c0_9 = arith.constant 0 : index
    %9 = vector.load %arg4[%c0_7, %c0_8, %c0_9] : memref<12x256x32xbf16, #tpu.memory_space<vmem>>, vector<1x256x32xbf16>
    %10 = vector.shape_cast %9 : vector<1x256x32xbf16> to vector<256x32xbf16>
    %11 = vector.shape_cast %8 : vector<256x32xbf16> to vector<1x256x32xbf16>
    tpu.vector_store %arg4[%c0_7, %c0_8, %c0_9], %11 {strides = array<i32>} : memref<12x256x32xbf16, #tpu.memory_space<vmem>>, vector<1x256x32xbf16>,
    %c1 = arith.constant 1 : index
    %c0_10 = arith.constant 0 : index
    %c0_11 = arith.constant 0 : index
    %12 = vector.load %arg2[%c1, %c0_10, %c0_11] : memref<12x128x32xbf16, #tpu.memory_space<vmem>>, vector<1x128x32xbf16>
    %13 = vector.shape_cast %12 : vector<1x128x32xbf16> to vector<128x32xbf16>
    %cst_12 = arith.constant dense<0.000000e+00> : vector<256x32xf32>
    %14 = tpu.matmul %0, %13, %cst_12 {dimension_numbers = #tpu.dot_dimension_numbers<[1], [0], [0], [1], [0, 0, 1, 1], [], []>} : vector<256x128xbf16>, vector<128x32xbf16>, vector<256x32xf32> -> vector<256x32xf32>
    %c1_13 = arith.constant 1 : index
    %c0_14 = arith.constant 0 : index
    %c0_15 = arith.constant 0 : index
    %15 = vector.load %arg3[%c1_13, %c0_14, %c0_15] : memref<12x1x32xf32, #tpu.memory_space<vmem>>, vector<1x1x32xf32>
    %16 = vector.shape_cast %15 : vector<1x1x32xf32> to vector<1x32xf32>
    %17 = vector.broadcast %16 : vector<1x32xf32> to vector<256x32xf32>
    %18 = arith.addf %14, %17 : vector<256x32xf32>
    %19 = arith.truncf %18 : vector<256x32xf32> to vector<256x32xbf16>
    %c1_16 = arith.constant 1 : index
    %c0_17 = arith.constant 0 : index
    %c0_18 = arith.constant 0 : index
    %20 = vector.load %arg4[%c1_16, %c0_17, %c0_18] : memref<12x256x32xbf16, #tpu.memory_space<vmem>>, vector<1x256x32xbf16>
    %21 = vector.shape_cast %20 : vector<1x256x32xbf16> to vector<256x32xbf16>
    %22 = vector.shape_cast %19 : vector<256x32xbf16> to vector<1x256x32xbf16>
    tpu.vector_store %arg4[%c1_16, %c0_17, %c0_18], %22 {strides = array<i32>} : memref<12x256x32xbf16, #tpu.memory_space<vmem>>, vector<1x256x32xbf16>,
    %c2 = arith.constant 2 : index
    %c0_19 = arith.constant 0 : index
    %c0_20 = arith.constant 0 : index
    %23 = vector.load %arg2[%c2, %c0_19, %c0_20] : memref<12x128x32xbf16, #tpu.memory_space<vmem>>, vector<1x128x32xbf16>
    %24 = vector.shape_cast %23 : vector<1x128x32xbf16> to vector<128x32xbf16>
    %cst_21 = arith.constant dense<0.000000e+00> : vector<256x32xf32>
    %25 = tpu.matmul %0, %24, %cst_21 {dimension_numbers = #tpu.dot_dimension_numbers<[1], [0], [0], [1], [0, 0, 1, 1], [], []>} : vector<256x128xbf16>, vector<128x32xbf16>, vector<256x32xf32> -> vector<256x32xf32>
    %c2_22 = arith.constant 2 : index
    %c0_23 = arith.constant 0 : index
    %c0_24 = arith.constant 0 : index
    %26 = vector.load %arg3[%c2_22, %c0_23, %c0_24] : memref<12x1x32xf32, #tpu.memory_space<vmem>>, vector<1x1x32xf32>
    %27 = vector.shape_cast %26 : vector<1x1x32xf32> to vector<1x32xf32>
    %28 = vector.broadcast %27 : vector<1x32xf32> to vector<256x32xf32>
    %29 = arith.addf %25, %28 : vector<256x32xf32>
    %30 = arith.truncf %29 : vector<256x32xf32> to vector<256x32xbf16>
    %c2_25 = arith.constant 2 : index
    %c0_26 = arith.constant 0 : index
    %c0_27 = arith.constant 0 : index
    %31 = vector.load %arg4[%c2_25, %c0_26, %c0_27] : memref<12x256x32xbf16, #tpu.memory_space<vmem>>, vector<1x256x32xbf16>
    %32 = vector.shape_cast %31 : vector<1x256x32xbf16> to vector<256x32xbf16>
    %33 = vector.shape_cast %30 : vector<256x32xbf16> to vector<1x256x32xbf16>
    tpu.vector_store %arg4[%c2_25, %c0_26, %c0_27], %33 {strides = array<i32>} : memref<12x256x32xbf16, #tpu.memory_space<vmem>>, vector<1x256x32xbf16>,
    %c3 = arith.constant 3 : index
    %c0_28 = arith.constant 0 : index
    %c0_29 = arith.constant 0 : index
    %34 = vector.load %arg2[%c3, %c0_28, %c0_29] : memref<12x128x32xbf16, #tpu.memory_space<vmem>>, vector<1x128x32xbf16>
    %35 = vector.shape_cast %34 : vector<1x128x32xbf16> to vector<128x32xbf16>
    %cst_30 = arith.constant dense<0.000000e+00> : vector<256x32xf32>
    %36 = tpu.matmul %0, %35, %cst_30 {dimension_numbers = #tpu.dot_dimension_numbers<[1], [0], [0], [1], [0, 0, 1, 1], [], []>} : vector<256x128xbf16>, vector<128x32xbf16>, vector<256x32xf32> -> vector<256x32xf32>
    %c3_31 = arith.constant 3 : index
    %c0_32 = arith.constant 0 : index
    %c0_33 = arith.constant 0 : index
    %37 = vector.load %arg3[%c3_31, %c0_32, %c0_33] : memref<12x1x32xf32, #tpu.memory_space<vmem>>, vector<1x1x32xf32>
    %38 = vector.shape_cast %37 : vector<1x1x32xf32> to vector<1x32xf32>
    %39 = vector.broadcast %38 : vector<1x32xf32> to vector<256x32xf32>
    %40 = arith.addf %36, %39 : vector<256x32xf32>
    %41 = arith.truncf %40 : vector<256x32xf32> to vector<256x32xbf16>
    %c3_34 = arith.constant 3 : index
    %c0_35 = arith.constant 0 : index
    %c0_36 = arith.constant 0 : index
    %42 = vector.load %arg4[%c3_34, %c0_35, %c0_36] : memref<12x256x32xbf16, #tpu.memory_space<vmem>>, vector<1x256x32xbf16>
    %43 = vector.shape_cast %42 : vector<1x256x32xbf16> to vector<256x32xbf16>
    %44 = vector.shape_cast %41 : vector<256x32xbf16> to vector<1x256x32xbf16>
    tpu.vector_store %arg4[%c3_34, %c0_35, %c0_36], %44 {strides = array<i32>} : memref<12x256x32xbf16, #tpu.memory_space<vmem>>, vector<1x256x32xbf16>,
    %c4 = arith.constant 4 : index
    %c0_37 = arith.constant 0 : index
    %c0_38 = arith.constant 0 : index
    %45 = vector.load %arg2[%c4, %c0_37, %c0_38] : memref<12x128x32xbf16, #tpu.memory_space<vmem>>, vector<1x128x32xbf16>
    %46 = vector.shape_cast %45 : vector<1x128x32xbf16> to vector<128x32xbf16>
    %cst_39 = arith.constant dense<0.000000e+00> : vector<256x32xf32>
    %47 = tpu.matmul %0, %46, %cst_39 {dimension_numbers = #tpu.dot_dimension_numbers<[1], [0], [0], [1], [0, 0, 1, 1], [], []>} : vector<256x128xbf16>, vector<128x32xbf16>, vector<256x32xf32> -> vector<256x32xf32>
    %c4_40 = arith.constant 4 : index
    %c0_41 = arith.constant 0 : index
    %c0_42 = arith.constant 0 : index
    %48 = vector.load %arg3[%c4_40, %c0_41, %c0_42] : memref<12x1x32xf32, #tpu.memory_space<vmem>>, vector<1x1x32xf32>
    %49 = vector.shape_cast %48 : vector<1x1x32xf32> to vector<1x32xf32>
    %50 = vector.broadcast %49 : vector<1x32xf32> to vector<256x32xf32>
    %51 = arith.addf %47, %50 : vector<256x32xf32>
    %52 = arith.truncf %51 : vector<256x32xf32> to vector<256x32xbf16>
    %c4_43 = arith.constant 4 : index
    %c0_44 = arith.constant 0 : index
    %c0_45 = arith.constant 0 : index
    %53 = vector.load %arg4[%c4_43, %c0_44, %c0_45] : memref<12x256x32xbf16, #tpu.memory_space<vmem>>, vector<1x256x32xbf16>
    %54 = vector.shape_cast %53 : vector<1x256x32xbf16> to vector<256x32xbf16>
    %55 = vector.shape_cast %52 : vector<256x32xbf16> to vector<1x256x32xbf16>
    tpu.vector_store %arg4[%c4_43, %c0_44, %c0_45], %55 {strides = array<i32>} : memref<12x256x32xbf16, #tpu.memory_space<vmem>>, vector<1x256x32xbf16>,
    %c5 = arith.constant 5 : index
    %c0_46 = arith.constant 0 : index
    %c0_47 = arith.constant 0 : index
    %56 = vector.load %arg2[%c5, %c0_46, %c0_47] : memref<12x128x32xbf16, #tpu.memory_space<vmem>>, vector<1x128x32xbf16>
    %57 = vector.shape_cast %56 : vector<1x128x32xbf16> to vector<128x32xbf16>
    %cst_48 = arith.constant dense<0.000000e+00> : vector<256x32xf32>
    %58 = tpu.matmul %0, %57, %cst_48 {dimension_numbers = #tpu.dot_dimension_numbers<[1], [0], [0], [1], [0, 0, 1, 1], [], []>} : vector<256x128xbf16>, vector<128x32xbf16>, vector<256x32xf32> -> vector<256x32xf32>
    %c5_49 = arith.constant 5 : index
    %c0_50 = arith.constant 0 : index
    %c0_51 = arith.constant 0 : index
    %59 = vector.load %arg3[%c5_49, %c0_50, %c0_51] : memref<12x1x32xf32, #tpu.memory_space<vmem>>, vector<1x1x32xf32>
    %60 = vector.shape_cast %59 : vector<1x1x32xf32> to vector<1x32xf32>
    %61 = vector.broadcast %60 : vector<1x32xf32> to vector<256x32xf32>
    %62 = arith.addf %58, %61 : vector<256x32xf32>
    %63 = arith.truncf %62 : vector<256x32xf32> to vector<256x32xbf16>
    %c5_52 = arith.constant 5 : index
    %c0_53 = arith.constant 0 : index
    %c0_54 = arith.constant 0 : index
    %64 = vector.load %arg4[%c5_52, %c0_53, %c0_54] : memref<12x256x32xbf16, #tpu.memory_space<vmem>>, vector<1x256x32xbf16>
    %65 = vector.shape_cast %64 : vector<1x256x32xbf16> to vector<256x32xbf16>
    %66 = vector.shape_cast %63 : vector<256x32xbf16> to vector<1x256x32xbf16>
    tpu.vector_store %arg4[%c5_52, %c0_53, %c0_54], %66 {strides = array<i32>} : memref<12x256x32xbf16, #tpu.memory_space<vmem>>, vector<1x256x32xbf16>,
    %c6 = arith.constant 6 : index
    %c0_55 = arith.constant 0 : index
    %c0_56 = arith.constant 0 : index
    %67 = vector.load %arg2[%c6, %c0_55, %c0_56] : memref<12x128x32xbf16, #tpu.memory_space<vmem>>, vector<1x128x32xbf16>
    %68 = vector.shape_cast %67 : vector<1x128x32xbf16> to vector<128x32xbf16>
    %cst_57 = arith.constant dense<0.000000e+00> : vector<256x32xf32>
    %69 = tpu.matmul %0, %68, %cst_57 {dimension_numbers = #tpu.dot_dimension_numbers<[1], [0], [0], [1], [0, 0, 1, 1], [], []>} : vector<256x128xbf16>, vector<128x32xbf16>, vector<256x32xf32> -> vector<256x32xf32>
    %c6_58 = arith.constant 6 : index
    %c0_59 = arith.constant 0 : index
    %c0_60 = arith.constant 0 : index
    %70 = vector.load %arg3[%c6_58, %c0_59, %c0_60] : memref<12x1x32xf32, #tpu.memory_space<vmem>>, vector<1x1x32xf32>
    %71 = vector.shape_cast %70 : vector<1x1x32xf32> to vector<1x32xf32>
    %72 = vector.broadcast %71 : vector<1x32xf32> to vector<256x32xf32>
    %73 = arith.addf %69, %72 : vector<256x32xf32>
    %74 = arith.truncf %73 : vector<256x32xf32> to vector<256x32xbf16>
    %c6_61 = arith.constant 6 : index
    %c0_62 = arith.constant 0 : index
    %c0_63 = arith.constant 0 : index
    %75 = vector.load %arg4[%c6_61, %c0_62, %c0_63] : memref<12x256x32xbf16, #tpu.memory_space<vmem>>, vector<1x256x32xbf16>
    %76 = vector.shape_cast %75 : vector<1x256x32xbf16> to vector<256x32xbf16>
    %77 = vector.shape_cast %74 : vector<256x32xbf16> to vector<1x256x32xbf16>
    tpu.vector_store %arg4[%c6_61, %c0_62, %c0_63], %77 {strides = array<i32>} : memref<12x256x32xbf16, #tpu.memory_space<vmem>>, vector<1x256x32xbf16>,
    %c7 = arith.constant 7 : index
    %c0_64 = arith.constant 0 : index
    %c0_65 = arith.constant 0 : index
    %78 = vector.load %arg2[%c7, %c0_64, %c0_65] : memref<12x128x32xbf16, #tpu.memory_space<vmem>>, vector<1x128x32xbf16>
    %79 = vector.shape_cast %78 : vector<1x128x32xbf16> to vector<128x32xbf16>
    %cst_66 = arith.constant dense<0.000000e+00> : vector<256x32xf32>
    %80 = tpu.matmul %0, %79, %cst_66 {dimension_numbers = #tpu.dot_dimension_numbers<[1], [0], [0], [1], [0, 0, 1, 1], [], []>} : vector<256x128xbf16>, vector<128x32xbf16>, vector<256x32xf32> -> vector<256x32xf32>
    %c7_67 = arith.constant 7 : index
    %c0_68 = arith.constant 0 : index
    %c0_69 = arith.constant 0 : index
    %81 = vector.load %arg3[%c7_67, %c0_68, %c0_69] : memref<12x1x32xf32, #tpu.memory_space<vmem>>, vector<1x1x32xf32>
    %82 = vector.shape_cast %81 : vector<1x1x32xf32> to vector<1x32xf32>
    %83 = vector.broadcast %82 : vector<1x32xf32> to vector<256x32xf32>
    %84 = arith.addf %80, %83 : vector<256x32xf32>
    %85 = arith.truncf %84 : vector<256x32xf32> to vector<256x32xbf16>
    %c7_70 = arith.constant 7 : index
    %c0_71 = arith.constant 0 : index
    %c0_72 = arith.constant 0 : index
    %86 = vector.load %arg4[%c7_70, %c0_71, %c0_72] : memref<12x256x32xbf16, #tpu.memory_space<vmem>>, vector<1x256x32xbf16>
    %87 = vector.shape_cast %86 : vector<1x256x32xbf16> to vector<256x32xbf16>
    %88 = vector.shape_cast %85 : vector<256x32xbf16> to vector<1x256x32xbf16>
    tpu.vector_store %arg4[%c7_70, %c0_71, %c0_72], %88 {strides = array<i32>} : memref<12x256x32xbf16, #tpu.memory_space<vmem>>, vector<1x256x32xbf16>,
    %c8 = arith.constant 8 : index
    %c0_73 = arith.constant 0 : index
    %c0_74 = arith.constant 0 : index
    %89 = vector.load %arg2[%c8, %c0_73, %c0_74] : memref<12x128x32xbf16, #tpu.memory_space<vmem>>, vector<1x128x32xbf16>
    %90 = vector.shape_cast %89 : vector<1x128x32xbf16> to vector<128x32xbf16>
    %cst_75 = arith.constant dense<0.000000e+00> : vector<256x32xf32>
    %91 = tpu.matmul %0, %90, %cst_75 {dimension_numbers = #tpu.dot_dimension_numbers<[1], [0], [0], [1], [0, 0, 1, 1], [], []>} : vector<256x128xbf16>, vector<128x32xbf16>, vector<256x32xf32> -> vector<256x32xf32>
    %c8_76 = arith.constant 8 : index
    %c0_77 = arith.constant 0 : index
    %c0_78 = arith.constant 0 : index
    %92 = vector.load %arg3[%c8_76, %c0_77, %c0_78] : memref<12x1x32xf32, #tpu.memory_space<vmem>>, vector<1x1x32xf32>
    %93 = vector.shape_cast %92 : vector<1x1x32xf32> to vector<1x32xf32>
    %94 = vector.broadcast %93 : vector<1x32xf32> to vector<256x32xf32>
    %95 = arith.addf %91, %94 : vector<256x32xf32>
    %96 = arith.truncf %95 : vector<256x32xf32> to vector<256x32xbf16>
    %c8_79 = arith.constant 8 : index
    %c0_80 = arith.constant 0 : index
    %c0_81 = arith.constant 0 : index
    %97 = vector.load %arg4[%c8_79, %c0_80, %c0_81] : memref<12x256x32xbf16, #tpu.memory_space<vmem>>, vector<1x256x32xbf16>
    %98 = vector.shape_cast %97 : vector<1x256x32xbf16> to vector<256x32xbf16>
    %99 = vector.shape_cast %96 : vector<256x32xbf16> to vector<1x256x32xbf16>
    tpu.vector_store %arg4[%c8_79, %c0_80, %c0_81], %99 {strides = array<i32>} : memref<12x256x32xbf16, #tpu.memory_space<vmem>>, vector<1x256x32xbf16>,
    %c9 = arith.constant 9 : index
    %c0_82 = arith.constant 0 : index
    %c0_83 = arith.constant 0 : index
    %100 = vector.load %arg2[%c9, %c0_82, %c0_83] : memref<12x128x32xbf16, #tpu.memory_space<vmem>>, vector<1x128x32xbf16>
    %101 = vector.shape_cast %100 : vector<1x128x32xbf16> to vector<128x32xbf16>
    %cst_84 = arith.constant dense<0.000000e+00> : vector<256x32xf32>
    %102 = tpu.matmul %0, %101, %cst_84 {dimension_numbers = #tpu.dot_dimension_numbers<[1], [0], [0], [1], [0, 0, 1, 1], [], []>} : vector<256x128xbf16>, vector<128x32xbf16>, vector<256x32xf32> -> vector<256x32xf32>
    %c9_85 = arith.constant 9 : index
    %c0_86 = arith.constant 0 : index
    %c0_87 = arith.constant 0 : index
    %103 = vector.load %arg3[%c9_85, %c0_86, %c0_87] : memref<12x1x32xf32, #tpu.memory_space<vmem>>, vector<1x1x32xf32>
    %104 = vector.shape_cast %103 : vector<1x1x32xf32> to vector<1x32xf32>
    %105 = vector.broadcast %104 : vector<1x32xf32> to vector<256x32xf32>
    %106 = arith.addf %102, %105 : vector<256x32xf32>
    %107 = arith.truncf %106 : vector<256x32xf32> to vector<256x32xbf16>
    %c9_88 = arith.constant 9 : index
    %c0_89 = arith.constant 0 : index
    %c0_90 = arith.constant 0 : index
    %108 = vector.load %arg4[%c9_88, %c0_89, %c0_90] : memref<12x256x32xbf16, #tpu.memory_space<vmem>>, vector<1x256x32xbf16>
    %109 = vector.shape_cast %108 : vector<1x256x32xbf16> to vector<256x32xbf16>
    %110 = vector.shape_cast %107 : vector<256x32xbf16> to vector<1x256x32xbf16>
    tpu.vector_store %arg4[%c9_88, %c0_89, %c0_90], %110 {strides = array<i32>} : memref<12x256x32xbf16, #tpu.memory_space<vmem>>, vector<1x256x32xbf16>,
    %c10 = arith.constant 10 : index
    %c0_91 = arith.constant 0 : index
    %c0_92 = arith.constant 0 : index
    %111 = vector.load %arg2[%c10, %c0_91, %c0_92] : memref<12x128x32xbf16, #tpu.memory_space<vmem>>, vector<1x128x32xbf16>
    %112 = vector.shape_cast %111 : vector<1x128x32xbf16> to vector<128x32xbf16>
    %cst_93 = arith.constant dense<0.000000e+00> : vector<256x32xf32>
    %113 = tpu.matmul %0, %112, %cst_93 {dimension_numbers = #tpu.dot_dimension_numbers<[1], [0], [0], [1], [0, 0, 1, 1], [], []>} : vector<256x128xbf16>, vector<128x32xbf16>, vector<256x32xf32> -> vector<256x32xf32>
    %c10_94 = arith.constant 10 : index
    %c0_95 = arith.constant 0 : index
    %c0_96 = arith.constant 0 : index
    %114 = vector.load %arg3[%c10_94, %c0_95, %c0_96] : memref<12x1x32xf32, #tpu.memory_space<vmem>>, vector<1x1x32xf32>
    %115 = vector.shape_cast %114 : vector<1x1x32xf32> to vector<1x32xf32>
    %116 = vector.broadcast %115 : vector<1x32xf32> to vector<256x32xf32>
    %117 = arith.addf %113, %116 : vector<256x32xf32>
    %118 = arith.truncf %117 : vector<256x32xf32> to vector<256x32xbf16>
    %c10_97 = arith.constant 10 : index
    %c0_98 = arith.constant 0 : index
    %c0_99 = arith.constant 0 : index
    %119 = vector.load %arg4[%c10_97, %c0_98, %c0_99] : memref<12x256x32xbf16, #tpu.memory_space<vmem>>, vector<1x256x32xbf16>
    %120 = vector.shape_cast %119 : vector<1x256x32xbf16> to vector<256x32xbf16>
    %121 = vector.shape_cast %118 : vector<256x32xbf16> to vector<1x256x32xbf16>
    tpu.vector_store %arg4[%c10_97, %c0_98, %c0_99], %121 {strides = array<i32>} : memref<12x256x32xbf16, #tpu.memory_space<vmem>>, vector<1x256x32xbf16>,
    %c11 = arith.constant 11 : index
    %c0_100 = arith.constant 0 : index
    %c0_101 = arith.constant 0 : index
    %122 = vector.load %arg2[%c11, %c0_100, %c0_101] : memref<12x128x32xbf16, #tpu.memory_space<vmem>>, vector<1x128x32xbf16>
    %123 = vector.shape_cast %122 : vector<1x128x32xbf16> to vector<128x32xbf16>
    %cst_102 = arith.constant dense<0.000000e+00> : vector<256x32xf32>
    %124 = tpu.matmul %0, %123, %cst_102 {dimension_numbers = #tpu.dot_dimension_numbers<[1], [0], [0], [1], [0, 0, 1, 1], [], []>} : vector<256x128xbf16>, vector<128x32xbf16>, vector<256x32xf32> -> vector<256x32xf32>
    %c11_103 = arith.constant 11 : index
    %c0_104 = arith.constant 0 : index
    %c0_105 = arith.constant 0 : index
    %125 = vector.load %arg3[%c11_103, %c0_104, %c0_105] : memref<12x1x32xf32, #tpu.memory_space<vmem>>, vector<1x1x32xf32>
    %126 = vector.shape_cast %125 : vector<1x1x32xf32> to vector<1x32xf32>
    %127 = vector.broadcast %126 : vector<1x32xf32> to vector<256x32xf32>
    %128 = arith.addf %124, %127 : vector<256x32xf32>
    %129 = arith.truncf %128 : vector<256x32xf32> to vector<256x32xbf16>
    %c11_106 = arith.constant 11 : index
    %c0_107 = arith.constant 0 : index
    %c0_108 = arith.constant 0 : index
    %130 = vector.load %arg4[%c11_106, %c0_107, %c0_108] : memref<12x256x32xbf16, #tpu.memory_space<vmem>>, vector<1x256x32xbf16>
    %131 = vector.shape_cast %130 : vector<1x256x32xbf16> to vector<256x32xbf16>
    %132 = vector.shape_cast %129 : vector<256x32xbf16> to vector<1x256x32xbf16>
    tpu.vector_store %arg4[%c11_106, %c0_107, %c0_108], %132 {strides = array<i32>} : memref<12x256x32xbf16, #tpu.memory_space<vmem>>, vector<1x256x32xbf16>,
    return
  }
  func.func @transform_0(%arg0: i32) -> (i32, i32) {
    %c0_i32 = arith.constant 0 : i32
    %c0_i32_0 = arith.constant 0 : i32
    return %arg0, %c0_i32 : i32, i32
  }
  func.func @transform_1(%arg0: i32) -> (i32, i32, i32) {
    %c0_i32 = arith.constant 0 : i32
    %c0_i32_0 = arith.constant 0 : i32
    %c0_i32_1 = arith.constant 0 : i32
    %c0_i32_2 = arith.constant 0 : i32
    return %c0_i32, %c0_i32_0, %c0_i32_1 : i32, i32, i32
  }
  func.func @transform_2(%arg0: i32) -> (i32, i32, i32) {
    %c0_i32 = arith.constant 0 : i32
    %c0_i32_0 = arith.constant 0 : i32
    %c0_i32_1 = arith.constant 0 : i32
    %c0_i32_2 = arith.constant 0 : i32
    return %c0_i32, %c0_i32_0, %c0_i32_1 : i32, i32, i32
  }
  func.func @transform_3(%arg0: i32) -> (i32, i32, i32) {
    %c0_i32 = arith.constant 0 : i32
    %c0_i32_0 = arith.constant 0 : i32
    %c0_i32_1 = arith.constant 0 : i32
    return %c0_i32, %arg0, %c0_i32_0 : i32, i32, i32
  }
}

</mosaic_0001>

<llo_original>
// kernel: tpu_custom_call.1
$region0: #{tpu_custom_call.1}
  #allocation0 [shape = 'u32[]', space=smem, size = 0x4, offset = 0x4, fixed_abs, tag = 'smem constant byte address 0x4 - core index']
  #allocation1 [shape = 'u32[72,128]{1,0:T(1,128)}', space=vmem, size = 0x9000, scoped, tag = 'internal scratch']
  %s0 = inlined_call_operand.vmem [shape: bf16[256,128], index: 0, kind: input, shape index: {}]
  %s1 = inlined_call_operand.vmem [shape: bf16[12,128,32], index: 1, kind: input, shape index: {}]
  %s2 = inlined_call_operand.vmem [shape: f32[12,1,32], index: 2, kind: input, shape index: {}]
  %s3 = inlined_call_operand.vmem [shape: bf16[12,256,32], index: 3, kind: output, shape index: {}]
  %s4 = sld [smem:[#allocation0]]
  $region22: #{tpu_custom_call.1} parent=0
    _
  %s6 = ssub.s32 1, %s4
  %s7 = scalar_select 0, %s6, %s4
  // Predicated region
  $region2: #{tpu_custom_call.1} parent=0 // pred_check
    _
  $region3: #{tpu_custom_call.1} parent=0 // pred_check_branch
    %9 = sbr.rel (0) target = $region5
  $region4: #{tpu_custom_call.1} parent=0 // pred_region
    _
  $region5: #{tpu_custom_call.1} parent=0 // pred_fallthru
    _
  // Predicated region
  $region6: #{tpu_custom_call.1} parent=0 // pred_check
    _
  $region7: #{tpu_custom_call.1} parent=0 // pred_check_branch
    %11 = sbr.rel (0) target = $region9
  $region8: #{tpu_custom_call.1} parent=0 // pred_region
    _
  $region9: #{tpu_custom_call.1} parent=0 // pred_fallthru
    _
  // Predicated region
  $region10: #{tpu_custom_call.1} parent=0 // pred_check
    _
  $region11: #{tpu_custom_call.1} parent=0 // pred_check_branch
    %13 = sbr.rel (0) target = $region13
  $region12: #{tpu_custom_call.1} parent=0 // pred_region
    _
  $region13: #{tpu_custom_call.1} parent=0 // pred_fallthru
    _
  %v14 = vld [vmem:[%s0] sm:$0xf]
  %v15 = vld [vmem:[%s0 + $0x4] sm:$0xf]
  %v16 = vld [vmem:[%s0 + $0x8] sm:$0xf]
  %v17 = vld [vmem:[%s0 + $0xc] sm:$0xf]
  %v18 = vld [vmem:[%s0 + $0x10] sm:$0xf]
  %v19 = vld [vmem:[%s0 + $0x14] sm:$0xf]
  %v20 = vld [vmem:[%s0 + $0x18] sm:$0xf]
  %v21 = vld [vmem:[%s0 + $0x1c] sm:$0xf]
  %v22 = vld [vmem:[%s0 + $0x20] sm:$0xf]
  %v23 = vld [vmem:[%s0 + $0x24] sm:$0xf]
  %v24 = vld [vmem:[%s0 + $0x28] sm:$0xf]
  %v25 = vld [vmem:[%s0 + $0x2c] sm:$0xf]
  %v26 = vld [vmem:[%s0 + $0x30] sm:$0xf]
  %v27 = vld [vmem:[%s0 + $0x34] sm:$0xf]
  %v28 = vld [vmem:[%s0 + $0x38] sm:$0xf]
  %v29 = vld [vmem:[%s0 + $0x3c] sm:$0xf]
  %v30 = vld [vmem:[%s0 + $0x40] sm:$0xf]
  %v31 = vld [vmem:[%s0 + $0x44] sm:$0xf]
  %v32 = vld [vmem:[%s0 + $0x48] sm:$0xf]
  %v33 = vld [vmem:[%s0 + $0x4c] sm:$0xf]
  %v34 = vld [vmem:[%s0 + $0x50] sm:$0xf]
  %v35 = vld [vmem:[%s0 + $0x54] sm:$0xf]
  %v36 = vld [vmem:[%s0 + $0x58] sm:$0xf]
  %v37 = vld [vmem:[%s0 + $0x5c] sm:$0xf]
  %v38 = vld [vmem:[%s0 + $0x60] sm:$0xf]
  %v39 = vld [vmem:[%s0 + $0x64] sm:$0xf]
  %v40 = vld [vmem:[%s0 + $0x68] sm:$0xf]
  %v41 = vld [vmem:[%s0 + $0x6c] sm:$0xf]
  %v42 = vld [vmem:[%s0 + $0x70] sm:$0xf]
  %v43 = vld [vmem:[%s0 + $0x74] sm:$0xf]
  %v44 = vld [vmem:[%s0 + $0x78] sm:$0xf]
  %v45 = vld [vmem:[%s0 + $0x7c] sm:$0xf]
  %v46 = vld [vmem:[%s1] sm:$0xf]
  %v47 = vld [vmem:[%s1 + $0x4] sm:$0xf]
  %v48 = vld [vmem:[%s1 + $0x8] sm:$0xf]
  %v49 = vld [vmem:[%s1 + $0xc] sm:$0xf]
  %v50 = vld [vmem:[%s1 + $0x10] sm:$0xf]
  %v51 = vld [vmem:[%s1 + $0x14] sm:$0xf]
  %v52 = vld [vmem:[%s1 + $0x18] sm:$0xf]
  %v53 = vld [vmem:[%s1 + $0x1c] sm:$0xf]
  %v54 = vld [vmem:[%s1 + $0x20] sm:$0xf]
  %v55 = vld [vmem:[%s1 + $0x24] sm:$0xf]
  %v56 = vld [vmem:[%s1 + $0x28] sm:$0xf]
  %v57 = vld [vmem:[%s1 + $0x2c] sm:$0xf]
  %v58 = vld [vmem:[%s1 + $0x30] sm:$0xf]
  %v59 = vld [vmem:[%s1 + $0x34] sm:$0xf]
  %v60 = vld [vmem:[%s1 + $0x38] sm:$0xf]
  %v61 = vld [vmem:[%s1 + $0x3c] sm:$0xf]
  %v62 = vld [vmem:[%s2] sm:$0x1]
  %v64 = vperm.slane %v62, 0
  %v98 = vunpack.c.l.b16 %v14
  %v99 = vunpack.c.l.b16 %v15
  %v100 = vunpack.c.l.b16 %v16
  %v101 = vunpack.c.l.b16 %v17
  %v102 = vunpack.c.l.b16 %v18
  %v103 = vunpack.c.l.b16 %v19
  %v104 = vunpack.c.l.b16 %v20
  %v105 = vunpack.c.l.b16 %v21
  %v106 = vunpack.c.l.b16 %v22
  %v107 = vunpack.c.l.b16 %v23
  %v108 = vunpack.c.l.b16 %v24
  %v109 = vunpack.c.l.b16 %v25
  %v110 = vunpack.c.l.b16 %v26
  %v111 = vunpack.c.l.b16 %v27
  %v112 = vunpack.c.l.b16 %v28
  %v113 = vunpack.c.l.b16 %v29
  %v114 = vunpack.c.l.b16 %v30
  %v115 = vunpack.c.l.b16 %v31
  %v116 = vunpack.c.l.b16 %v32
  %v117 = vunpack.c.l.b16 %v33
  %v118 = vunpack.c.l.b16 %v34
  %v119 = vunpack.c.l.b16 %v35
  %v120 = vunpack.c.l.b16 %v36
  %v121 = vunpack.c.l.b16 %v37
  %v122 = vunpack.c.l.b16 %v38
  %v123 = vunpack.c.l.b16 %v39
  %v124 = vunpack.c.l.b16 %v40
  %v125 = vunpack.c.l.b16 %v41
  %v126 = vunpack.c.l.b16 %v42
  %v127 = vunpack.c.l.b16 %v43
  %v128 = vunpack.c.l.b16 %v44
  %v129 = vunpack.c.l.b16 %v45
  %v130 = vpack.c.b16 %v99, %v98
  %v131 = vpack.c.b16 %v101, %v100
  %v132 = vpack.c.b16 %v103, %v102
  %v133 = vpack.c.b16 %v105, %v104
  %v134 = vpack.c.b16 %v107, %v106
  %v135 = vpack.c.b16 %v109, %v108
  %v136 = vpack.c.b16 %v111, %v110
  %v137 = vpack.c.b16 %v113, %v112
  %v138 = vpack.c.b16 %v115, %v114
  %v139 = vpack.c.b16 %v117, %v116
  %v140 = vpack.c.b16 %v119, %v118
  %v141 = vpack.c.b16 %v121, %v120
  %v142 = vpack.c.b16 %v123, %v122
  %v143 = vpack.c.b16 %v125, %v124
  %v144 = vpack.c.b16 %v127, %v126
  %v145 = vpack.c.b16 %v129, %v128
  %v178 = vunpack.c.l.b16 %v46
  %v179 = vunpack.c.l.b16 %v47
  %v180 = vunpack.c.l.b16 %v48
  %v181 = vunpack.c.l.b16 %v49
  %v182 = vunpack.c.l.b16 %v50
  %v183 = vunpack.c.l.b16 %v51
  %v184 = vunpack.c.l.b16 %v52
  %v185 = vunpack.c.l.b16 %v53
  %v186 = vunpack.c.l.b16 %v54
  %v187 = vunpack.c.l.b16 %v55
  %v188 = vunpack.c.l.b16 %v56
  %v189 = vunpack.c.l.b16 %v57
  %v190 = vunpack.c.l.b16 %v58
  %v191 = vunpack.c.l.b16 %v59
  %v192 = vunpack.c.l.b16 %v60
  %v193 = vunpack.c.l.b16 %v61
  %v194 = vpack.c.b16 %v179, %v178
  %v195 = vpack.c.b16 %v181, %v180
  %v196 = vpack.c.b16 %v183, %v182
  %v197 = vpack.c.b16 %v185, %v184
  %v198 = vpack.c.b16 %v187, %v186
  %v199 = vpack.c.b16 %v189, %v188
  %v200 = vpack.c.b16 %v191, %v190
  %v201 = vpack.c.b16 %v193, %v192
  %210 = vmatpush.bf16.msra.mxu0 %v201
  %211 = vmatpush.bf16.msra.mxu0 %v200
  %212 = vmatpush.bf16.msra.mxu0 %v199
  %213 = vmatpush.bf16.msra.mxu0 %v198
  %214 = vmatpush.bf16.msra.mxu0 %v197
  %215 = vmatpush.bf16.msra.mxu0 %v196
  %216 = vmatpush.bf16.msra.mxu0 %v195
  %217 = vmatpush.bf16.msra.mxu0 %v194
  %218 = vmatmul.bf16.gmra.mxu0 %v130
  %v219 = vpop.f32.mrf.mxu0
  %v220 = vadd.f32 %v64, %v219
  %v221 = vpop.f32.mrf.mxu0
  %v222 = vadd.f32 %v64, %v221
  %223 = vmatmul.bf16.gmra.mxu0 %v131
  %v224 = vpop.f32.mrf.mxu0
  %v225 = vadd.f32 %v64, %v224
  %v226 = vpop.f32.mrf.mxu0
  %v227 = vadd.f32 %v64, %v226
  %228 = vmatmul.bf16.gmra.mxu0 %v132
  %v229 = vpop.f32.mrf.mxu0
  %v230 = vadd.f32 %v64, %v229
  %v231 = vpop.f32.mrf.mxu0
  %v232 = vadd.f32 %v64, %v231
  %233 = vmatmul.bf16.gmra.mxu0 %v133
  %v234 = vpop.f32.mrf.mxu0
  %v235 = vadd.f32 %v64, %v234
  %v236 = vpop.f32.mrf.mxu0
  %v237 = vadd.f32 %v64, %v236
  %238 = vmatmul.bf16.gmra.mxu0 %v134
  %v239 = vpop.f32.mrf.mxu0
  %v240 = vadd.f32 %v64, %v239
  %v241 = vpop.f32.mrf.mxu0
  %v242 = vadd.f32 %v64, %v241
  %243 = vmatmul.bf16.gmra.mxu0 %v135
  %v244 = vpop.f32.mrf.mxu0
  %v245 = vadd.f32 %v64, %v244
  %v246 = vpop.f32.mrf.mxu0
  %v247 = vadd.f32 %v64, %v246
  %248 = vmatmul.bf16.gmra.mxu0 %v136
  %v249 = vpop.f32.mrf.mxu0
  %v250 = vadd.f32 %v64, %v249
  %v251 = vpop.f32.mrf.mxu0
  %v252 = vadd.f32 %v64, %v251
  %253 = vmatmul.bf16.gmra.mxu0 %v137
  %v254 = vpop.f32.mrf.mxu0
  %v255 = vadd.f32 %v64, %v254
  %v256 = vpop.f32.mrf.mxu0
  %v257 = vadd.f32 %v64, %v256
  %258 = vmatmul.bf16.gmra.mxu0 %v138
  %v259 = vpop.f32.mrf.mxu0
  %v260 = vadd.f32 %v64, %v259
  %v261 = vpop.f32.mrf.mxu0
  %v262 = vadd.f32 %v64, %v261
  %263 = vmatmul.bf16.gmra.mxu0 %v139
  %v264 = vpop.f32.mrf.mxu0
  %v265 = vadd.f32 %v64, %v264
  %v266 = vpop.f32.mrf.mxu0
  %v267 = vadd.f32 %v64, %v266
  %268 = vmatmul.bf16.gmra.mxu0 %v140
  %v269 = vpop.f32.mrf.mxu0
  %v270 = vadd.f32 %v64, %v269
  %v271 = vpop.f32.mrf.mxu0
  %v272 = vadd.f32 %v64, %v271
  %273 = vmatmul.bf16.gmra.mxu0 %v141
  %v274 = vpop.f32.mrf.mxu0
  %v275 = vadd.f32 %v64, %v274
  %v276 = vpop.f32.mrf.mxu0
  %v277 = vadd.f32 %v64, %v276
  %278 = vmatmul.bf16.gmra.mxu0 %v142
  %v279 = vpop.f32.mrf.mxu0
  %v280 = vadd.f32 %v64, %v279
  %v281 = vpop.f32.mrf.mxu0
  %v282 = vadd.f32 %v64, %v281
  %283 = vmatmul.bf16.gmra.mxu0 %v143
  %v284 = vpop.f32.mrf.mxu0
  %v285 = vadd.f32 %v64, %v284
  %v286 = vpop.f32.mrf.mxu0
  %v287 = vadd.f32 %v64, %v286
  %288 = vmatmul.bf16.gmra.mxu0 %v144
  %v289 = vpop.f32.mrf.mxu0
  %v290 = vadd.f32 %v64, %v289
  %v291 = vpop.f32.mrf.mxu0
  %v292 = vadd.f32 %v64, %v291
  %293 = vmatmul.bf16.gmra.mxu0 %v145
  %v294 = vpop.f32.mrf.mxu0
  %v295 = vadd.f32 %v64, %v294
  %v296 = vpop.f32.mrf.mxu0
  %v297 = vadd.f32 %v64, %v296
  %298 = vdwg.mxu0
  %v299 = vpack.c.bf16 %v220, %v220
  %v300 = vpack.c.bf16 %v222, %v222
  %v301 = vpack.c.bf16 %v225, %v225
  %v302 = vpack.c.bf16 %v227, %v227
  %v303 = vpack.c.bf16 %v230, %v230
  %v304 = vpack.c.bf16 %v232, %v232
  %v305 = vpack.c.bf16 %v235, %v235
  %v306 = vpack.c.bf16 %v237, %v237
  %v307 = vpack.c.bf16 %v240, %v240
  %v308 = vpack.c.bf16 %v242, %v242
  %v309 = vpack.c.bf16 %v245, %v245
  %v310 = vpack.c.bf16 %v247, %v247
  %v311 = vpack.c.bf16 %v250, %v250
  %v312 = vpack.c.bf16 %v252, %v252
  %v313 = vpack.c.bf16 %v255, %v255
  %v314 = vpack.c.bf16 %v257, %v257
  %v315 = vpack.c.bf16 %v260, %v260
  %v316 = vpack.c.bf16 %v262, %v262
  %v317 = vpack.c.bf16 %v265, %v265
  %v318 = vpack.c.bf16 %v267, %v267
  %v319 = vpack.c.bf16 %v270, %v270
  %v320 = vpack.c.bf16 %v272, %v272
  %v321 = vpack.c.bf16 %v275, %v275
  %v322 = vpack.c.bf16 %v277, %v277
  %v323 = vpack.c.bf16 %v280, %v280
  %v324 = vpack.c.bf16 %v282, %v282
  %v325 = vpack.c.bf16 %v285, %v285
  %v326 = vpack.c.bf16 %v287, %v287
  %v327 = vpack.c.bf16 %v290, %v290
  %v328 = vpack.c.bf16 %v292, %v292
  %v329 = vpack.c.bf16 %v295, %v295
  %v330 = vpack.c.bf16 %v297, %v297
  %vm331 = vcmask 257024
  %332 = vst.msk [vmem:[%s3] sm:$0xf] %vm331, %v299
  %333 = vst.msk [vmem:[%s3 + $0x4] sm:$0xf] %vm331, %v300
  %334 = vst.msk [vmem:[%s3 + $0x8] sm:$0xf] %vm331, %v301
  %335 = vst.msk [vmem:[%s3 + $0xc] sm:$0xf] %vm331, %v302
  %336 = vst.msk [vmem:[%s3 + $0x10] sm:$0xf] %vm331, %v303
  %337 = vst.msk [vmem:[%s3 + $0x14] sm:$0xf] %vm331, %v304
  %338 = vst.msk [vmem:[%s3 + $0x18] sm:$0xf] %vm331, %v305
  %339 = vst.msk [vmem:[%s3 + $0x1c] sm:$0xf] %vm331, %v306
  %340 = vst.msk [vmem:[%s3 + $0x20] sm:$0xf] %vm331, %v307
  %341 = vst.msk [vmem:[%s3 + $0x24] sm:$0xf] %vm331, %v308
  %342 = vst.msk [vmem:[%s3 + $0x28] sm:$0xf] %vm331, %v309
  %343 = vst.msk [vmem:[%s3 + $0x2c] sm:$0xf] %vm331, %v310
  %344 = vst.msk [vmem:[%s3 + $0x30] sm:$0xf] %vm331, %v311
  %345 = vst.msk [vmem:[%s3 + $0x34] sm:$0xf] %vm331, %v312
  %346 = vst.msk [vmem:[%s3 + $0x38] sm:$0xf] %vm331, %v313
  %347 = vst.msk [vmem:[%s3 + $0x3c] sm:$0xf] %vm331, %v314
  %348 = vst.msk [vmem:[%s3 + $0x40] sm:$0xf] %vm331, %v315
  %349 = vst.msk [vmem:[%s3 + $0x44] sm:$0xf] %vm331, %v316
  %350 = vst.msk [vmem:[%s3 + $0x48] sm:$0xf] %vm331, %v317
  %351 = vst.msk [vmem:[%s3 + $0x4c] sm:$0xf] %vm331, %v318
  %352 = vst.msk [vmem:[%s3 + $0x50] sm:$0xf] %vm331, %v319
  %353 = vst.msk [vmem:[%s3 + $0x54] sm:$0xf] %vm331, %v320
  %354 = vst.msk [vmem:[%s3 + $0x58] sm:$0xf] %vm331, %v321
  %355 = vst.msk [vmem:[%s3 + $0x5c] sm:$0xf] %vm331, %v322
  %356 = vst.msk [vmem:[%s3 + $0x60] sm:$0xf] %vm331, %v323
  %357 = vst.msk [vmem:[%s3 + $0x64] sm:$0xf] %vm331, %v324
  %358 = vst.msk [vmem:[%s3 + $0x68] sm:$0xf] %vm331, %v325
  %359 = vst.msk [vmem:[%s3 + $0x6c] sm:$0xf] %vm331, %v326
  %360 = vst.msk [vmem:[%s3 + $0x70] sm:$0xf] %vm331, %v327
  %361 = vst.msk [vmem:[%s3 + $0x74] sm:$0xf] %vm331, %v328
  %362 = vst.msk [vmem:[%s3 + $0x78] sm:$0xf] %vm331, %v329
  %363 = vst.msk [vmem:[%s3 + $0x7c] sm:$0xf] %vm331, %v330
  %s364 = scalar_lea.vmem %s1, 64
  %v365 = vld [vmem:[%s364] sm:$0xf]
  %v366 = vld [vmem:[%s364 + $0x4] sm:$0xf]
  %v367 = vld [vmem:[%s364 + $0x8] sm:$0xf]
  %v368 = vld [vmem:[%s364 + $0xc] sm:$0xf]
  %v369 = vld [vmem:[%s364 + $0x10] sm:$0xf]
  %v370 = vld [vmem:[%s364 + $0x14] sm:$0xf]
  %v371 = vld [vmem:[%s364 + $0x18] sm:$0xf]
  %v372 = vld [vmem:[%s364 + $0x1c] sm:$0xf]
  %v373 = vld [vmem:[%s364 + $0x20] sm:$0xf]
  %v374 = vld [vmem:[%s364 + $0x24] sm:$0xf]
  %v375 = vld [vmem:[%s364 + $0x28] sm:$0xf]
  %v376 = vld [vmem:[%s364 + $0x2c] sm:$0xf]
  %v377 = vld [vmem:[%s364 + $0x30] sm:$0xf]
  %v378 = vld [vmem:[%s364 + $0x34] sm:$0xf]
  %v379 = vld [vmem:[%s364 + $0x38] sm:$0xf]
  %v380 = vld [vmem:[%s364 + $0x3c] sm:$0xf]
  %s381 = scalar_lea.vmem %s2, 1
  %v382 = vld [vmem:[%s381] sm:$0x1]
  %v384 = vperm.slane %v382, 0
  %v402 = vunpack.c.l.b16 %v365
  %v403 = vunpack.c.l.b16 %v366
  %v404 = vunpack.c.l.b16 %v367
  %v405 = vunpack.c.l.b16 %v368
  %v406 = vunpack.c.l.b16 %v369
  %v407 = vunpack.c.l.b16 %v370
  %v408 = vunpack.c.l.b16 %v371
  %v409 = vunpack.c.l.b16 %v372
  %v410 = vunpack.c.l.b16 %v373
  %v411 = vunpack.c.l.b16 %v374
  %v412 = vunpack.c.l.b16 %v375
  %v413 = vunpack.c.l.b16 %v376
  %v414 = vunpack.c.l.b16 %v377
  %v415 = vunpack.c.l.b16 %v378
  %v416 = vunpack.c.l.b16 %v379
  %v417 = vunpack.c.l.b16 %v380
  %v418 = vpack.c.b16 %v403, %v402
  %v419 = vpack.c.b16 %v405, %v404
  %v420 = vpack.c.b16 %v407, %v406
  %v421 = vpack.c.b16 %v409, %v408
  %v422 = vpack.c.b16 %v411, %v410
  %v423 = vpack.c.b16 %v413, %v412
  %v424 = vpack.c.b16 %v415, %v414
  %v425 = vpack.c.b16 %v417, %v416
  %434 = vmatpush.bf16.msra.mxu0 %v425
  %435 = vmatpush.bf16.msra.mxu0 %v424
  %436 = vmatpush.bf16.msra.mxu0 %v423
  %437 = vmatpush.bf16.msra.mxu0 %v422
  %438 = vmatpush.bf16.msra.mxu0 %v421
  %439 = vmatpush.bf16.msra.mxu0 %v420
  %440 = vmatpush.bf16.msra.mxu0 %v419
  %441 = vmatpush.bf16.msra.mxu0 %v418
  %442 = vmatmul.bf16.gmra.mxu0 %v130
  %v443 = vpop.f32.mrf.mxu0
  %v444 = vadd.f32 %v384, %v443
  %v445 = vpop.f32.mrf.mxu0
  %v446 = vadd.f32 %v384, %v445
  %447 = vmatmul.bf16.gmra.mxu0 %v131
  %v448 = vpop.f32.mrf.mxu0
  %v449 = vadd.f32 %v384, %v448
  %v450 = vpop.f32.mrf.mxu0
  %v451 = vadd.f32 %v384, %v450
  %452 = vmatmul.bf16.gmra.mxu0 %v132
  %v453 = vpop.f32.mrf.mxu0
  %v454 = vadd.f32 %v384, %v453
  %v455 = vpop.f32.mrf.mxu0
  %v456 = vadd.f32 %v384, %v455
  %457 = vmatmul.bf16.gmra.mxu0 %v133
  %v458 = vpop.f32.mrf.mxu0
  %v459 = vadd.f32 %v384, %v458
  %v460 = vpop.f32.mrf.mxu0
  %v461 = vadd.f32 %v384, %v460
  %462 = vmatmul.bf16.gmra.mxu0 %v134
  %v463 = vpop.f32.mrf.mxu0
  %v464 = vadd.f32 %v384, %v463
  %v465 = vpop.f32.mrf.mxu0
  %v466 = vadd.f32 %v384, %v465
  %467 = vmatmul.bf16.gmra.mxu0 %v135
  %v468 = vpop.f32.mrf.mxu0
  %v469 = vadd.f32 %v384, %v468
  %v470 = vpop.f32.mrf.mxu0
  %v471 = vadd.f32 %v384, %v470
  %472 = vmatmul.bf16.gmra.mxu0 %v136
  %v473 = vpop.f32.mrf.mxu0
  %v474 = vadd.f32 %v384, %v473
  %v475 = vpop.f32.mrf.mxu0
  %v476 = vadd.f32 %v384, %v475
  %477 = vmatmul.bf16.gmra.mxu0 %v137
  %v478 = vpop.f32.mrf.mxu0
  %v479 = vadd.f32 %v384, %v478
  %v480 = vpop.f32.mrf.mxu0
  %v481 = vadd.f32 %v384, %v480
  %482 = vmatmul.bf16.gmra.mxu0 %v138
  %v483 = vpop.f32.mrf.mxu0
  %v484 = vadd.f32 %v384, %v483
  %v485 = vpop.f32.mrf.mxu0
  %v486 = vadd.f32 %v384, %v485
  %487 = vmatmul.bf16.gmra.mxu0 %v139
  %v488 = vpop.f32.mrf.mxu0
  %v489 = vadd.f32 %v384, %v488
  %v490 = vpop.f32.mrf.mxu0
  %v491 = vadd.f32 %v384, %v490
  %492 = vmatmul.bf16.gmra.mxu0 %v140
  %v493 = vpop.f32.mrf.mxu0
  %v494 = vadd.f32 %v384, %v493
  %v495 = vpop.f32.mrf.mxu0
  %v496 = vadd.f32 %v384, %v495
  %497 = vmatmul.bf16.gmra.mxu0 %v141
  %v498 = vpop.f32.mrf.mxu0
  %v499 = vadd.f32 %v384, %v498
  %v500 = vpop.f32.mrf.mxu0
  %v501 = vadd.f32 %v384, %v500
  %502 = vmatmul.bf16.gmra.mxu0 %v142
  %v503 = vpop.f32.mrf.mxu0
  %v504 = vadd.f32 %v384, %v503
  %v505 = vpop.f32.mrf.mxu0
  %v506 = vadd.f32 %v384, %v505
  %507 = vmatmul.bf16.gmra.mxu0 %v143
  %v508 = vpop.f32.mrf.mxu0
  %v509 = vadd.f32 %v384, %v508
  %v510 = vpop.f32.mrf.mxu0
  %v511 = vadd.f32 %v384, %v510
  %512 = vmatmul.bf16.gmra.mxu0 %v144
  %v513 = vpop.f32.mrf.mxu0
  %v514 = vadd.f32 %v384, %v513
  %v515 = vpop.f32.mrf.mxu0
  %v516 = vadd.f32 %v384, %v515
  %517 = vmatmul.bf16.gmra.mxu0 %v145
  %v518 = vpop.f32.mrf.mxu0
  %v519 = vadd.f32 %v384, %v518
  %v520 = vpop.f32.mrf.mxu0
  %v521 = vadd.f32 %v384, %v520
  %522 = vdwg.mxu0
  %v523 = vpack.c.bf16 %v444, %v444
  %v524 = vpack.c.bf16 %v446, %v446
  %v525 = vpack.c.bf16 %v449, %v449
  %v526 = vpack.c.bf16 %v451, %v451
  %v527 = vpack.c.bf16 %v454, %v454
  %v528 = vpack.c.bf16 %v456, %v456
  %v529 = vpack.c.bf16 %v459, %v459
  %v530 = vpack.c.bf16 %v461, %v461
  %v531 = vpack.c.bf16 %v464, %v464
  %v532 = vpack.c.bf16 %v466, %v466
  %v533 = vpack.c.bf16 %v469, %v469
  %v534 = vpack.c.bf16 %v471, %v471
  %v535 = vpack.c.bf16 %v474, %v474
  %v536 = vpack.c.bf16 %v476, %v476
  %v537 = vpack.c.bf16 %v479, %v479
  %v538 = vpack.c.bf16 %v481, %v481
  %v539 = vpack.c.bf16 %v484, %v484
  %v540 = vpack.c.bf16 %v486, %v486
  %v541 = vpack.c.bf16 %v489, %v489
  %v542 = vpack.c.bf16 %v491, %v491
  %v543 = vpack.c.bf16 %v494, %v494
  %v544 = vpack.c.bf16 %v496, %v496
  %v545 = vpack.c.bf16 %v499, %v499
  %v546 = vpack.c.bf16 %v501, %v501
  %v547 = vpack.c.bf16 %v504, %v504
  %v548 = vpack.c.bf16 %v506, %v506
  %v549 = vpack.c.bf16 %v509, %v509
  %v550 = vpack.c.bf16 %v511, %v511
  %v551 = vpack.c.bf16 %v514, %v514
  %v552 = vpack.c.bf16 %v516, %v516
  %v553 = vpack.c.bf16 %v519, %v519
  %v554 = vpack.c.bf16 %v521, %v521
  %s555 = scalar_lea.vmem %s3, 128
  %556 = vst.msk [vmem:[%s555] sm:$0xf] %vm331, %v523
  %557 = vst.msk [vmem:[%s555 + $0x4] sm:$0xf] %vm331, %v524
  %558 = vst.msk [vmem:[%s555 + $0x8] sm:$0xf] %vm331, %v525
  %559 = vst.msk [vmem:[%s555 + $0xc] sm:$0xf] %vm331, %v526
  %560 = vst.msk [vmem:[%s555 + $0x10] sm:$0xf] %vm331, %v527
  %561 = vst.msk [vmem:[%s555 + $0x14] sm:$0xf] %vm331, %v528
  %562 = vst.msk [vmem:[%s555 + $0x18] sm:$0xf] %vm331, %v529
  %563 = vst.msk [vmem:[%s555 + $0x1c] sm:$0xf] %vm331, %v530
  %564 = vst.msk [vmem:[%s555 + $0x20] sm:$0xf] %vm331, %v531
  %565 = vst.msk [vmem:[%s555 + $0x24] sm:$0xf] %vm331, %v532
  %566 = vst.msk [vmem:[%s555 + $0x28] sm:$0xf] %vm331, %v533
  %567 = vst.msk [vmem:[%s555 + $0x2c] sm:$0xf] %vm331, %v534
  %568 = vst.msk [vmem:[%s555 + $0x30] sm:$0xf] %vm331, %v535
  %569 = vst.msk [vmem:[%s555 + $0x34] sm:$0xf] %vm331, %v536
  %570 = vst.msk [vmem:[%s555 + $0x38] sm:$0xf] %vm331, %v537
  %571 = vst.msk [vmem:[%s555 + $0x3c] sm:$0xf] %vm331, %v538
  %572 = vst.msk [vmem:[%s555 + $0x40] sm:$0xf] %vm331, %v539
  %573 = vst.msk [vmem:[%s555 + $0x44] sm:$0xf] %vm331, %v540
  %574 = vst.msk [vmem:[%s555 + $0x48] sm:$0xf] %vm331, %v541
  %575 = vst.msk [vmem:[%s555 + $0x4c] sm:$0xf] %vm331, %v542
  %576 = vst.msk [vmem:[%s555 + $0x50] sm:$0xf] %vm331, %v543
  %577 = vst.msk [vmem:[%s555 + $0x54] sm:$0xf] %vm331, %v544
  %578 = vst.msk [vmem:[%s555 + $0x58] sm:$0xf] %vm331, %v545
  %579 = vst.msk [vmem:[%s555 + $0x5c] sm:$0xf] %vm331, %v546
  %580 = vst.msk [vmem:[%s555 + $0x60] sm:$0xf] %vm331, %v547
  %581 = vst.msk [vmem:[%s555 + $0x64] sm:$0xf] %vm331, %v548
  %582 = vst.msk [vmem:[%s555 + $0x68] sm:$0xf] %vm331, %v549
  %583 = vst.msk [vmem:[%s555 + $0x6c] sm:$0xf] %vm331, %v550
  %584 = vst.msk [vmem:[%s555 + $0x70] sm:$0xf] %vm331, %v551
  %585 = vst.msk [vmem:[%s555 + $0x74] sm:$0xf] %vm331, %v552
  %586 = vst.msk [vmem:[%s555 + $0x78] sm:$0xf] %vm331, %v553
  %587 = vst.msk [vmem:[%s555 + $0x7c] sm:$0xf] %vm331, %v554
  %s588 = scalar_lea.vmem %s1, 128
  %v589 = vld [vmem:[%s588] sm:$0xf]
  %v590 = vld [vmem:[%s588 + $0x4] sm:$0xf]
  %v591 = vld [vmem:[%s588 + $0x8] sm:$0xf]
  %v592 = vld [vmem:[%s588 + $0xc] sm:$0xf]
  %v593 = vld [vmem:[%s588 + $0x10] sm:$0xf]
  %v594 = vld [vmem:[%s588 + $0x14] sm:$0xf]
  %v595 = vld [vmem:[%s588 + $0x18] sm:$0xf]
  %v596 = vld [vmem:[%s588 + $0x1c] sm:$0xf]
  %v597 = vld [vmem:[%s588 + $0x20] sm:$0xf]
  %v598 = vld [vmem:[%s588 + $0x24] sm:$0xf]
  %v599 = vld [vmem:[%s588 + $0x28] sm:$0xf]
  %v600 = vld [vmem:[%s588 + $0x2c] sm:$0xf]
  %v601 = vld [vmem:[%s588 + $0x30] sm:$0xf]
  %v602 = vld [vmem:[%s588 + $0x34] sm:$0xf]
  %v603 = vld [vmem:[%s588 + $0x38] sm:$0xf]
  %v604 = vld [vmem:[%s588 + $0x3c] sm:$0xf]
  %s605 = scalar_lea.vmem %s2, 2
  %v606 = vld [vmem:[%s605] sm:$0x1]
  %v608 = vperm.slane %v606, 0
  %v626 = vunpack.c.l.b16 %v589
  %v627 = vunpack.c.l.b16 %v590
  %v628 = vunpack.c.l.b16 %v591
  %v629 = vunpack.c.l.b16 %v592
  %v630 = vunpack.c.l.b16 %v593
  %v631 = vunpack.c.l.b16 %v594
  %v632 = vunpack.c.l.b16 %v595
  %v633 = vunpack.c.l.b16 %v596
  %v634 = vunpack.c.l.b16 %v597
  %v635 = vunpack.c.l.b16 %v598
  %v636 = vunpack.c.l.b16 %v599
  %v637 = vunpack.c.l.b16 %v600
  %v638 = vunpack.c.l.b16 %v601
  %v639 = vunpack.c.l.b16 %v602
  %v640 = vunpack.c.l.b16 %v603
  %v641 = vunpack.c.l.b16 %v604
  %v642 = vpack.c.b16 %v627, %v626
  %v643 = vpack.c.b16 %v629, %v628
  %v644 = vpack.c.b16 %v631, %v630
  %v645 = vpack.c.b16 %v633, %v632
  %v646 = vpack.c.b16 %v635, %v634
  %v647 = vpack.c.b16 %v637, %v636
  %v648 = vpack.c.b16 %v639, %v638
  %v649 = vpack.c.b16 %v641, %v640
  %658 = vmatpush.bf16.msra.mxu0 %v649
  %659 = vmatpush.bf16.msra.mxu0 %v648
  %660 = vmatpush.bf16.msra.mxu0 %v647
  %661 = vmatpush.bf16.msra.mxu0 %v646
  %662 = vmatpush.bf16.msra.mxu0 %v645
  %663 = vmatpush.bf16.msra.mxu0 %v644
  %664 = vmatpush.bf16.msra.mxu0 %v643
  %665 = vmatpush.bf16.msra.mxu0 %v642
  %666 = vmatmul.bf16.gmra.mxu0 %v130
  %v667 = vpop.f32.mrf.mxu0
  %v668 = vadd.f32 %v608, %v667
  %v669 = vpop.f32.mrf.mxu0
  %v670 = vadd.f32 %v608, %v669
  %671 = vmatmul.bf16.gmra.mxu0 %v131
  %v672 = vpop.f32.mrf.mxu0
  %v673 = vadd.f32 %v608, %v672
  %v674 = vpop.f32.mrf.mxu0
  %v675 = vadd.f32 %v608, %v674
  %676 = vmatmul.bf16.gmra.mxu0 %v132
  %v677 = vpop.f32.mrf.mxu0
  %v678 = vadd.f32 %v608, %v677
  %v679 = vpop.f32.mrf.mxu0
  %v680 = vadd.f32 %v608, %v679
  %681 = vmatmul.bf16.gmra.mxu0 %v133
  %v682 = vpop.f32.mrf.mxu0
  %v683 = vadd.f32 %v608, %v682
  %v684 = vpop.f32.mrf.mxu0
  %v685 = vadd.f32 %v608, %v684
  %686 = vmatmul.bf16.gmra.mxu0 %v134
  %v687 = vpop.f32.mrf.mxu0
  %v688 = vadd.f32 %v608, %v687
  %v689 = vpop.f32.mrf.mxu0
  %v690 = vadd.f32 %v608, %v689
  %691 = vmatmul.bf16.gmra.mxu0 %v135
  %v692 = vpop.f32.mrf.mxu0
  %v693 = vadd.f32 %v608, %v692
  %v694 = vpop.f32.mrf.mxu0
  %v695 = vadd.f32 %v608, %v694
  %696 = vmatmul.bf16.gmra.mxu0 %v136
  %v697 = vpop.f32.mrf.mxu0
  %v698 = vadd.f32 %v608, %v697
  %v699 = vpop.f32.mrf.mxu0
  %v700 = vadd.f32 %v608, %v699
  %701 = vmatmul.bf16.gmra.mxu0 %v137
  %v702 = vpop.f32.mrf.mxu0
  %v703 = vadd.f32 %v608, %v702
  %v704 = vpop.f32.mrf.mxu0
  %v705 = vadd.f32 %v608, %v704
  %706 = vmatmul.bf16.gmra.mxu0 %v138
  %v707 = vpop.f32.mrf.mxu0
  %v708 = vadd.f32 %v608, %v707
  %v709 = vpop.f32.mrf.mxu0
  %v710 = vadd.f32 %v608, %v709
  %711 = vmatmul.bf16.gmra.mxu0 %v139
  %v712 = vpop.f32.mrf.mxu0
  %v713 = vadd.f32 %v608, %v712
  %v714 = vpop.f32.mrf.mxu0
  %v715 = vadd.f32 %v608, %v714
  %716 = vmatmul.bf16.gmra.mxu0 %v140
  %v717 = vpop.f32.mrf.mxu0
  %v718 = vadd.f32 %v608, %v717
  %v719 = vpop.f32.mrf.mxu0
  %v720 = vadd.f32 %v608, %v719
  %721 = vmatmul.bf16.gmra.mxu0 %v141
  %v722 = vpop.f32.mrf.mxu0
  %v723 = vadd.f32 %v608, %v722
  %v724 = vpop.f32.mrf.mxu0
  %v725 = vadd.f32 %v608, %v724
  %726 = vmatmul.bf16.gmra.mxu0 %v142
  %v727 = vpop.f32.mrf.mxu0
  %v728 = vadd.f32 %v608, %v727
  %v729 = vpop.f32.mrf.mxu0
  %v730 = vadd.f32 %v608, %v729
  %731 = vmatmul.bf16.gmra.mxu0 %v143
  %v732 = vpop.f32.mrf.mxu0
  %v733 = vadd.f32 %v608, %v732
  %v734 = vpop.f32.mrf.mxu0
  %v735 = vadd.f32 %v608, %v734
  %736 = vmatmul.bf16.gmra.mxu0 %v144
  %v737 = vpop.f32.mrf.mxu0
  %v738 = vadd.f32 %v608, %v737
  %v739 = vpop.f32.mrf.mxu0
  %v740 = vadd.f32 %v608, %v739
  %741 = vmatmul.bf16.gmra.mxu0 %v145
  %v742 = vpop.f32.mrf.mxu0
  %v743 = vadd.f32 %v608, %v742
  %v744 = vpop.f32.mrf.mxu0
  %v745 = vadd.f32 %v608, %v744
  %746 = vdwg.mxu0
  %v747 = vpack.c.bf16 %v668, %v668
  %v748 = vpack.c.bf16 %v670, %v670
  %v749 = vpack.c.bf16 %v673, %v673
  %v750 = vpack.c.bf16 %v675, %v675
  %v751 = vpack.c.bf16 %v678, %v678
  %v752 = vpack.c.bf16 %v680, %v680
  %v753 = vpack.c.bf16 %v683, %v683
  %v754 = vpack.c.bf16 %v685, %v685
  %v755 = vpack.c.bf16 %v688, %v688
  %v756 = vpack.c.bf16 %v690, %v690
  %v757 = vpack.c.bf16 %v693, %v693
  %v758 = vpack.c.bf16 %v695, %v695
  %v759 = vpack.c.bf16 %v698, %v698
  %v760 = vpack.c.bf16 %v700, %v700
  %v761 = vpack.c.bf16 %v703, %v703
  %v762 = vpack.c.bf16 %v705, %v705
  %v763 = vpack.c.bf16 %v708, %v708
  %v764 = vpack.c.bf16 %v710, %v710
  %v765 = vpack.c.bf16 %v713, %v713
  %v766 = vpack.c.bf16 %v715, %v715
  %v767 = vpack.c.bf16 %v718, %v718
  %v768 = vpack.c.bf16 %v720, %v720
  %v769 = vpack.c.bf16 %v723, %v723
  %v770 = vpack.c.bf16 %v725, %v725
  %v771 = vpack.c.bf16 %v728, %v728
  %v772 = vpack.c.bf16 %v730, %v730
  %v773 = vpack.c.bf16 %v733, %v733
  %v774 = vpack.c.bf16 %v735, %v735
  %v775 = vpack.c.bf16 %v738, %v738
  %v776 = vpack.c.bf16 %v740, %v740
  %v777 = vpack.c.bf16 %v743, %v743
  %v778 = vpack.c.bf16 %v745, %v745
  %s779 = scalar_lea.vmem %s3, 256
  %780 = vst.msk [vmem:[%s779] sm:$0xf] %vm331, %v747
  %781 = vst.msk [vmem:[%s779 + $0x4] sm:$0xf] %vm331, %v748
  %782 = vst.msk [vmem:[%s779 + $0x8] sm:$0xf] %vm331, %v749
  %783 = vst.msk [vmem:[%s779 + $0xc] sm:$0xf] %vm331, %v750
  %784 = vst.msk [vmem:[%s779 + $0x10] sm:$0xf] %vm331, %v751
  %785 = vst.msk [vmem:[%s779 + $0x14] sm:$0xf] %vm331, %v752
  %786 = vst.msk [vmem:[%s779 + $0x18] sm:$0xf] %vm331, %v753
  %787 = vst.msk [vmem:[%s779 + $0x1c] sm:$0xf] %vm331, %v754
  %788 = vst.msk [vmem:[%s779 + $0x20] sm:$0xf] %vm331, %v755
  %789 = vst.msk [vmem:[%s779 + $0x24] sm:$0xf] %vm331, %v756
  %790 = vst.msk [vmem:[%s779 + $0x28] sm:$0xf] %vm331, %v757
  %791 = vst.msk [vmem:[%s779 + $0x2c] sm:$0xf] %vm331, %v758
  %792 = vst.msk [vmem:[%s779 + $0x30] sm:$0xf] %vm331, %v759
  %793 = vst.msk [vmem:[%s779 + $0x34] sm:$0xf] %vm331, %v760
  %794 = vst.msk [vmem:[%s779 + $0x38] sm:$0xf] %vm331, %v761
  %795 = vst.msk [vmem:[%s779 + $0x3c] sm:$0xf] %vm331, %v762
  %796 = vst.msk [vmem:[%s779 + $0x40] sm:$0xf] %vm331, %v763
  %797 = vst.msk [vmem:[%s779 + $0x44] sm:$0xf] %vm331, %v764
  %798 = vst.msk [vmem:[%s779 + $0x48] sm:$0xf] %vm331, %v765
  %799 = vst.msk [vmem:[%s779 + $0x4c] sm:$0xf] %vm331, %v766
  %800 = vst.msk [vmem:[%s779 + $0x50] sm:$0xf] %vm331, %v767
  %801 = vst.msk [vmem:[%s779 + $0x54] sm:$0xf] %vm331, %v768
  %802 = vst.msk [vmem:[%s779 + $0x58] sm:$0xf] %vm331, %v769
  %803 = vst.msk [vmem:[%s779 + $0x5c] sm:$0xf] %vm331, %v770
  %804 = vst.msk [vmem:[%s779 + $0x60] sm:$0xf] %vm331, %v771
  %805 = vst.msk [vmem:[%s779 + $0x64] sm:$0xf] %vm331, %v772
  %806 = vst.msk [vmem:[%s779 + $0x68] sm:$0xf] %vm331, %v773
  %807 = vst.msk [vmem:[%s779 + $0x6c] sm:$0xf] %vm331, %v774
  %808 = vst.msk [vmem:[%s779 + $0x70] sm:$0xf] %vm331, %v775
  %809 = vst.msk [vmem:[%s779 + $0x74] sm:$0xf] %vm331, %v776
  %810 = vst.msk [vmem:[%s779 + $0x78] sm:$0xf] %vm331, %v777
  %811 = vst.msk [vmem:[%s779 + $0x7c] sm:$0xf] %vm331, %v778
  %s812 = scalar_lea.vmem %s1, 192
  %v813 = vld [vmem:[%s812] sm:$0xf]
  %v814 = vld [vmem:[%s812 + $0x4] sm:$0xf]
  %v815 = vld [vmem:[%s812 + $0x8] sm:$0xf]
  %v816 = vld [vmem:[%s812 + $0xc] sm:$0xf]
  %v817 = vld [vmem:[%s812 + $0x10] sm:$0xf]
  %v818 = vld [vmem:[%s812 + $0x14] sm:$0xf]
  %v819 = vld [vmem:[%s812 + $0x18] sm:$0xf]
  %v820 = vld [vmem:[%s812 + $0x1c] sm:$0xf]
  %v821 = vld [vmem:[%s812 + $0x20] sm:$0xf]
  %v822 = vld [vmem:[%s812 + $0x24] sm:$0xf]
  %v823 = vld [vmem:[%s812 + $0x28] sm:$0xf]
  %v824 = vld [vmem:[%s812 + $0x2c] sm:$0xf]
  %v825 = vld [vmem:[%s812 + $0x30] sm:$0xf]
  %v826 = vld [vmem:[%s812 + $0x34] sm:$0xf]
  %v827 = vld [vmem:[%s812 + $0x38] sm:$0xf]
  %v828 = vld [vmem:[%s812 + $0x3c] sm:$0xf]
  %s829 = scalar_lea.vmem %s2, 3
  %v830 = vld [vmem:[%s829] sm:$0x1]
  %v832 = vperm.slane %v830, 0
  %v850 = vunpack.c.l.b16 %v813
  %v851 = vunpack.c.l.b16 %v814
  %v852 = vunpack.c.l.b16 %v815
  %v853 = vunpack.c.l.b16 %v816
  %v854 = vunpack.c.l.b16 %v817
  %v855 = vunpack.c.l.b16 %v818
  %v856 = vunpack.c.l.b16 %v819
  %v857 = vunpack.c.l.b16 %v820
  %v858 = vunpack.c.l.b16 %v821
  %v859 = vunpack.c.l.b16 %v822
  %v860 = vunpack.c.l.b16 %v823
  %v861 = vunpack.c.l.b16 %v824
  %v862 = vunpack.c.l.b16 %v825
  %v863 = vunpack.c.l.b16 %v826
  %v864 = vunpack.c.l.b16 %v827
  %v865 = vunpack.c.l.b16 %v828
  %v866 = vpack.c.b16 %v851, %v850
  %v867 = vpack.c.b16 %v853, %v852
  %v868 = vpack.c.b16 %v855, %v854
  %v869 = vpack.c.b16 %v857, %v856
  %v870 = vpack.c.b16 %v859, %v858
  %v871 = vpack.c.b16 %v861, %v860
  %v872 = vpack.c.b16 %v863, %v862
  %v873 = vpack.c.b16 %v865, %v864
  %882 = vmatpush.bf16.msra.mxu0 %v873
  %883 = vmatpush.bf16.msra.mxu0 %v872
  %884 = vmatpush.bf16.msra.mxu0 %v871
  %885 = vmatpush.bf16.msra.mxu0 %v870
  %886 = vmatpush.bf16.msra.mxu0 %v869
  %887 = vmatpush.bf16.msra.mxu0 %v868
  %888 = vmatpush.bf16.msra.mxu0 %v867
  %889 = vmatpush.bf16.msra.mxu0 %v866
  %890 = vmatmul.bf16.gmra.mxu0 %v130
  %v891 = vpop.f32.mrf.mxu0
  %v892 = vadd.f32 %v832, %v891
  %v893 = vpop.f32.mrf.mxu0
  %v894 = vadd.f32 %v832, %v893
  %895 = vmatmul.bf16.gmra.mxu0 %v131
  %v896 = vpop.f32.mrf.mxu0
  %v897 = vadd.f32 %v832, %v896
  %v898 = vpop.f32.mrf.mxu0
  %v899 = vadd.f32 %v832, %v898
  %900 = vmatmul.bf16.gmra.mxu0 %v132
  %v901 = vpop.f32.mrf.mxu0
  %v902 = vadd.f32 %v832, %v901
  %v903 = vpop.f32.mrf.mxu0
  %v904 = vadd.f32 %v832, %v903
  %905 = vmatmul.bf16.gmra.mxu0 %v133
  %v906 = vpop.f32.mrf.mxu0
  %v907 = vadd.f32 %v832, %v906
  %v908 = vpop.f32.mrf.mxu0
  %v909 = vadd.f32 %v832, %v908
  %910 = vmatmul.bf16.gmra.mxu0 %v134
  %v911 = vpop.f32.mrf.mxu0
  %v912 = vadd.f32 %v832, %v911
  %v913 = vpop.f32.mrf.mxu0
  %v914 = vadd.f32 %v832, %v913
  %915 = vmatmul.bf16.gmra.mxu0 %v135
  %v916 = vpop.f32.mrf.mxu0
  %v917 = vadd.f32 %v832, %v916
  %v918 = vpop.f32.mrf.mxu0
  %v919 = vadd.f32 %v832, %v918
  %920 = vmatmul.bf16.gmra.mxu0 %v136
  %v921 = vpop.f32.mrf.mxu0
  %v922 = vadd.f32 %v832, %v921
  %v923 = vpop.f32.mrf.mxu0
  %v924 = vadd.f32 %v832, %v923
  %925 = vmatmul.bf16.gmra.mxu0 %v137
  %v926 = vpop.f32.mrf.mxu0
  %v927 = vadd.f32 %v832, %v926
  %v928 = vpop.f32.mrf.mxu0
  %v929 = vadd.f32 %v832, %v928
  %930 = vmatmul.bf16.gmra.mxu0 %v138
  %v931 = vpop.f32.mrf.mxu0
  %v932 = vadd.f32 %v832, %v931
  %v933 = vpop.f32.mrf.mxu0
  %v934 = vadd.f32 %v832, %v933
  %935 = vmatmul.bf16.gmra.mxu0 %v139
  %v936 = vpop.f32.mrf.mxu0
  %v937 = vadd.f32 %v832, %v936
  %v938 = vpop.f32.mrf.mxu0
  %v939 = vadd.f32 %v832, %v938
  %940 = vmatmul.bf16.gmra.mxu0 %v140
  %v941 = vpop.f32.mrf.mxu0
  %v942 = vadd.f32 %v832, %v941
  %v943 = vpop.f32.mrf.mxu0
  %v944 = vadd.f32 %v832, %v943
  %945 = vmatmul.bf16.gmra.mxu0 %v141
  %v946 = vpop.f32.mrf.mxu0
  %v947 = vadd.f32 %v832, %v946
  %v948 = vpop.f32.mrf.mxu0
  %v949 = vadd.f32 %v832, %v948
  %950 = vmatmul.bf16.gmra.mxu0 %v142
  %v951 = vpop.f32.mrf.mxu0
  %v952 = vadd.f32 %v832, %v951
  %v953 = vpop.f32.mrf.mxu0
  %v954 = vadd.f32 %v832, %v953
  %955 = vmatmul.bf16.gmra.mxu0 %v143
  %v956 = vpop.f32.mrf.mxu0
  %v957 = vadd.f32 %v832, %v956
  %v958 = vpop.f32.mrf.mxu0
  %v959 = vadd.f32 %v832, %v958
  %960 = vmatmul.bf16.gmra.mxu0 %v144
  %v961 = vpop.f32.mrf.mxu0
  %v962 = vadd.f32 %v832, %v961
  %v963 = vpop.f32.mrf.mxu0
  %v964 = vadd.f32 %v832, %v963
  %965 = vmatmul.bf16.gmra.mxu0 %v145
  %v966 = vpop.f32.mrf.mxu0
  %v967 = vadd.f32 %v832, %v966
  %v968 = vpop.f32.mrf.mxu0
  %v969 = vadd.f32 %v832, %v968
  %970 = vdwg.mxu0
  %v971 = vpack.c.bf16 %v892, %v892
  %v972 = vpack.c.bf16 %v894, %v894
  %v973 = vpack.c.bf16 %v897, %v897
  %v974 = vpack.c.bf16 %v899, %v899
  %v975 = vpack.c.bf16 %v902, %v902
  %v976 = vpack.c.bf16 %v904, %v904
  %v977 = vpack.c.bf16 %v907, %v907
  %v978 = vpack.c.bf16 %v909, %v909
  %v979 = vpack.c.bf16 %v912, %v912
  %v980 = vpack.c.bf16 %v914, %v914
  %v981 = vpack.c.bf16 %v917, %v917
  %v982 = vpack.c.bf16 %v919, %v919
  %v983 = vpack.c.bf16 %v922, %v922
  %v984 = vpack.c.bf16 %v924, %v924
  %v985 = vpack.c.bf16 %v927, %v927
  %v986 = vpack.c.bf16 %v929, %v929
  %v987 = vpack.c.bf16 %v932, %v932
  %v988 = vpack.c.bf16 %v934, %v934
  %v989 = vpack.c.bf16 %v937, %v937
  %v990 = vpack.c.bf16 %v939, %v939
  %v991 = vpack.c.bf16 %v942, %v942
  %v992 = vpack.c.bf16 %v944, %v944
  %v993 = vpack.c.bf16 %v947, %v947
  %v994 = vpack.c.bf16 %v949, %v949
  %v995 = vpack.c.bf16 %v952, %v952
  %v996 = vpack.c.bf16 %v954, %v954
  %v997 = vpack.c.bf16 %v957, %v957
  %v998 = vpack.c.bf16 %v959, %v959
  %v999 = vpack.c.bf16 %v962, %v962
  %v1000 = vpack.c.bf16 %v964, %v964
  %v1001 = vpack.c.bf16 %v967, %v967
  %v1002 = vpack.c.bf16 %v969, %v969
  %s1003 = scalar_lea.vmem %s3, 384
  %1004 = vst.msk [vmem:[%s1003] sm:$0xf] %vm331, %v971
  %1005 = vst.msk [vmem:[%s1003 + $0x4] sm:$0xf] %vm331, %v972
  %1006 = vst.msk [vmem:[%s1003 + $0x8] sm:$0xf] %vm331, %v973
  %1007 = vst.msk [vmem:[%s1003 + $0xc] sm:$0xf] %vm331, %v974
  %1008 = vst.msk [vmem:[%s1003 + $0x10] sm:$0xf] %vm331, %v975
  %1009 = vst.msk [vmem:[%s1003 + $0x14] sm:$0xf] %vm331, %v976
  %1010 = vst.msk [vmem:[%s1003 + $0x18] sm:$0xf] %vm331, %v977
  %1011 = vst.msk [vmem:[%s1003 + $0x1c] sm:$0xf] %vm331, %v978
  %1012 = vst.msk [vmem:[%s1003 + $0x20] sm:$0xf] %vm331, %v979
  %1013 = vst.msk [vmem:[%s1003 + $0x24] sm:$0xf] %vm331, %v980
  %1014 = vst.msk [vmem:[%s1003 + $0x28] sm:$0xf] %vm331, %v981
  %1015 = vst.msk [vmem:[%s1003 + $0x2c] sm:$0xf] %vm331, %v982
  %1016 = vst.msk [vmem:[%s1003 + $0x30] sm:$0xf] %vm331, %v983
  %1017 = vst.msk [vmem:[%s1003 + $0x34] sm:$0xf] %vm331, %v984
  %1018 = vst.msk [vmem:[%s1003 + $0x38] sm:$0xf] %vm331, %v985
  %1019 = vst.msk [vmem:[%s1003 + $0x3c] sm:$0xf] %vm331, %v986
  %1020 = vst.msk [vmem:[%s1003 + $0x40] sm:$0xf] %vm331, %v987
  %1021 = vst.msk [vmem:[%s1003 + $0x44] sm:$0xf] %vm331, %v988
  %1022 = vst.msk [vmem:[%s1003 + $0x48] sm:$0xf] %vm331, %v989
  %1023 = vst.msk [vmem:[%s1003 + $0x4c] sm:$0xf] %vm331, %v990
  %1024 = vst.msk [vmem:[%s1003 + $0x50] sm:$0xf] %vm331, %v991
  %1025 = vst.msk [vmem:[%s1003 + $0x54] sm:$0xf] %vm331, %v992
  %1026 = vst.msk [vmem:[%s1003 + $0x58] sm:$0xf] %vm331, %v993
  %1027 = vst.msk [vmem:[%s1003 + $0x5c] sm:$0xf] %vm331, %v994
  %1028 = vst.msk [vmem:[%s1003 + $0x60] sm:$0xf] %vm331, %v995
  %1029 = vst.msk [vmem:[%s1003 + $0x64] sm:$0xf] %vm331, %v996
  %1030 = vst.msk [vmem:[%s1003 + $0x68] sm:$0xf] %vm331, %v997
  %1031 = vst.msk [vmem:[%s1003 + $0x6c] sm:$0xf] %vm331, %v998
  %1032 = vst.msk [vmem:[%s1003 + $0x70] sm:$0xf] %vm331, %v999
  %1033 = vst.msk [vmem:[%s1003 + $0x74] sm:$0xf] %vm331, %v1000
  %1034 = vst.msk [vmem:[%s1003 + $0x78] sm:$0xf] %vm331, %v1001
  %1035 = vst.msk [vmem:[%s1003 + $0x7c] sm:$0xf] %vm331, %v1002
  %s1036 = scalar_lea.vmem %s1, 256
  %v1037 = vld [vmem:[%s1036] sm:$0xf]
  %v1038 = vld [vmem:[%s1036 + $0x4] sm:$0xf]
  %v1039 = vld [vmem:[%s1036 + $0x8] sm:$0xf]
  %v1040 = vld [vmem:[%s1036 + $0xc] sm:$0xf]
  %v1041 = vld [vmem:[%s1036 + $0x10] sm:$0xf]
  %v1042 = vld [vmem:[%s1036 + $0x14] sm:$0xf]
  %v1043 = vld [vmem:[%s1036 + $0x18] sm:$0xf]
  %v1044 = vld [vmem:[%s1036 + $0x1c] sm:$0xf]
  %v1045 = vld [vmem:[%s1036 + $0x20] sm:$0xf]
  %v1046 = vld [vmem:[%s1036 + $0x24] sm:$0xf]
  %v1047 = vld [vmem:[%s1036 + $0x28] sm:$0xf]
  %v1048 = vld [vmem:[%s1036 + $0x2c] sm:$0xf]
  %v1049 = vld [vmem:[%s1036 + $0x30] sm:$0xf]
  %v1050 = vld [vmem:[%s1036 + $0x34] sm:$0xf]
  %v1051 = vld [vmem:[%s1036 + $0x38] sm:$0xf]
  %v1052 = vld [vmem:[%s1036 + $0x3c] sm:$0xf]
  %s1053 = scalar_lea.vmem %s2, 4
  %v1054 = vld [vmem:[%s1053] sm:$0x1]
  %v1056 = vperm.slane %v1054, 0
  %v1074 = vunpack.c.l.b16 %v1037
  %v1075 = vunpack.c.l.b16 %v1038
  %v1076 = vunpack.c.l.b16 %v1039
  %v1077 = vunpack.c.l.b16 %v1040
  %v1078 = vunpack.c.l.b16 %v1041
  %v1079 = vunpack.c.l.b16 %v1042
  %v1080 = vunpack.c.l.b16 %v1043
  %v1081 = vunpack.c.l.b16 %v1044
  %v1082 = vunpack.c.l.b16 %v1045
  %v1083 = vunpack.c.l.b16 %v1046
  %v1084 = vunpack.c.l.b16 %v1047
  %v1085 = vunpack.c.l.b16 %v1048
  %v1086 = vunpack.c.l.b16 %v1049
  %v1087 = vunpack.c.l.b16 %v1050
  %v1088 = vunpack.c.l.b16 %v1051
  %v1089 = vunpack.c.l.b16 %v1052
  %v1090 = vpack.c.b16 %v1075, %v1074
  %v1091 = vpack.c.b16 %v1077, %v1076
  %v1092 = vpack.c.b16 %v1079, %v1078
  %v1093 = vpack.c.b16 %v1081, %v1080
  %v1094 = vpack.c.b16 %v1083, %v1082
  %v1095 = vpack.c.b16 %v1085, %v1084
  %v1096 = vpack.c.b16 %v1087, %v1086
  %v1097 = vpack.c.b16 %v1089, %v1088
  %1106 = vmatpush.bf16.msra.mxu0 %v1097
  %1107 = vmatpush.bf16.msra.mxu0 %v1096
  %1108 = vmatpush.bf16.msra.mxu0 %v1095
  %1109 = vmatpush.bf16.msra.mxu0 %v1094
  %1110 = vmatpush.bf16.msra.mxu0 %v1093
  %1111 = vmatpush.bf16.msra.mxu0 %v1092
  %1112 = vmatpush.bf16.msra.mxu0 %v1091
  %1113 = vmatpush.bf16.msra.mxu0 %v1090
  %1114 = vmatmul.bf16.gmra.mxu0 %v130
  %v1115 = vpop.f32.mrf.mxu0
  %v1116 = vadd.f32 %v1056, %v1115
  %v1117 = vpop.f32.mrf.mxu0
  %v1118 = vadd.f32 %v1056, %v1117
  %1119 = vmatmul.bf16.gmra.mxu0 %v131
  %v1120 = vpop.f32.mrf.mxu0
  %v1121 = vadd.f32 %v1056, %v1120
  %v1122 = vpop.f32.mrf.mxu0
  %v1123 = vadd.f32 %v1056, %v1122
  %1124 = vmatmul.bf16.gmra.mxu0 %v132
  %v1125 = vpop.f32.mrf.mxu0
  %v1126 = vadd.f32 %v1056, %v1125
  %v1127 = vpop.f32.mrf.mxu0
  %v1128 = vadd.f32 %v1056, %v1127
  %1129 = vmatmul.bf16.gmra.mxu0 %v133
  %v1130 = vpop.f32.mrf.mxu0
  %v1131 = vadd.f32 %v1056, %v1130
  %v1132 = vpop.f32.mrf.mxu0
  %v1133 = vadd.f32 %v1056, %v1132
  %1134 = vmatmul.bf16.gmra.mxu0 %v134
  %v1135 = vpop.f32.mrf.mxu0
  %v1136 = vadd.f32 %v1056, %v1135
  %v1137 = vpop.f32.mrf.mxu0
  %v1138 = vadd.f32 %v1056, %v1137
  %1139 = vmatmul.bf16.gmra.mxu0 %v135
  %v1140 = vpop.f32.mrf.mxu0
  %v1141 = vadd.f32 %v1056, %v1140
  %v1142 = vpop.f32.mrf.mxu0
  %v1143 = vadd.f32 %v1056, %v1142
  %1144 = vmatmul.bf16.gmra.mxu0 %v136
  %v1145 = vpop.f32.mrf.mxu0
  %v1146 = vadd.f32 %v1056, %v1145
  %v1147 = vpop.f32.mrf.mxu0
  %v1148 = vadd.f32 %v1056, %v1147
  %1149 = vmatmul.bf16.gmra.mxu0 %v137
  %v1150 = vpop.f32.mrf.mxu0
  %v1151 = vadd.f32 %v1056, %v1150
  %v1152 = vpop.f32.mrf.mxu0
  %v1153 = vadd.f32 %v1056, %v1152
  %1154 = vmatmul.bf16.gmra.mxu0 %v138
  %v1155 = vpop.f32.mrf.mxu0
  %v1156 = vadd.f32 %v1056, %v1155
  %v1157 = vpop.f32.mrf.mxu0
  %v1158 = vadd.f32 %v1056, %v1157
  %1159 = vmatmul.bf16.gmra.mxu0 %v139
  %v1160 = vpop.f32.mrf.mxu0
  %v1161 = vadd.f32 %v1056, %v1160
  %v1162 = vpop.f32.mrf.mxu0
  %v1163 = vadd.f32 %v1056, %v1162
  %1164 = vmatmul.bf16.gmra.mxu0 %v140
  %v1165 = vpop.f32.mrf.mxu0
  %v1166 = vadd.f32 %v1056, %v1165
  %v1167 = vpop.f32.mrf.mxu0
  %v1168 = vadd.f32 %v1056, %v1167
  %1169 = vmatmul.bf16.gmra.mxu0 %v141
  %v1170 = vpop.f32.mrf.mxu0
  %v1171 = vadd.f32 %v1056, %v1170
  %v1172 = vpop.f32.mrf.mxu0
  %v1173 = vadd.f32 %v1056, %v1172
  %1174 = vmatmul.bf16.gmra.mxu0 %v142
  %v1175 = vpop.f32.mrf.mxu0
  %v1176 = vadd.f32 %v1056, %v1175
  %v1177 = vpop.f32.mrf.mxu0
  %v1178 = vadd.f32 %v1056, %v1177
  %1179 = vmatmul.bf16.gmra.mxu0 %v143
  %v1180 = vpop.f32.mrf.mxu0
  %v1181 = vadd.f32 %v1056, %v1180
  %v1182 = vpop.f32.mrf.mxu0
  %v1183 = vadd.f32 %v1056, %v1182
  %1184 = vmatmul.bf16.gmra.mxu0 %v144
  %v1185 = vpop.f32.mrf.mxu0
  %v1186 = vadd.f32 %v1056, %v1185
  %v1187 = vpop.f32.mrf.mxu0
  %v1188 = vadd.f32 %v1056, %v1187
  %1189 = vmatmul.bf16.gmra.mxu0 %v145
  %v1190 = vpop.f32.mrf.mxu0
  %v1191 = vadd.f32 %v1056, %v1190
  %v1192 = vpop.f32.mrf.mxu0
  %v1193 = vadd.f32 %v1056, %v1192
  %1194 = vdwg.mxu0
  %v1195 = vpack.c.bf16 %v1116, %v1116
  %v1196 = vpack.c.bf16 %v1118, %v1118
  %v1197 = vpack.c.bf16 %v1121, %v1121
  %v1198 = vpack.c.bf16 %v1123, %v1123
  %v1199 = vpack.c.bf16 %v1126, %v1126
  %v1200 = vpack.c.bf16 %v1128, %v1128
  %v1201 = vpack.c.bf16 %v1131, %v1131
  %v1202 = vpack.c.bf16 %v1133, %v1133
  %v1203 = vpack.c.bf16 %v1136, %v1136
  %v1204 = vpack.c.bf16 %v1138, %v1138
  %v1205 = vpack.c.bf16 %v1141, %v1141
  %v1206 = vpack.c.bf16 %v1143, %v1143
  %v1207 = vpack.c.bf16 %v1146, %v1146
  %v1208 = vpack.c.bf16 %v1148, %v1148
  %v1209 = vpack.c.bf16 %v1151, %v1151
  %v1210 = vpack.c.bf16 %v1153, %v1153
  %v1211 = vpack.c.bf16 %v1156, %v1156
  %v1212 = vpack.c.bf16 %v1158, %v1158
  %v1213 = vpack.c.bf16 %v1161, %v1161
  %v1214 = vpack.c.bf16 %v1163, %v1163
  %v1215 = vpack.c.bf16 %v1166, %v1166
  %v1216 = vpack.c.bf16 %v1168, %v1168
  %v1217 = vpack.c.bf16 %v1171, %v1171
  %v1218 = vpack.c.bf16 %v1173, %v1173
  %v1219 = vpack.c.bf16 %v1176, %v1176
  %v1220 = vpack.c.bf16 %v1178, %v1178
  %v1221 = vpack.c.bf16 %v1181, %v1181
  %v1222 = vpack.c.bf16 %v1183, %v1183
  %v1223 = vpack.c.bf16 %v1186, %v1186
  %v1224 = vpack.c.bf16 %v1188, %v1188
  %v1225 = vpack.c.bf16 %v1191, %v1191
  %v1226 = vpack.c.bf16 %v1193, %v1193
  %s1227 = scalar_lea.vmem %s3, 512
  %1228 = vst.msk [vmem:[%s1227] sm:$0xf] %vm331, %v1195
  %1229 = vst.msk [vmem:[%s1227 + $0x4] sm:$0xf] %vm331, %v1196
  %1230 = vst.msk [vmem:[%s1227 + $0x8] sm:$0xf] %vm331, %v1197
  %1231 = vst.msk [vmem:[%s1227 + $0xc] sm:$0xf] %vm331, %v1198
  %1232 = vst.msk [vmem:[%s1227 + $0x10] sm:$0xf] %vm331, %v1199
  %1233 = vst.msk [vmem:[%s1227 + $0x14] sm:$0xf] %vm331, %v1200
  %1234 = vst.msk [vmem:[%s1227 + $0x18] sm:$0xf] %vm331, %v1201
  %1235 = vst.msk [vmem:[%s1227 + $0x1c] sm:$0xf] %vm331, %v1202
  %1236 = vst.msk [vmem:[%s1227 + $0x20] sm:$0xf] %vm331, %v1203
  %1237 = vst.msk [vmem:[%s1227 + $0x24] sm:$0xf] %vm331, %v1204
  %1238 = vst.msk [vmem:[%s1227 + $0x28] sm:$0xf] %vm331, %v1205
  %1239 = vst.msk [vmem:[%s1227 + $0x2c] sm:$0xf] %vm331, %v1206
  %1240 = vst.msk [vmem:[%s1227 + $0x30] sm:$0xf] %vm331, %v1207
  %1241 = vst.msk [vmem:[%s1227 + $0x34] sm:$0xf] %vm331, %v1208
  %1242 = vst.msk [vmem:[%s1227 + $0x38] sm:$0xf] %vm331, %v1209
  %1243 = vst.msk [vmem:[%s1227 + $0x3c] sm:$0xf] %vm331, %v1210
  %1244 = vst.msk [vmem:[%s1227 + $0x40] sm:$0xf] %vm331, %v1211
  %1245 = vst.msk [vmem:[%s1227 + $0x44] sm:$0xf] %vm331, %v1212
  %1246 = vst.msk [vmem:[%s1227 + $0x48] sm:$0xf] %vm331, %v1213
  %1247 = vst.msk [vmem:[%s1227 + $0x4c] sm:$0xf] %vm331, %v1214
  %1248 = vst.msk [vmem:[%s1227 + $0x50] sm:$0xf] %vm331, %v1215
  %1249 = vst.msk [vmem:[%s1227 + $0x54] sm:$0xf] %vm331, %v1216
  %1250 = vst.msk [vmem:[%s1227 + $0x58] sm:$0xf] %vm331, %v1217
  %1251 = vst.msk [vmem:[%s1227 + $0x5c] sm:$0xf] %vm331, %v1218
  %1252 = vst.msk [vmem:[%s1227 + $0x60] sm:$0xf] %vm331, %v1219
  %1253 = vst.msk [vmem:[%s1227 + $0x64] sm:$0xf] %vm331, %v1220
  %1254 = vst.msk [vmem:[%s1227 + $0x68] sm:$0xf] %vm331, %v1221
  %1255 = vst.msk [vmem:[%s1227 + $0x6c] sm:$0xf] %vm331, %v1222
  %1256 = vst.msk [vmem:[%s1227 + $0x70] sm:$0xf] %vm331, %v1223
  %1257 = vst.msk [vmem:[%s1227 + $0x74] sm:$0xf] %vm331, %v1224
  %1258 = vst.msk [vmem:[%s1227 + $0x78] sm:$0xf] %vm331, %v1225
  %1259 = vst.msk [vmem:[%s1227 + $0x7c] sm:$0xf] %vm331, %v1226
  %s1260 = scalar_lea.vmem %s1, 320
  %v1261 = vld [vmem:[%s1260] sm:$0xf]
  %v1262 = vld [vmem:[%s1260 + $0x4] sm:$0xf]
  %v1263 = vld [vmem:[%s1260 + $0x8] sm:$0xf]
  %v1264 = vld [vmem:[%s1260 + $0xc] sm:$0xf]
  %v1265 = vld [vmem:[%s1260 + $0x10] sm:$0xf]
  %v1266 = vld [vmem:[%s1260 + $0x14] sm:$0xf]
  %v1267 = vld [vmem:[%s1260 + $0x18] sm:$0xf]
  %v1268 = vld [vmem:[%s1260 + $0x1c] sm:$0xf]
  %v1269 = vld [vmem:[%s1260 + $0x20] sm:$0xf]
  %v1270 = vld [vmem:[%s1260 + $0x24] sm:$0xf]
  %v1271 = vld [vmem:[%s1260 + $0x28] sm:$0xf]
  %v1272 = vld [vmem:[%s1260 + $0x2c] sm:$0xf]
  %v1273 = vld [vmem:[%s1260 + $0x30] sm:$0xf]
  %v1274 = vld [vmem:[%s1260 + $0x34] sm:$0xf]
  %v1275 = vld [vmem:[%s1260 + $0x38] sm:$0xf]
  %v1276 = vld [vmem:[%s1260 + $0x3c] sm:$0xf]
  %s1277 = scalar_lea.vmem %s2, 5
  %v1278 = vld [vmem:[%s1277] sm:$0x1]
  %v1280 = vperm.slane %v1278, 0
  %v1298 = vunpack.c.l.b16 %v1261
  %v1299 = vunpack.c.l.b16 %v1262
  %v1300 = vunpack.c.l.b16 %v1263
  %v1301 = vunpack.c.l.b16 %v1264
  %v1302 = vunpack.c.l.b16 %v1265
  %v1303 = vunpack.c.l.b16 %v1266
  %v1304 = vunpack.c.l.b16 %v1267
  %v1305 = vunpack.c.l.b16 %v1268
  %v1306 = vunpack.c.l.b16 %v1269
  %v1307 = vunpack.c.l.b16 %v1270
  %v1308 = vunpack.c.l.b16 %v1271
  %v1309 = vunpack.c.l.b16 %v1272
  %v1310 = vunpack.c.l.b16 %v1273
  %v1311 = vunpack.c.l.b16 %v1274
  %v1312 = vunpack.c.l.b16 %v1275
  %v1313 = vunpack.c.l.b16 %v1276
  %v1314 = vpack.c.b16 %v1299, %v1298
  %v1315 = vpack.c.b16 %v1301, %v1300
  %v1316 = vpack.c.b16 %v1303, %v1302
  %v1317 = vpack.c.b16 %v1305, %v1304
  %v1318 = vpack.c.b16 %v1307, %v1306
  %v1319 = vpack.c.b16 %v1309, %v1308
  %v1320 = vpack.c.b16 %v1311, %v1310
  %v1321 = vpack.c.b16 %v1313, %v1312
  %1330 = vmatpush.bf16.msra.mxu0 %v1321
  %1331 = vmatpush.bf16.msra.mxu0 %v1320
  %1332 = vmatpush.bf16.msra.mxu0 %v1319
  %1333 = vmatpush.bf16.msra.mxu0 %v1318
  %1334 = vmatpush.bf16.msra.mxu0 %v1317
  %1335 = vmatpush.bf16.msra.mxu0 %v1316
  %1336 = vmatpush.bf16.msra.mxu0 %v1315
  %1337 = vmatpush.bf16.msra.mxu0 %v1314
  %1338 = vmatmul.bf16.gmra.mxu0 %v130
  %v1339 = vpop.f32.mrf.mxu0
  %v1340 = vadd.f32 %v1280, %v1339
  %v1341 = vpop.f32.mrf.mxu0
  %v1342 = vadd.f32 %v1280, %v1341
  %1343 = vmatmul.bf16.gmra.mxu0 %v131
  %v1344 = vpop.f32.mrf.mxu0
  %v1345 = vadd.f32 %v1280, %v1344
  %v1346 = vpop.f32.mrf.mxu0
  %v1347 = vadd.f32 %v1280, %v1346
  %1348 = vmatmul.bf16.gmra.mxu0 %v132
  %v1349 = vpop.f32.mrf.mxu0
  %v1350 = vadd.f32 %v1280, %v1349
  %v1351 = vpop.f32.mrf.mxu0
  %v1352 = vadd.f32 %v1280, %v1351
  %1353 = vmatmul.bf16.gmra.mxu0 %v133
  %v1354 = vpop.f32.mrf.mxu0
  %v1355 = vadd.f32 %v1280, %v1354
  %v1356 = vpop.f32.mrf.mxu0
  %v1357 = vadd.f32 %v1280, %v1356
  %1358 = vmatmul.bf16.gmra.mxu0 %v134
  %v1359 = vpop.f32.mrf.mxu0
  %v1360 = vadd.f32 %v1280, %v1359
  %v1361 = vpop.f32.mrf.mxu0
  %v1362 = vadd.f32 %v1280, %v1361
  %1363 = vmatmul.bf16.gmra.mxu0 %v135
  %v1364 = vpop.f32.mrf.mxu0
  %v1365 = vadd.f32 %v1280, %v1364
  %v1366 = vpop.f32.mrf.mxu0
  %v1367 = vadd.f32 %v1280, %v1366
  %1368 = vmatmul.bf16.gmra.mxu0 %v136
  %v1369 = vpop.f32.mrf.mxu0
  %v1370 = vadd.f32 %v1280, %v1369
  %v1371 = vpop.f32.mrf.mxu0
  %v1372 = vadd.f32 %v1280, %v1371
  %1373 = vmatmul.bf16.gmra.mxu0 %v137
  %v1374 = vpop.f32.mrf.mxu0
  %v1375 = vadd.f32 %v1280, %v1374
  %v1376 = vpop.f32.mrf.mxu0
  %v1377 = vadd.f32 %v1280, %v1376
  %1378 = vmatmul.bf16.gmra.mxu0 %v138
  %v1379 = vpop.f32.mrf.mxu0
  %v1380 = vadd.f32 %v1280, %v1379
  %v1381 = vpop.f32.mrf.mxu0
  %v1382 = vadd.f32 %v1280, %v1381
  %1383 = vmatmul.bf16.gmra.mxu0 %v139
  %v1384 = vpop.f32.mrf.mxu0
  %v1385 = vadd.f32 %v1280, %v1384
  %v1386 = vpop.f32.mrf.mxu0
  %v1387 = vadd.f32 %v1280, %v1386
  %1388 = vmatmul.bf16.gmra.mxu0 %v140
  %v1389 = vpop.f32.mrf.mxu0
  %v1390 = vadd.f32 %v1280, %v1389
  %v1391 = vpop.f32.mrf.mxu0
  %v1392 = vadd.f32 %v1280, %v1391
  %1393 = vmatmul.bf16.gmra.mxu0 %v141
  %v1394 = vpop.f32.mrf.mxu0
  %v1395 = vadd.f32 %v1280, %v1394
  %v1396 = vpop.f32.mrf.mxu0
  %v1397 = vadd.f32 %v1280, %v1396
  %1398 = vmatmul.bf16.gmra.mxu0 %v142
  %v1399 = vpop.f32.mrf.mxu0
  %v1400 = vadd.f32 %v1280, %v1399
  %v1401 = vpop.f32.mrf.mxu0
  %v1402 = vadd.f32 %v1280, %v1401
  %1403 = vmatmul.bf16.gmra.mxu0 %v143
  %v1404 = vpop.f32.mrf.mxu0
  %v1405 = vadd.f32 %v1280, %v1404
  %v1406 = vpop.f32.mrf.mxu0
  %v1407 = vadd.f32 %v1280, %v1406
  %1408 = vmatmul.bf16.gmra.mxu0 %v144
  %v1409 = vpop.f32.mrf.mxu0
  %v1410 = vadd.f32 %v1280, %v1409
  %v1411 = vpop.f32.mrf.mxu0
  %v1412 = vadd.f32 %v1280, %v1411
  %1413 = vmatmul.bf16.gmra.mxu0 %v145
  %v1414 = vpop.f32.mrf.mxu0
  %v1415 = vadd.f32 %v1280, %v1414
  %v1416 = vpop.f32.mrf.mxu0
  %v1417 = vadd.f32 %v1280, %v1416
  %1418 = vdwg.mxu0
  %v1419 = vpack.c.bf16 %v1340, %v1340
  %v1420 = vpack.c.bf16 %v1342, %v1342
  %v1421 = vpack.c.bf16 %v1345, %v1345
  %v1422 = vpack.c.bf16 %v1347, %v1347
  %v1423 = vpack.c.bf16 %v1350, %v1350
  %v1424 = vpack.c.bf16 %v1352, %v1352
  %v1425 = vpack.c.bf16 %v1355, %v1355
  %v1426 = vpack.c.bf16 %v1357, %v1357
  %v1427 = vpack.c.bf16 %v1360, %v1360
  %v1428 = vpack.c.bf16 %v1362, %v1362
  %v1429 = vpack.c.bf16 %v1365, %v1365
  %v1430 = vpack.c.bf16 %v1367, %v1367
  %v1431 = vpack.c.bf16 %v1370, %v1370
  %v1432 = vpack.c.bf16 %v1372, %v1372
  %v1433 = vpack.c.bf16 %v1375, %v1375
  %v1434 = vpack.c.bf16 %v1377, %v1377
  %v1435 = vpack.c.bf16 %v1380, %v1380
  %v1436 = vpack.c.bf16 %v1382, %v1382
  %v1437 = vpack.c.bf16 %v1385, %v1385
  %v1438 = vpack.c.bf16 %v1387, %v1387
  %v1439 = vpack.c.bf16 %v1390, %v1390
  %v1440 = vpack.c.bf16 %v1392, %v1392
  %v1441 = vpack.c.bf16 %v1395, %v1395
  %v1442 = vpack.c.bf16 %v1397, %v1397
  %v1443 = vpack.c.bf16 %v1400, %v1400
  %v1444 = vpack.c.bf16 %v1402, %v1402
  %v1445 = vpack.c.bf16 %v1405, %v1405
  %v1446 = vpack.c.bf16 %v1407, %v1407
  %v1447 = vpack.c.bf16 %v1410, %v1410
  %v1448 = vpack.c.bf16 %v1412, %v1412
  %v1449 = vpack.c.bf16 %v1415, %v1415
  %v1450 = vpack.c.bf16 %v1417, %v1417
  %s1451 = scalar_lea.vmem %s3, 640
  %1452 = vst.msk [vmem:[%s1451] sm:$0xf] %vm331, %v1419
  %1453 = vst.msk [vmem:[%s1451 + $0x4] sm:$0xf] %vm331, %v1420
  %1454 = vst.msk [vmem:[%s1451 + $0x8] sm:$0xf] %vm331, %v1421
  %1455 = vst.msk [vmem:[%s1451 + $0xc] sm:$0xf] %vm331, %v1422
  %1456 = vst.msk [vmem:[%s1451 + $0x10] sm:$0xf] %vm331, %v1423
  %1457 = vst.msk [vmem:[%s1451 + $0x14] sm:$0xf] %vm331, %v1424
  %1458 = vst.msk [vmem:[%s1451 + $0x18] sm:$0xf] %vm331, %v1425
  %1459 = vst.msk [vmem:[%s1451 + $0x1c] sm:$0xf] %vm331, %v1426
  %1460 = vst.msk [vmem:[%s1451 + $0x20] sm:$0xf] %vm331, %v1427
  %1461 = vst.msk [vmem:[%s1451 + $0x24] sm:$0xf] %vm331, %v1428
  %1462 = vst.msk [vmem:[%s1451 + $0x28] sm:$0xf] %vm331, %v1429
  %1463 = vst.msk [vmem:[%s1451 + $0x2c] sm:$0xf] %vm331, %v1430
  %1464 = vst.msk [vmem:[%s1451 + $0x30] sm:$0xf] %vm331, %v1431
  %1465 = vst.msk [vmem:[%s1451 + $0x34] sm:$0xf] %vm331, %v1432
  %1466 = vst.msk [vmem:[%s1451 + $0x38] sm:$0xf] %vm331, %v1433
  %1467 = vst.msk [vmem:[%s1451 + $0x3c] sm:$0xf] %vm331, %v1434
  %1468 = vst.msk [vmem:[%s1451 + $0x40] sm:$0xf] %vm331, %v1435
  %1469 = vst.msk [vmem:[%s1451 + $0x44] sm:$0xf] %vm331, %v1436
  %1470 = vst.msk [vmem:[%s1451 + $0x48] sm:$0xf] %vm331, %v1437
  %1471 = vst.msk [vmem:[%s1451 + $0x4c] sm:$0xf] %vm331, %v1438
  %1472 = vst.msk [vmem:[%s1451 + $0x50] sm:$0xf] %vm331, %v1439
  %1473 = vst.msk [vmem:[%s1451 + $0x54] sm:$0xf] %vm331, %v1440
  %1474 = vst.msk [vmem:[%s1451 + $0x58] sm:$0xf] %vm331, %v1441
  %1475 = vst.msk [vmem:[%s1451 + $0x5c] sm:$0xf] %vm331, %v1442
  %1476 = vst.msk [vmem:[%s1451 + $0x60] sm:$0xf] %vm331, %v1443
  %1477 = vst.msk [vmem:[%s1451 + $0x64] sm:$0xf] %vm331, %v1444
  %1478 = vst.msk [vmem:[%s1451 + $0x68] sm:$0xf] %vm331, %v1445
  %1479 = vst.msk [vmem:[%s1451 + $0x6c] sm:$0xf] %vm331, %v1446
  %1480 = vst.msk [vmem:[%s1451 + $0x70] sm:$0xf] %vm331, %v1447
  %1481 = vst.msk [vmem:[%s1451 + $0x74] sm:$0xf] %vm331, %v1448
  %1482 = vst.msk [vmem:[%s1451 + $0x78] sm:$0xf] %vm331, %v1449
  %1483 = vst.msk [vmem:[%s1451 + $0x7c] sm:$0xf] %vm331, %v1450
  %s1484 = scalar_lea.vmem %s1, 384
  %v1485 = vld [vmem:[%s1484] sm:$0xf]
  %v1486 = vld [vmem:[%s1484 + $0x4] sm:$0xf]
  %v1487 = vld [vmem:[%s1484 + $0x8] sm:$0xf]
  %v1488 = vld [vmem:[%s1484 + $0xc] sm:$0xf]
  %v1489 = vld [vmem:[%s1484 + $0x10] sm:$0xf]
  %v1490 = vld [vmem:[%s1484 + $0x14] sm:$0xf]
  %v1491 = vld [vmem:[%s1484 + $0x18] sm:$0xf]
  %v1492 = vld [vmem:[%s1484 + $0x1c] sm:$0xf]
  %v1493 = vld [vmem:[%s1484 + $0x20] sm:$0xf]
  %v1494 = vld [vmem:[%s1484 + $0x24] sm:$0xf]
  %v1495 = vld [vmem:[%s1484 + $0x28] sm:$0xf]
  %v1496 = vld [vmem:[%s1484 + $0x2c] sm:$0xf]
  %v1497 = vld [vmem:[%s1484 + $0x30] sm:$0xf]
  %v1498 = vld [vmem:[%s1484 + $0x34] sm:$0xf]
  %v1499 = vld [vmem:[%s1484 + $0x38] sm:$0xf]
  %v1500 = vld [vmem:[%s1484 + $0x3c] sm:$0xf]
  %s1501 = scalar_lea.vmem %s2, 6
  %v1502 = vld [vmem:[%s1501] sm:$0x1]
  %v1504 = vperm.slane %v1502, 0
  %v1522 = vunpack.c.l.b16 %v1485
  %v1523 = vunpack.c.l.b16 %v1486
  %v1524 = vunpack.c.l.b16 %v1487
  %v1525 = vunpack.c.l.b16 %v1488
  %v1526 = vunpack.c.l.b16 %v1489
  %v1527 = vunpack.c.l.b16 %v1490
  %v1528 = vunpack.c.l.b16 %v1491
  %v1529 = vunpack.c.l.b16 %v1492
  %v1530 = vunpack.c.l.b16 %v1493
  %v1531 = vunpack.c.l.b16 %v1494
  %v1532 = vunpack.c.l.b16 %v1495
  %v1533 = vunpack.c.l.b16 %v1496
  %v1534 = vunpack.c.l.b16 %v1497
  %v1535 = vunpack.c.l.b16 %v1498
  %v1536 = vunpack.c.l.b16 %v1499
  %v1537 = vunpack.c.l.b16 %v1500
  %v1538 = vpack.c.b16 %v1523, %v1522
  %v1539 = vpack.c.b16 %v1525, %v1524
  %v1540 = vpack.c.b16 %v1527, %v1526
  %v1541 = vpack.c.b16 %v1529, %v1528
  %v1542 = vpack.c.b16 %v1531, %v1530
  %v1543 = vpack.c.b16 %v1533, %v1532
  %v1544 = vpack.c.b16 %v1535, %v1534
  %v1545 = vpack.c.b16 %v1537, %v1536
  %1554 = vmatpush.bf16.msra.mxu0 %v1545
  %1555 = vmatpush.bf16.msra.mxu0 %v1544
  %1556 = vmatpush.bf16.msra.mxu0 %v1543
  %1557 = vmatpush.bf16.msra.mxu0 %v1542
  %1558 = vmatpush.bf16.msra.mxu0 %v1541
  %1559 = vmatpush.bf16.msra.mxu0 %v1540
  %1560 = vmatpush.bf16.msra.mxu0 %v1539
  %1561 = vmatpush.bf16.msra.mxu0 %v1538
  %1562 = vmatmul.bf16.gmra.mxu0 %v130
  %v1563 = vpop.f32.mrf.mxu0
  %v1564 = vadd.f32 %v1504, %v1563
  %v1565 = vpop.f32.mrf.mxu0
  %v1566 = vadd.f32 %v1504, %v1565
  %1567 = vmatmul.bf16.gmra.mxu0 %v131
  %v1568 = vpop.f32.mrf.mxu0
  %v1569 = vadd.f32 %v1504, %v1568
  %v1570 = vpop.f32.mrf.mxu0
  %v1571 = vadd.f32 %v1504, %v1570
  %1572 = vmatmul.bf16.gmra.mxu0 %v132
  %v1573 = vpop.f32.mrf.mxu0
  %v1574 = vadd.f32 %v1504, %v1573
  %v1575 = vpop.f32.mrf.mxu0
  %v1576 = vadd.f32 %v1504, %v1575
  %1577 = vmatmul.bf16.gmra.mxu0 %v133
  %v1578 = vpop.f32.mrf.mxu0
  %v1579 = vadd.f32 %v1504, %v1578
  %v1580 = vpop.f32.mrf.mxu0
  %v1581 = vadd.f32 %v1504, %v1580
  %1582 = vmatmul.bf16.gmra.mxu0 %v134
  %v1583 = vpop.f32.mrf.mxu0
  %v1584 = vadd.f32 %v1504, %v1583
  %v1585 = vpop.f32.mrf.mxu0
  %v1586 = vadd.f32 %v1504, %v1585
  %1587 = vmatmul.bf16.gmra.mxu0 %v135
  %v1588 = vpop.f32.mrf.mxu0
  %v1589 = vadd.f32 %v1504, %v1588
  %v1590 = vpop.f32.mrf.mxu0
  %v1591 = vadd.f32 %v1504, %v1590
  %1592 = vmatmul.bf16.gmra.mxu0 %v136
  %v1593 = vpop.f32.mrf.mxu0
  %v1594 = vadd.f32 %v1504, %v1593
  %v1595 = vpop.f32.mrf.mxu0
  %v1596 = vadd.f32 %v1504, %v1595
  %1597 = vmatmul.bf16.gmra.mxu0 %v137
  %v1598 = vpop.f32.mrf.mxu0
  %v1599 = vadd.f32 %v1504, %v1598
  %v1600 = vpop.f32.mrf.mxu0
  %v1601 = vadd.f32 %v1504, %v1600
  %1602 = vmatmul.bf16.gmra.mxu0 %v138
  %v1603 = vpop.f32.mrf.mxu0
  %v1604 = vadd.f32 %v1504, %v1603
  %v1605 = vpop.f32.mrf.mxu0
  %v1606 = vadd.f32 %v1504, %v1605
  %1607 = vmatmul.bf16.gmra.mxu0 %v139
  %v1608 = vpop.f32.mrf.mxu0
  %v1609 = vadd.f32 %v1504, %v1608
  %v1610 = vpop.f32.mrf.mxu0
  %v1611 = vadd.f32 %v1504, %v1610
  %1612 = vmatmul.bf16.gmra.mxu0 %v140
  %v1613 = vpop.f32.mrf.mxu0
  %v1614 = vadd.f32 %v1504, %v1613
  %v1615 = vpop.f32.mrf.mxu0
  %v1616 = vadd.f32 %v1504, %v1615
  %1617 = vmatmul.bf16.gmra.mxu0 %v141
  %v1618 = vpop.f32.mrf.mxu0
  %v1619 = vadd.f32 %v1504, %v1618
  %v1620 = vpop.f32.mrf.mxu0
  %v1621 = vadd.f32 %v1504, %v1620
  %1622 = vmatmul.bf16.gmra.mxu0 %v142
  %v1623 = vpop.f32.mrf.mxu0
  %v1624 = vadd.f32 %v1504, %v1623
  %v1625 = vpop.f32.mrf.mxu0
  %v1626 = vadd.f32 %v1504, %v1625
  %1627 = vmatmul.bf16.gmra.mxu0 %v143
  %v1628 = vpop.f32.mrf.mxu0
  %v1629 = vadd.f32 %v1504, %v1628
  %v1630 = vpop.f32.mrf.mxu0
  %v1631 = vadd.f32 %v1504, %v1630
  %1632 = vmatmul.bf16.gmra.mxu0 %v144
  %v1633 = vpop.f32.mrf.mxu0
  %v1634 = vadd.f32 %v1504, %v1633
  %v1635 = vpop.f32.mrf.mxu0
  %v1636 = vadd.f32 %v1504, %v1635
  %1637 = vmatmul.bf16.gmra.mxu0 %v145
  %v1638 = vpop.f32.mrf.mxu0
  %v1639 = vadd.f32 %v1504, %v1638
  %v1640 = vpop.f32.mrf.mxu0
  %v1641 = vadd.f32 %v1504, %v1640
  %1642 = vdwg.mxu0
  %v1643 = vpack.c.bf16 %v1564, %v1564
  %v1644 = vpack.c.bf16 %v1566, %v1566
  %v1645 = vpack.c.bf16 %v1569, %v1569
  %v1646 = vpack.c.bf16 %v1571, %v1571
  %v1647 = vpack.c.bf16 %v1574, %v1574
  %v1648 = vpack.c.bf16 %v1576, %v1576
  %v1649 = vpack.c.bf16 %v1579, %v1579
  %v1650 = vpack.c.bf16 %v1581, %v1581
  %v1651 = vpack.c.bf16 %v1584, %v1584
  %v1652 = vpack.c.bf16 %v1586, %v1586
  %v1653 = vpack.c.bf16 %v1589, %v1589
  %v1654 = vpack.c.bf16 %v1591, %v1591
  %v1655 = vpack.c.bf16 %v1594, %v1594
  %v1656 = vpack.c.bf16 %v1596, %v1596
  %v1657 = vpack.c.bf16 %v1599, %v1599
  %v1658 = vpack.c.bf16 %v1601, %v1601
  %v1659 = vpack.c.bf16 %v1604, %v1604
  %v1660 = vpack.c.bf16 %v1606, %v1606
  %v1661 = vpack.c.bf16 %v1609, %v1609
  %v1662 = vpack.c.bf16 %v1611, %v1611
  %v1663 = vpack.c.bf16 %v1614, %v1614
  %v1664 = vpack.c.bf16 %v1616, %v1616
  %v1665 = vpack.c.bf16 %v1619, %v1619
  %v1666 = vpack.c.bf16 %v1621, %v1621
  %v1667 = vpack.c.bf16 %v1624, %v1624
  %v1668 = vpack.c.bf16 %v1626, %v1626
  %v1669 = vpack.c.bf16 %v1629, %v1629
  %v1670 = vpack.c.bf16 %v1631, %v1631
  %v1671 = vpack.c.bf16 %v1634, %v1634
  %v1672 = vpack.c.bf16 %v1636, %v1636
  %v1673 = vpack.c.bf16 %v1639, %v1639
  %v1674 = vpack.c.bf16 %v1641, %v1641
  %s1675 = scalar_lea.vmem %s3, 768
  %1676 = vst.msk [vmem:[%s1675] sm:$0xf] %vm331, %v1643
  %1677 = vst.msk [vmem:[%s1675 + $0x4] sm:$0xf] %vm331, %v1644
  %1678 = vst.msk [vmem:[%s1675 + $0x8] sm:$0xf] %vm331, %v1645
  %1679 = vst.msk [vmem:[%s1675 + $0xc] sm:$0xf] %vm331, %v1646
  %1680 = vst.msk [vmem:[%s1675 + $0x10] sm:$0xf] %vm331, %v1647
  %1681 = vst.msk [vmem:[%s1675 + $0x14] sm:$0xf] %vm331, %v1648
  %1682 = vst.msk [vmem:[%s1675 + $0x18] sm:$0xf] %vm331, %v1649
  %1683 = vst.msk [vmem:[%s1675 + $0x1c] sm:$0xf] %vm331, %v1650
  %1684 = vst.msk [vmem:[%s1675 + $0x20] sm:$0xf] %vm331, %v1651
  %1685 = vst.msk [vmem:[%s1675 + $0x24] sm:$0xf] %vm331, %v1652
  %1686 = vst.msk [vmem:[%s1675 + $0x28] sm:$0xf] %vm331, %v1653
  %1687 = vst.msk [vmem:[%s1675 + $0x2c] sm:$0xf] %vm331, %v1654
  %1688 = vst.msk [vmem:[%s1675 + $0x30] sm:$0xf] %vm331, %v1655
  %1689 = vst.msk [vmem:[%s1675 + $0x34] sm:$0xf] %vm331, %v1656
  %1690 = vst.msk [vmem:[%s1675 + $0x38] sm:$0xf] %vm331, %v1657
  %1691 = vst.msk [vmem:[%s1675 + $0x3c] sm:$0xf] %vm331, %v1658
  %1692 = vst.msk [vmem:[%s1675 + $0x40] sm:$0xf] %vm331, %v1659
  %1693 = vst.msk [vmem:[%s1675 + $0x44] sm:$0xf] %vm331, %v1660
  %1694 = vst.msk [vmem:[%s1675 + $0x48] sm:$0xf] %vm331, %v1661
  %1695 = vst.msk [vmem:[%s1675 + $0x4c] sm:$0xf] %vm331, %v1662
  %1696 = vst.msk [vmem:[%s1675 + $0x50] sm:$0xf] %vm331, %v1663
  %1697 = vst.msk [vmem:[%s1675 + $0x54] sm:$0xf] %vm331, %v1664
  %1698 = vst.msk [vmem:[%s1675 + $0x58] sm:$0xf] %vm331, %v1665
  %1699 = vst.msk [vmem:[%s1675 + $0x5c] sm:$0xf] %vm331, %v1666
  %1700 = vst.msk [vmem:[%s1675 + $0x60] sm:$0xf] %vm331, %v1667
  %1701 = vst.msk [vmem:[%s1675 + $0x64] sm:$0xf] %vm331, %v1668
  %1702 = vst.msk [vmem:[%s1675 + $0x68] sm:$0xf] %vm331, %v1669
  %1703 = vst.msk [vmem:[%s1675 + $0x6c] sm:$0xf] %vm331, %v1670
  %1704 = vst.msk [vmem:[%s1675 + $0x70] sm:$0xf] %vm331, %v1671
  %1705 = vst.msk [vmem:[%s1675 + $0x74] sm:$0xf] %vm331, %v1672
  %1706 = vst.msk [vmem:[%s1675 + $0x78] sm:$0xf] %vm331, %v1673
  %1707 = vst.msk [vmem:[%s1675 + $0x7c] sm:$0xf] %vm331, %v1674
  %s1708 = scalar_lea.vmem %s1, 448
  %v1709 = vld [vmem:[%s1708] sm:$0xf]
  %v1710 = vld [vmem:[%s1708 + $0x4] sm:$0xf]
  %v1711 = vld [vmem:[%s1708 + $0x8] sm:$0xf]
  %v1712 = vld [vmem:[%s1708 + $0xc] sm:$0xf]
  %v1713 = vld [vmem:[%s1708 + $0x10] sm:$0xf]
  %v1714 = vld [vmem:[%s1708 + $0x14] sm:$0xf]
  %v1715 = vld [vmem:[%s1708 + $0x18] sm:$0xf]
  %v1716 = vld [vmem:[%s1708 + $0x1c] sm:$0xf]
  %v1717 = vld [vmem:[%s1708 + $0x20] sm:$0xf]
  %v1718 = vld [vmem:[%s1708 + $0x24] sm:$0xf]
  %v1719 = vld [vmem:[%s1708 + $0x28] sm:$0xf]
  %v1720 = vld [vmem:[%s1708 + $0x2c] sm:$0xf]
  %v1721 = vld [vmem:[%s1708 + $0x30] sm:$0xf]
  %v1722 = vld [vmem:[%s1708 + $0x34] sm:$0xf]
  %v1723 = vld [vmem:[%s1708 + $0x38] sm:$0xf]
  %v1724 = vld [vmem:[%s1708 + $0x3c] sm:$0xf]
  %s1725 = scalar_lea.vmem %s2, 7
  %v1726 = vld [vmem:[%s1725] sm:$0x1]
  %v1728 = vperm.slane %v1726, 0
  %v1746 = vunpack.c.l.b16 %v1709
  %v1747 = vunpack.c.l.b16 %v1710
  %v1748 = vunpack.c.l.b16 %v1711
  %v1749 = vunpack.c.l.b16 %v1712
  %v1750 = vunpack.c.l.b16 %v1713
  %v1751 = vunpack.c.l.b16 %v1714
  %v1752 = vunpack.c.l.b16 %v1715
  %v1753 = vunpack.c.l.b16 %v1716
  %v1754 = vunpack.c.l.b16 %v1717
  %v1755 = vunpack.c.l.b16 %v1718
  %v1756 = vunpack.c.l.b16 %v1719
  %v1757 = vunpack.c.l.b16 %v1720
  %v1758 = vunpack.c.l.b16 %v1721
  %v1759 = vunpack.c.l.b16 %v1722
  %v1760 = vunpack.c.l.b16 %v1723
  %v1761 = vunpack.c.l.b16 %v1724
  %v1762 = vpack.c.b16 %v1747, %v1746
  %v1763 = vpack.c.b16 %v1749, %v1748
  %v1764 = vpack.c.b16 %v1751, %v1750
  %v1765 = vpack.c.b16 %v1753, %v1752
  %v1766 = vpack.c.b16 %v1755, %v1754
  %v1767 = vpack.c.b16 %v1757, %v1756
  %v1768 = vpack.c.b16 %v1759, %v1758
  %v1769 = vpack.c.b16 %v1761, %v1760
  %1778 = vmatpush.bf16.msra.mxu0 %v1769
  %1779 = vmatpush.bf16.msra.mxu0 %v1768
  %1780 = vmatpush.bf16.msra.mxu0 %v1767
  %1781 = vmatpush.bf16.msra.mxu0 %v1766
  %1782 = vmatpush.bf16.msra.mxu0 %v1765
  %1783 = vmatpush.bf16.msra.mxu0 %v1764
  %1784 = vmatpush.bf16.msra.mxu0 %v1763
  %1785 = vmatpush.bf16.msra.mxu0 %v1762
  %1786 = vmatmul.bf16.gmra.mxu0 %v130
  %v1787 = vpop.f32.mrf.mxu0
  %v1788 = vadd.f32 %v1728, %v1787
  %v1789 = vpop.f32.mrf.mxu0
  %v1790 = vadd.f32 %v1728, %v1789
  %1791 = vmatmul.bf16.gmra.mxu0 %v131
  %v1792 = vpop.f32.mrf.mxu0
  %v1793 = vadd.f32 %v1728, %v1792
  %v1794 = vpop.f32.mrf.mxu0
  %v1795 = vadd.f32 %v1728, %v1794
  %1796 = vmatmul.bf16.gmra.mxu0 %v132
  %v1797 = vpop.f32.mrf.mxu0
  %v1798 = vadd.f32 %v1728, %v1797
  %v1799 = vpop.f32.mrf.mxu0
  %v1800 = vadd.f32 %v1728, %v1799
  %1801 = vmatmul.bf16.gmra.mxu0 %v133
  %v1802 = vpop.f32.mrf.mxu0
  %v1803 = vadd.f32 %v1728, %v1802
  %v1804 = vpop.f32.mrf.mxu0
  %v1805 = vadd.f32 %v1728, %v1804
  %1806 = vmatmul.bf16.gmra.mxu0 %v134
  %v1807 = vpop.f32.mrf.mxu0
  %v1808 = vadd.f32 %v1728, %v1807
  %v1809 = vpop.f32.mrf.mxu0
  %v1810 = vadd.f32 %v1728, %v1809
  %1811 = vmatmul.bf16.gmra.mxu0 %v135
  %v1812 = vpop.f32.mrf.mxu0
  %v1813 = vadd.f32 %v1728, %v1812
  %v1814 = vpop.f32.mrf.mxu0
  %v1815 = vadd.f32 %v1728, %v1814
  %1816 = vmatmul.bf16.gmra.mxu0 %v136
  %v1817 = vpop.f32.mrf.mxu0
  %v1818 = vadd.f32 %v1728, %v1817
  %v1819 = vpop.f32.mrf.mxu0
  %v1820 = vadd.f32 %v1728, %v1819
  %1821 = vmatmul.bf16.gmra.mxu0 %v137
  %v1822 = vpop.f32.mrf.mxu0
  %v1823 = vadd.f32 %v1728, %v1822
  %v1824 = vpop.f32.mrf.mxu0
  %v1825 = vadd.f32 %v1728, %v1824
  %1826 = vmatmul.bf16.gmra.mxu0 %v138
  %v1827 = vpop.f32.mrf.mxu0
  %v1828 = vadd.f32 %v1728, %v1827
  %v1829 = vpop.f32.mrf.mxu0
  %v1830 = vadd.f32 %v1728, %v1829
  %1831 = vmatmul.bf16.gmra.mxu0 %v139
  %v1832 = vpop.f32.mrf.mxu0
  %v1833 = vadd.f32 %v1728, %v1832
  %v1834 = vpop.f32.mrf.mxu0
  %v1835 = vadd.f32 %v1728, %v1834
  %1836 = vmatmul.bf16.gmra.mxu0 %v140
  %v1837 = vpop.f32.mrf.mxu0
  %v1838 = vadd.f32 %v1728, %v1837
  %v1839 = vpop.f32.mrf.mxu0
  %v1840 = vadd.f32 %v1728, %v1839
  %1841 = vmatmul.bf16.gmra.mxu0 %v141
  %v1842 = vpop.f32.mrf.mxu0
  %v1843 = vadd.f32 %v1728, %v1842
  %v1844 = vpop.f32.mrf.mxu0
  %v1845 = vadd.f32 %v1728, %v1844
  %1846 = vmatmul.bf16.gmra.mxu0 %v142
  %v1847 = vpop.f32.mrf.mxu0
  %v1848 = vadd.f32 %v1728, %v1847
  %v1849 = vpop.f32.mrf.mxu0
  %v1850 = vadd.f32 %v1728, %v1849
  %1851 = vmatmul.bf16.gmra.mxu0 %v143
  %v1852 = vpop.f32.mrf.mxu0
  %v1853 = vadd.f32 %v1728, %v1852
  %v1854 = vpop.f32.mrf.mxu0
  %v1855 = vadd.f32 %v1728, %v1854
  %1856 = vmatmul.bf16.gmra.mxu0 %v144
  %v1857 = vpop.f32.mrf.mxu0
  %v1858 = vadd.f32 %v1728, %v1857
  %v1859 = vpop.f32.mrf.mxu0
  %v1860 = vadd.f32 %v1728, %v1859
  %1861 = vmatmul.bf16.gmra.mxu0 %v145
  %v1862 = vpop.f32.mrf.mxu0
  %v1863 = vadd.f32 %v1728, %v1862
  %v1864 = vpop.f32.mrf.mxu0
  %v1865 = vadd.f32 %v1728, %v1864
  %1866 = vdwg.mxu0
  %v1867 = vpack.c.bf16 %v1788, %v1788
  %v1868 = vpack.c.bf16 %v1790, %v1790
  %v1869 = vpack.c.bf16 %v1793, %v1793
  %v1870 = vpack.c.bf16 %v1795, %v1795
  %v1871 = vpack.c.bf16 %v1798, %v1798
  %v1872 = vpack.c.bf16 %v1800, %v1800
  %v1873 = vpack.c.bf16 %v1803, %v1803
  %v1874 = vpack.c.bf16 %v1805, %v1805
  %v1875 = vpack.c.bf16 %v1808, %v1808
  %v1876 = vpack.c.bf16 %v1810, %v1810
  %v1877 = vpack.c.bf16 %v1813, %v1813
  %v1878 = vpack.c.bf16 %v1815, %v1815
  %v1879 = vpack.c.bf16 %v1818, %v1818
  %v1880 = vpack.c.bf16 %v1820, %v1820
  %v1881 = vpack.c.bf16 %v1823, %v1823
  %v1882 = vpack.c.bf16 %v1825, %v1825
  %v1883 = vpack.c.bf16 %v1828, %v1828
  %v1884 = vpack.c.bf16 %v1830, %v1830
  %v1885 = vpack.c.bf16 %v1833, %v1833
  %v1886 = vpack.c.bf16 %v1835, %v1835
  %v1887 = vpack.c.bf16 %v1838, %v1838
  %v1888 = vpack.c.bf16 %v1840, %v1840
  %v1889 = vpack.c.bf16 %v1843, %v1843
  %v1890 = vpack.c.bf16 %v1845, %v1845
  %v1891 = vpack.c.bf16 %v1848, %v1848
  %v1892 = vpack.c.bf16 %v1850, %v1850
  %v1893 = vpack.c.bf16 %v1853, %v1853
  %v1894 = vpack.c.bf16 %v1855, %v1855
  %v1895 = vpack.c.bf16 %v1858, %v1858
  %v1896 = vpack.c.bf16 %v1860, %v1860
  %v1897 = vpack.c.bf16 %v1863, %v1863
  %v1898 = vpack.c.bf16 %v1865, %v1865
  %s1899 = scalar_lea.vmem %s3, 896
  %1900 = vst.msk [vmem:[%s1899] sm:$0xf] %vm331, %v1867
  %1901 = vst.msk [vmem:[%s1899 + $0x4] sm:$0xf] %vm331, %v1868
  %1902 = vst.msk [vmem:[%s1899 + $0x8] sm:$0xf] %vm331, %v1869
  %1903 = vst.msk [vmem:[%s1899 + $0xc] sm:$0xf] %vm331, %v1870
  %1904 = vst.msk [vmem:[%s1899 + $0x10] sm:$0xf] %vm331, %v1871
  %1905 = vst.msk [vmem:[%s1899 + $0x14] sm:$0xf] %vm331, %v1872
  %1906 = vst.msk [vmem:[%s1899 + $0x18] sm:$0xf] %vm331, %v1873
  %1907 = vst.msk [vmem:[%s1899 + $0x1c] sm:$0xf] %vm331, %v1874
  %1908 = vst.msk [vmem:[%s1899 + $0x20] sm:$0xf] %vm331, %v1875
  %1909 = vst.msk [vmem:[%s1899 + $0x24] sm:$0xf] %vm331, %v1876
  %1910 = vst.msk [vmem:[%s1899 + $0x28] sm:$0xf] %vm331, %v1877
  %1911 = vst.msk [vmem:[%s1899 + $0x2c] sm:$0xf] %vm331, %v1878
  %1912 = vst.msk [vmem:[%s1899 + $0x30] sm:$0xf] %vm331, %v1879
  %1913 = vst.msk [vmem:[%s1899 + $0x34] sm:$0xf] %vm331, %v1880
  %1914 = vst.msk [vmem:[%s1899 + $0x38] sm:$0xf] %vm331, %v1881
  %1915 = vst.msk [vmem:[%s1899 + $0x3c] sm:$0xf] %vm331, %v1882
  %1916 = vst.msk [vmem:[%s1899 + $0x40] sm:$0xf] %vm331, %v1883
  %1917 = vst.msk [vmem:[%s1899 + $0x44] sm:$0xf] %vm331, %v1884
  %1918 = vst.msk [vmem:[%s1899 + $0x48] sm:$0xf] %vm331, %v1885
  %1919 = vst.msk [vmem:[%s1899 + $0x4c] sm:$0xf] %vm331, %v1886
  %1920 = vst.msk [vmem:[%s1899 + $0x50] sm:$0xf] %vm331, %v1887
  %1921 = vst.msk [vmem:[%s1899 + $0x54] sm:$0xf] %vm331, %v1888
  %1922 = vst.msk [vmem:[%s1899 + $0x58] sm:$0xf] %vm331, %v1889
  %1923 = vst.msk [vmem:[%s1899 + $0x5c] sm:$0xf] %vm331, %v1890
  %1924 = vst.msk [vmem:[%s1899 + $0x60] sm:$0xf] %vm331, %v1891
  %1925 = vst.msk [vmem:[%s1899 + $0x64] sm:$0xf] %vm331, %v1892
  %1926 = vst.msk [vmem:[%s1899 + $0x68] sm:$0xf] %vm331, %v1893
  %1927 = vst.msk [vmem:[%s1899 + $0x6c] sm:$0xf] %vm331, %v1894
  %1928 = vst.msk [vmem:[%s1899 + $0x70] sm:$0xf] %vm331, %v1895
  %1929 = vst.msk [vmem:[%s1899 + $0x74] sm:$0xf] %vm331, %v1896
  %1930 = vst.msk [vmem:[%s1899 + $0x78] sm:$0xf] %vm331, %v1897
  %1931 = vst.msk [vmem:[%s1899 + $0x7c] sm:$0xf] %vm331, %v1898
  %s1932 = scalar_lea.vmem %s1, 512
  %v1933 = vld [vmem:[%s1932] sm:$0xf]
  %v1934 = vld [vmem:[%s1932 + $0x4] sm:$0xf]
  %v1935 = vld [vmem:[%s1932 + $0x8] sm:$0xf]
  %v1936 = vld [vmem:[%s1932 + $0xc] sm:$0xf]
  %v1937 = vld [vmem:[%s1932 + $0x10] sm:$0xf]
  %v1938 = vld [vmem:[%s1932 + $0x14] sm:$0xf]
  %v1939 = vld [vmem:[%s1932 + $0x18] sm:$0xf]
  %v1940 = vld [vmem:[%s1932 + $0x1c] sm:$0xf]
  %v1941 = vld [vmem:[%s1932 + $0x20] sm:$0xf]
  %v1942 = vld [vmem:[%s1932 + $0x24] sm:$0xf]
  %v1943 = vld [vmem:[%s1932 + $0x28] sm:$0xf]
  %v1944 = vld [vmem:[%s1932 + $0x2c] sm:$0xf]
  %v1945 = vld [vmem:[%s1932 + $0x30] sm:$0xf]
  %v1946 = vld [vmem:[%s1932 + $0x34] sm:$0xf]
  %v1947 = vld [vmem:[%s1932 + $0x38] sm:$0xf]
  %v1948 = vld [vmem:[%s1932 + $0x3c] sm:$0xf]
  %s1949 = scalar_lea.vmem %s2, 8
  %v1950 = vld [vmem:[%s1949] sm:$0x1]
  %v1952 = vperm.slane %v1950, 0
  %v1970 = vunpack.c.l.b16 %v1933
  %v1971 = vunpack.c.l.b16 %v1934
  %v1972 = vunpack.c.l.b16 %v1935
  %v1973 = vunpack.c.l.b16 %v1936
  %v1974 = vunpack.c.l.b16 %v1937
  %v1975 = vunpack.c.l.b16 %v1938
  %v1976 = vunpack.c.l.b16 %v1939
  %v1977 = vunpack.c.l.b16 %v1940
  %v1978 = vunpack.c.l.b16 %v1941
  %v1979 = vunpack.c.l.b16 %v1942
  %v1980 = vunpack.c.l.b16 %v1943
  %v1981 = vunpack.c.l.b16 %v1944
  %v1982 = vunpack.c.l.b16 %v1945
  %v1983 = vunpack.c.l.b16 %v1946
  %v1984 = vunpack.c.l.b16 %v1947
  %v1985 = vunpack.c.l.b16 %v1948
  %v1986 = vpack.c.b16 %v1971, %v1970
  %v1987 = vpack.c.b16 %v1973, %v1972
  %v1988 = vpack.c.b16 %v1975, %v1974
  %v1989 = vpack.c.b16 %v1977, %v1976
  %v1990 = vpack.c.b16 %v1979, %v1978
  %v1991 = vpack.c.b16 %v1981, %v1980
  %v1992 = vpack.c.b16 %v1983, %v1982
  %v1993 = vpack.c.b16 %v1985, %v1984
  %2002 = vmatpush.bf16.msra.mxu0 %v1993
  %2003 = vmatpush.bf16.msra.mxu0 %v1992
  %2004 = vmatpush.bf16.msra.mxu0 %v1991
  %2005 = vmatpush.bf16.msra.mxu0 %v1990
  %2006 = vmatpush.bf16.msra.mxu0 %v1989
  %2007 = vmatpush.bf16.msra.mxu0 %v1988
  %2008 = vmatpush.bf16.msra.mxu0 %v1987
  %2009 = vmatpush.bf16.msra.mxu0 %v1986
  %2010 = vmatmul.bf16.gmra.mxu0 %v130
  %v2011 = vpop.f32.mrf.mxu0
  %v2012 = vadd.f32 %v1952, %v2011
  %v2013 = vpop.f32.mrf.mxu0
  %v2014 = vadd.f32 %v1952, %v2013
  %2015 = vmatmul.bf16.gmra.mxu0 %v131
  %v2016 = vpop.f32.mrf.mxu0
  %v2017 = vadd.f32 %v1952, %v2016
  %v2018 = vpop.f32.mrf.mxu0
  %v2019 = vadd.f32 %v1952, %v2018
  %2020 = vmatmul.bf16.gmra.mxu0 %v132
  %v2021 = vpop.f32.mrf.mxu0
  %v2022 = vadd.f32 %v1952, %v2021
  %v2023 = vpop.f32.mrf.mxu0
  %v2024 = vadd.f32 %v1952, %v2023
  %2025 = vmatmul.bf16.gmra.mxu0 %v133
  %v2026 = vpop.f32.mrf.mxu0
  %v2027 = vadd.f32 %v1952, %v2026
  %v2028 = vpop.f32.mrf.mxu0
  %v2029 = vadd.f32 %v1952, %v2028
  %2030 = vmatmul.bf16.gmra.mxu0 %v134
  %v2031 = vpop.f32.mrf.mxu0
  %v2032 = vadd.f32 %v1952, %v2031
  %v2033 = vpop.f32.mrf.mxu0
  %v2034 = vadd.f32 %v1952, %v2033
  %2035 = vmatmul.bf16.gmra.mxu0 %v135
  %v2036 = vpop.f32.mrf.mxu0
  %v2037 = vadd.f32 %v1952, %v2036
  %v2038 = vpop.f32.mrf.mxu0
  %v2039 = vadd.f32 %v1952, %v2038
  %2040 = vmatmul.bf16.gmra.mxu0 %v136
  %v2041 = vpop.f32.mrf.mxu0
  %v2042 = vadd.f32 %v1952, %v2041
  %v2043 = vpop.f32.mrf.mxu0
  %v2044 = vadd.f32 %v1952, %v2043
  %2045 = vmatmul.bf16.gmra.mxu0 %v137
  %v2046 = vpop.f32.mrf.mxu0
  %v2047 = vadd.f32 %v1952, %v2046
  %v2048 = vpop.f32.mrf.mxu0
  %v2049 = vadd.f32 %v1952, %v2048
  %2050 = vmatmul.bf16.gmra.mxu0 %v138
  %v2051 = vpop.f32.mrf.mxu0
  %v2052 = vadd.f32 %v1952, %v2051
  %v2053 = vpop.f32.mrf.mxu0
  %v2054 = vadd.f32 %v1952, %v2053
  %2055 = vmatmul.bf16.gmra.mxu0 %v139
  %v2056 = vpop.f32.mrf.mxu0
  %v2057 = vadd.f32 %v1952, %v2056
  %v2058 = vpop.f32.mrf.mxu0
  %v2059 = vadd.f32 %v1952, %v2058
  %2060 = vmatmul.bf16.gmra.mxu0 %v140
  %v2061 = vpop.f32.mrf.mxu0
  %v2062 = vadd.f32 %v1952, %v2061
  %v2063 = vpop.f32.mrf.mxu0
  %v2064 = vadd.f32 %v1952, %v2063
  %2065 = vmatmul.bf16.gmra.mxu0 %v141
  %v2066 = vpop.f32.mrf.mxu0
  %v2067 = vadd.f32 %v1952, %v2066
  %v2068 = vpop.f32.mrf.mxu0
  %v2069 = vadd.f32 %v1952, %v2068
  %2070 = vmatmul.bf16.gmra.mxu0 %v142
  %v2071 = vpop.f32.mrf.mxu0
  %v2072 = vadd.f32 %v1952, %v2071
  %v2073 = vpop.f32.mrf.mxu0
  %v2074 = vadd.f32 %v1952, %v2073
  %2075 = vmatmul.bf16.gmra.mxu0 %v143
  %v2076 = vpop.f32.mrf.mxu0
  %v2077 = vadd.f32 %v1952, %v2076
  %v2078 = vpop.f32.mrf.mxu0
  %v2079 = vadd.f32 %v1952, %v2078
  %2080 = vmatmul.bf16.gmra.mxu0 %v144
  %v2081 = vpop.f32.mrf.mxu0
  %v2082 = vadd.f32 %v1952, %v2081
  %v2083 = vpop.f32.mrf.mxu0
  %v2084 = vadd.f32 %v1952, %v2083
  %2085 = vmatmul.bf16.gmra.mxu0 %v145
  %v2086 = vpop.f32.mrf.mxu0
  %v2087 = vadd.f32 %v1952, %v2086
  %v2088 = vpop.f32.mrf.mxu0
  %v2089 = vadd.f32 %v1952, %v2088
  %2090 = vdwg.mxu0
  %v2091 = vpack.c.bf16 %v2012, %v2012
  %v2092 = vpack.c.bf16 %v2014, %v2014
  %v2093 = vpack.c.bf16 %v2017, %v2017
  %v2094 = vpack.c.bf16 %v2019, %v2019
  %v2095 = vpack.c.bf16 %v2022, %v2022
  %v2096 = vpack.c.bf16 %v2024, %v2024
  %v2097 = vpack.c.bf16 %v2027, %v2027
  %v2098 = vpack.c.bf16 %v2029, %v2029
  %v2099 = vpack.c.bf16 %v2032, %v2032
  %v2100 = vpack.c.bf16 %v2034, %v2034
  %v2101 = vpack.c.bf16 %v2037, %v2037
  %v2102 = vpack.c.bf16 %v2039, %v2039
  %v2103 = vpack.c.bf16 %v2042, %v2042
  %v2104 = vpack.c.bf16 %v2044, %v2044
  %v2105 = vpack.c.bf16 %v2047, %v2047
  %v2106 = vpack.c.bf16 %v2049, %v2049
  %v2107 = vpack.c.bf16 %v2052, %v2052
  %v2108 = vpack.c.bf16 %v2054, %v2054
  %v2109 = vpack.c.bf16 %v2057, %v2057
  %v2110 = vpack.c.bf16 %v2059, %v2059
  %v2111 = vpack.c.bf16 %v2062, %v2062
  %v2112 = vpack.c.bf16 %v2064, %v2064
  %v2113 = vpack.c.bf16 %v2067, %v2067
  %v2114 = vpack.c.bf16 %v2069, %v2069
  %v2115 = vpack.c.bf16 %v2072, %v2072
  %v2116 = vpack.c.bf16 %v2074, %v2074
  %v2117 = vpack.c.bf16 %v2077, %v2077
  %v2118 = vpack.c.bf16 %v2079, %v2079
  %v2119 = vpack.c.bf16 %v2082, %v2082
  %v2120 = vpack.c.bf16 %v2084, %v2084
  %v2121 = vpack.c.bf16 %v2087, %v2087
  %v2122 = vpack.c.bf16 %v2089, %v2089
  %s2123 = scalar_lea.vmem %s3, 1024
  %2124 = vst.msk [vmem:[%s2123] sm:$0xf] %vm331, %v2091
  %2125 = vst.msk [vmem:[%s2123 + $0x4] sm:$0xf] %vm331, %v2092
  %2126 = vst.msk [vmem:[%s2123 + $0x8] sm:$0xf] %vm331, %v2093
  %2127 = vst.msk [vmem:[%s2123 + $0xc] sm:$0xf] %vm331, %v2094
  %2128 = vst.msk [vmem:[%s2123 + $0x10] sm:$0xf] %vm331, %v2095
  %2129 = vst.msk [vmem:[%s2123 + $0x14] sm:$0xf] %vm331, %v2096
  %2130 = vst.msk [vmem:[%s2123 + $0x18] sm:$0xf] %vm331, %v2097
  %2131 = vst.msk [vmem:[%s2123 + $0x1c] sm:$0xf] %vm331, %v2098
  %2132 = vst.msk [vmem:[%s2123 + $0x20] sm:$0xf] %vm331, %v2099
  %2133 = vst.msk [vmem:[%s2123 + $0x24] sm:$0xf] %vm331, %v2100
  %2134 = vst.msk [vmem:[%s2123 + $0x28] sm:$0xf] %vm331, %v2101
  %2135 = vst.msk [vmem:[%s2123 + $0x2c] sm:$0xf] %vm331, %v2102
  %2136 = vst.msk [vmem:[%s2123 + $0x30] sm:$0xf] %vm331, %v2103
  %2137 = vst.msk [vmem:[%s2123 + $0x34] sm:$0xf] %vm331, %v2104
  %2138 = vst.msk [vmem:[%s2123 + $0x38] sm:$0xf] %vm331, %v2105
  %2139 = vst.msk [vmem:[%s2123 + $0x3c] sm:$0xf] %vm331, %v2106
  %2140 = vst.msk [vmem:[%s2123 + $0x40] sm:$0xf] %vm331, %v2107
  %2141 = vst.msk [vmem:[%s2123 + $0x44] sm:$0xf] %vm331, %v2108
  %2142 = vst.msk [vmem:[%s2123 + $0x48] sm:$0xf] %vm331, %v2109
  %2143 = vst.msk [vmem:[%s2123 + $0x4c] sm:$0xf] %vm331, %v2110
  %2144 = vst.msk [vmem:[%s2123 + $0x50] sm:$0xf] %vm331, %v2111
  %2145 = vst.msk [vmem:[%s2123 + $0x54] sm:$0xf] %vm331, %v2112
  %2146 = vst.msk [vmem:[%s2123 + $0x58] sm:$0xf] %vm331, %v2113
  %2147 = vst.msk [vmem:[%s2123 + $0x5c] sm:$0xf] %vm331, %v2114
  %2148 = vst.msk [vmem:[%s2123 + $0x60] sm:$0xf] %vm331, %v2115
  %2149 = vst.msk [vmem:[%s2123 + $0x64] sm:$0xf] %vm331, %v2116
  %2150 = vst.msk [vmem:[%s2123 + $0x68] sm:$0xf] %vm331, %v2117
  %2151 = vst.msk [vmem:[%s2123 + $0x6c] sm:$0xf] %vm331, %v2118
  %2152 = vst.msk [vmem:[%s2123 + $0x70] sm:$0xf] %vm331, %v2119
  %2153 = vst.msk [vmem:[%s2123 + $0x74] sm:$0xf] %vm331, %v2120
  %2154 = vst.msk [vmem:[%s2123 + $0x78] sm:$0xf] %vm331, %v2121
  %2155 = vst.msk [vmem:[%s2123 + $0x7c] sm:$0xf] %vm331, %v2122
  %s2156 = scalar_lea.vmem %s1, 576
  %v2157 = vld [vmem:[%s2156] sm:$0xf]
  %v2158 = vld [vmem:[%s2156 + $0x4] sm:$0xf]
  %v2159 = vld [vmem:[%s2156 + $0x8] sm:$0xf]
  %v2160 = vld [vmem:[%s2156 + $0xc] sm:$0xf]
  %v2161 = vld [vmem:[%s2156 + $0x10] sm:$0xf]
  %v2162 = vld [vmem:[%s2156 + $0x14] sm:$0xf]
  %v2163 = vld [vmem:[%s2156 + $0x18] sm:$0xf]
  %v2164 = vld [vmem:[%s2156 + $0x1c] sm:$0xf]
  %v2165 = vld [vmem:[%s2156 + $0x20] sm:$0xf]
  %v2166 = vld [vmem:[%s2156 + $0x24] sm:$0xf]
  %v2167 = vld [vmem:[%s2156 + $0x28] sm:$0xf]
  %v2168 = vld [vmem:[%s2156 + $0x2c] sm:$0xf]
  %v2169 = vld [vmem:[%s2156 + $0x30] sm:$0xf]
  %v2170 = vld [vmem:[%s2156 + $0x34] sm:$0xf]
  %v2171 = vld [vmem:[%s2156 + $0x38] sm:$0xf]
  %v2172 = vld [vmem:[%s2156 + $0x3c] sm:$0xf]
  %s2173 = scalar_lea.vmem %s2, 9
  %v2174 = vld [vmem:[%s2173] sm:$0x1]
  %v2176 = vperm.slane %v2174, 0
  %v2194 = vunpack.c.l.b16 %v2157
  %v2195 = vunpack.c.l.b16 %v2158
  %v2196 = vunpack.c.l.b16 %v2159
  %v2197 = vunpack.c.l.b16 %v2160
  %v2198 = vunpack.c.l.b16 %v2161
  %v2199 = vunpack.c.l.b16 %v2162
  %v2200 = vunpack.c.l.b16 %v2163
  %v2201 = vunpack.c.l.b16 %v2164
  %v2202 = vunpack.c.l.b16 %v2165
  %v2203 = vunpack.c.l.b16 %v2166
  %v2204 = vunpack.c.l.b16 %v2167
  %v2205 = vunpack.c.l.b16 %v2168
  %v2206 = vunpack.c.l.b16 %v2169
  %v2207 = vunpack.c.l.b16 %v2170
  %v2208 = vunpack.c.l.b16 %v2171
  %v2209 = vunpack.c.l.b16 %v2172
  %v2210 = vpack.c.b16 %v2195, %v2194
  %v2211 = vpack.c.b16 %v2197, %v2196
  %v2212 = vpack.c.b16 %v2199, %v2198
  %v2213 = vpack.c.b16 %v2201, %v2200
  %v2214 = vpack.c.b16 %v2203, %v2202
  %v2215 = vpack.c.b16 %v2205, %v2204
  %v2216 = vpack.c.b16 %v2207, %v2206
  %v2217 = vpack.c.b16 %v2209, %v2208
  %2226 = vmatpush.bf16.msra.mxu0 %v2217
  %2227 = vmatpush.bf16.msra.mxu0 %v2216
  %2228 = vmatpush.bf16.msra.mxu0 %v2215
  %2229 = vmatpush.bf16.msra.mxu0 %v2214
  %2230 = vmatpush.bf16.msra.mxu0 %v2213
  %2231 = vmatpush.bf16.msra.mxu0 %v2212
  %2232 = vmatpush.bf16.msra.mxu0 %v2211
  %2233 = vmatpush.bf16.msra.mxu0 %v2210
  %2234 = vmatmul.bf16.gmra.mxu0 %v130
  %v2235 = vpop.f32.mrf.mxu0
  %v2236 = vadd.f32 %v2176, %v2235
  %v2237 = vpop.f32.mrf.mxu0
  %v2238 = vadd.f32 %v2176, %v2237
  %2239 = vmatmul.bf16.gmra.mxu0 %v131
  %v2240 = vpop.f32.mrf.mxu0
  %v2241 = vadd.f32 %v2176, %v2240
  %v2242 = vpop.f32.mrf.mxu0
  %v2243 = vadd.f32 %v2176, %v2242
  %2244 = vmatmul.bf16.gmra.mxu0 %v132
  %v2245 = vpop.f32.mrf.mxu0
  %v2246 = vadd.f32 %v2176, %v2245
  %v2247 = vpop.f32.mrf.mxu0
  %v2248 = vadd.f32 %v2176, %v2247
  %2249 = vmatmul.bf16.gmra.mxu0 %v133
  %v2250 = vpop.f32.mrf.mxu0
  %v2251 = vadd.f32 %v2176, %v2250
  %v2252 = vpop.f32.mrf.mxu0
  %v2253 = vadd.f32 %v2176, %v2252
  %2254 = vmatmul.bf16.gmra.mxu0 %v134
  %v2255 = vpop.f32.mrf.mxu0
  %v2256 = vadd.f32 %v2176, %v2255
  %v2257 = vpop.f32.mrf.mxu0
  %v2258 = vadd.f32 %v2176, %v2257
  %2259 = vmatmul.bf16.gmra.mxu0 %v135
  %v2260 = vpop.f32.mrf.mxu0
  %v2261 = vadd.f32 %v2176, %v2260
  %v2262 = vpop.f32.mrf.mxu0
  %v2263 = vadd.f32 %v2176, %v2262
  %2264 = vmatmul.bf16.gmra.mxu0 %v136
  %v2265 = vpop.f32.mrf.mxu0
  %v2266 = vadd.f32 %v2176, %v2265
  %v2267 = vpop.f32.mrf.mxu0
  %v2268 = vadd.f32 %v2176, %v2267
  %2269 = vmatmul.bf16.gmra.mxu0 %v137
  %v2270 = vpop.f32.mrf.mxu0
  %v2271 = vadd.f32 %v2176, %v2270
  %v2272 = vpop.f32.mrf.mxu0
  %v2273 = vadd.f32 %v2176, %v2272
  %2274 = vmatmul.bf16.gmra.mxu0 %v138
  %v2275 = vpop.f32.mrf.mxu0
  %v2276 = vadd.f32 %v2176, %v2275
  %v2277 = vpop.f32.mrf.mxu0
  %v2278 = vadd.f32 %v2176, %v2277
  %2279 = vmatmul.bf16.gmra.mxu0 %v139
  %v2280 = vpop.f32.mrf.mxu0
  %v2281 = vadd.f32 %v2176, %v2280
  %v2282 = vpop.f32.mrf.mxu0
  %v2283 = vadd.f32 %v2176, %v2282
  %2284 = vmatmul.bf16.gmra.mxu0 %v140
  %v2285 = vpop.f32.mrf.mxu0
  %v2286 = vadd.f32 %v2176, %v2285
  %v2287 = vpop.f32.mrf.mxu0
  %v2288 = vadd.f32 %v2176, %v2287
  %2289 = vmatmul.bf16.gmra.mxu0 %v141
  %v2290 = vpop.f32.mrf.mxu0
  %v2291 = vadd.f32 %v2176, %v2290
  %v2292 = vpop.f32.mrf.mxu0
  %v2293 = vadd.f32 %v2176, %v2292
  %2294 = vmatmul.bf16.gmra.mxu0 %v142
  %v2295 = vpop.f32.mrf.mxu0
  %v2296 = vadd.f32 %v2176, %v2295
  %v2297 = vpop.f32.mrf.mxu0
  %v2298 = vadd.f32 %v2176, %v2297
  %2299 = vmatmul.bf16.gmra.mxu0 %v143
  %v2300 = vpop.f32.mrf.mxu0
  %v2301 = vadd.f32 %v2176, %v2300
  %v2302 = vpop.f32.mrf.mxu0
  %v2303 = vadd.f32 %v2176, %v2302
  %2304 = vmatmul.bf16.gmra.mxu0 %v144
  %v2305 = vpop.f32.mrf.mxu0
  %v2306 = vadd.f32 %v2176, %v2305
  %v2307 = vpop.f32.mrf.mxu0
  %v2308 = vadd.f32 %v2176, %v2307
  %2309 = vmatmul.bf16.gmra.mxu0 %v145
  %v2310 = vpop.f32.mrf.mxu0
  %v2311 = vadd.f32 %v2176, %v2310
  %v2312 = vpop.f32.mrf.mxu0
  %v2313 = vadd.f32 %v2176, %v2312
  %2314 = vdwg.mxu0
  %v2315 = vpack.c.bf16 %v2236, %v2236
  %v2316 = vpack.c.bf16 %v2238, %v2238
  %v2317 = vpack.c.bf16 %v2241, %v2241
  %v2318 = vpack.c.bf16 %v2243, %v2243
  %v2319 = vpack.c.bf16 %v2246, %v2246
  %v2320 = vpack.c.bf16 %v2248, %v2248
  %v2321 = vpack.c.bf16 %v2251, %v2251
  %v2322 = vpack.c.bf16 %v2253, %v2253
  %v2323 = vpack.c.bf16 %v2256, %v2256
  %v2324 = vpack.c.bf16 %v2258, %v2258
  %v2325 = vpack.c.bf16 %v2261, %v2261
  %v2326 = vpack.c.bf16 %v2263, %v2263
  %v2327 = vpack.c.bf16 %v2266, %v2266
  %v2328 = vpack.c.bf16 %v2268, %v2268
  %v2329 = vpack.c.bf16 %v2271, %v2271
  %v2330 = vpack.c.bf16 %v2273, %v2273
  %v2331 = vpack.c.bf16 %v2276, %v2276
  %v2332 = vpack.c.bf16 %v2278, %v2278
  %v2333 = vpack.c.bf16 %v2281, %v2281
  %v2334 = vpack.c.bf16 %v2283, %v2283
  %v2335 = vpack.c.bf16 %v2286, %v2286
  %v2336 = vpack.c.bf16 %v2288, %v2288
  %v2337 = vpack.c.bf16 %v2291, %v2291
  %v2338 = vpack.c.bf16 %v2293, %v2293
  %v2339 = vpack.c.bf16 %v2296, %v2296
  %v2340 = vpack.c.bf16 %v2298, %v2298
  %v2341 = vpack.c.bf16 %v2301, %v2301
  %v2342 = vpack.c.bf16 %v2303, %v2303
  %v2343 = vpack.c.bf16 %v2306, %v2306
  %v2344 = vpack.c.bf16 %v2308, %v2308
  %v2345 = vpack.c.bf16 %v2311, %v2311
  %v2346 = vpack.c.bf16 %v2313, %v2313
  %s2347 = scalar_lea.vmem %s3, 1152
  %2348 = vst.msk [vmem:[%s2347] sm:$0xf] %vm331, %v2315
  %2349 = vst.msk [vmem:[%s2347 + $0x4] sm:$0xf] %vm331, %v2316
  %2350 = vst.msk [vmem:[%s2347 + $0x8] sm:$0xf] %vm331, %v2317
  %2351 = vst.msk [vmem:[%s2347 + $0xc] sm:$0xf] %vm331, %v2318
  %2352 = vst.msk [vmem:[%s2347 + $0x10] sm:$0xf] %vm331, %v2319
  %2353 = vst.msk [vmem:[%s2347 + $0x14] sm:$0xf] %vm331, %v2320
  %2354 = vst.msk [vmem:[%s2347 + $0x18] sm:$0xf] %vm331, %v2321
  %2355 = vst.msk [vmem:[%s2347 + $0x1c] sm:$0xf] %vm331, %v2322
  %2356 = vst.msk [vmem:[%s2347 + $0x20] sm:$0xf] %vm331, %v2323
  %2357 = vst.msk [vmem:[%s2347 + $0x24] sm:$0xf] %vm331, %v2324
  %2358 = vst.msk [vmem:[%s2347 + $0x28] sm:$0xf] %vm331, %v2325
  %2359 = vst.msk [vmem:[%s2347 + $0x2c] sm:$0xf] %vm331, %v2326
  %2360 = vst.msk [vmem:[%s2347 + $0x30] sm:$0xf] %vm331, %v2327
  %2361 = vst.msk [vmem:[%s2347 + $0x34] sm:$0xf] %vm331, %v2328
  %2362 = vst.msk [vmem:[%s2347 + $0x38] sm:$0xf] %vm331, %v2329
  %2363 = vst.msk [vmem:[%s2347 + $0x3c] sm:$0xf] %vm331, %v2330
  %2364 = vst.msk [vmem:[%s2347 + $0x40] sm:$0xf] %vm331, %v2331
  %2365 = vst.msk [vmem:[%s2347 + $0x44] sm:$0xf] %vm331, %v2332
  %2366 = vst.msk [vmem:[%s2347 + $0x48] sm:$0xf] %vm331, %v2333
  %2367 = vst.msk [vmem:[%s2347 + $0x4c] sm:$0xf] %vm331, %v2334
  %2368 = vst.msk [vmem:[%s2347 + $0x50] sm:$0xf] %vm331, %v2335
  %2369 = vst.msk [vmem:[%s2347 + $0x54] sm:$0xf] %vm331, %v2336
  %2370 = vst.msk [vmem:[%s2347 + $0x58] sm:$0xf] %vm331, %v2337
  %2371 = vst.msk [vmem:[%s2347 + $0x5c] sm:$0xf] %vm331, %v2338
  %2372 = vst.msk [vmem:[%s2347 + $0x60] sm:$0xf] %vm331, %v2339
  %2373 = vst.msk [vmem:[%s2347 + $0x64] sm:$0xf] %vm331, %v2340
  %2374 = vst.msk [vmem:[%s2347 + $0x68] sm:$0xf] %vm331, %v2341
  %2375 = vst.msk [vmem:[%s2347 + $0x6c] sm:$0xf] %vm331, %v2342
  %2376 = vst.msk [vmem:[%s2347 + $0x70] sm:$0xf] %vm331, %v2343
  %2377 = vst.msk [vmem:[%s2347 + $0x74] sm:$0xf] %vm331, %v2344
  %2378 = vst.msk [vmem:[%s2347 + $0x78] sm:$0xf] %vm331, %v2345
  %2379 = vst.msk [vmem:[%s2347 + $0x7c] sm:$0xf] %vm331, %v2346
  %s2380 = scalar_lea.vmem %s1, 640
  %v2381 = vld [vmem:[%s2380] sm:$0xf]
  %v2382 = vld [vmem:[%s2380 + $0x4] sm:$0xf]
  %v2383 = vld [vmem:[%s2380 + $0x8] sm:$0xf]
  %v2384 = vld [vmem:[%s2380 + $0xc] sm:$0xf]
  %v2385 = vld [vmem:[%s2380 + $0x10] sm:$0xf]
  %v2386 = vld [vmem:[%s2380 + $0x14] sm:$0xf]
  %v2387 = vld [vmem:[%s2380 + $0x18] sm:$0xf]
  %v2388 = vld [vmem:[%s2380 + $0x1c] sm:$0xf]
  %v2389 = vld [vmem:[%s2380 + $0x20] sm:$0xf]
  %v2390 = vld [vmem:[%s2380 + $0x24] sm:$0xf]
  %v2391 = vld [vmem:[%s2380 + $0x28] sm:$0xf]
  %v2392 = vld [vmem:[%s2380 + $0x2c] sm:$0xf]
  %v2393 = vld [vmem:[%s2380 + $0x30] sm:$0xf]
  %v2394 = vld [vmem:[%s2380 + $0x34] sm:$0xf]
  %v2395 = vld [vmem:[%s2380 + $0x38] sm:$0xf]
  %v2396 = vld [vmem:[%s2380 + $0x3c] sm:$0xf]
  %s2397 = scalar_lea.vmem %s2, 10
  %v2398 = vld [vmem:[%s2397] sm:$0x1]
  %v2400 = vperm.slane %v2398, 0
  %v2418 = vunpack.c.l.b16 %v2381
  %v2419 = vunpack.c.l.b16 %v2382
  %v2420 = vunpack.c.l.b16 %v2383
  %v2421 = vunpack.c.l.b16 %v2384
  %v2422 = vunpack.c.l.b16 %v2385
  %v2423 = vunpack.c.l.b16 %v2386
  %v2424 = vunpack.c.l.b16 %v2387
  %v2425 = vunpack.c.l.b16 %v2388
  %v2426 = vunpack.c.l.b16 %v2389
  %v2427 = vunpack.c.l.b16 %v2390
  %v2428 = vunpack.c.l.b16 %v2391
  %v2429 = vunpack.c.l.b16 %v2392
  %v2430 = vunpack.c.l.b16 %v2393
  %v2431 = vunpack.c.l.b16 %v2394
  %v2432 = vunpack.c.l.b16 %v2395
  %v2433 = vunpack.c.l.b16 %v2396
  %v2434 = vpack.c.b16 %v2419, %v2418
  %v2435 = vpack.c.b16 %v2421, %v2420
  %v2436 = vpack.c.b16 %v2423, %v2422
  %v2437 = vpack.c.b16 %v2425, %v2424
  %v2438 = vpack.c.b16 %v2427, %v2426
  %v2439 = vpack.c.b16 %v2429, %v2428
  %v2440 = vpack.c.b16 %v2431, %v2430
  %v2441 = vpack.c.b16 %v2433, %v2432
  %2450 = vmatpush.bf16.msra.mxu0 %v2441
  %2451 = vmatpush.bf16.msra.mxu0 %v2440
  %2452 = vmatpush.bf16.msra.mxu0 %v2439
  %2453 = vmatpush.bf16.msra.mxu0 %v2438
  %2454 = vmatpush.bf16.msra.mxu0 %v2437
  %2455 = vmatpush.bf16.msra.mxu0 %v2436
  %2456 = vmatpush.bf16.msra.mxu0 %v2435
  %2457 = vmatpush.bf16.msra.mxu0 %v2434
  %2458 = vmatmul.bf16.gmra.mxu0 %v130
  %v2459 = vpop.f32.mrf.mxu0
  %v2460 = vadd.f32 %v2400, %v2459
  %v2461 = vpop.f32.mrf.mxu0
  %v2462 = vadd.f32 %v2400, %v2461
  %2463 = vmatmul.bf16.gmra.mxu0 %v131
  %v2464 = vpop.f32.mrf.mxu0
  %v2465 = vadd.f32 %v2400, %v2464
  %v2466 = vpop.f32.mrf.mxu0
  %v2467 = vadd.f32 %v2400, %v2466
  %2468 = vmatmul.bf16.gmra.mxu0 %v132
  %v2469 = vpop.f32.mrf.mxu0
  %v2470 = vadd.f32 %v2400, %v2469
  %v2471 = vpop.f32.mrf.mxu0
  %v2472 = vadd.f32 %v2400, %v2471
  %2473 = vmatmul.bf16.gmra.mxu0 %v133
  %v2474 = vpop.f32.mrf.mxu0
  %v2475 = vadd.f32 %v2400, %v2474
  %v2476 = vpop.f32.mrf.mxu0
  %v2477 = vadd.f32 %v2400, %v2476
  %2478 = vmatmul.bf16.gmra.mxu0 %v134
  %v2479 = vpop.f32.mrf.mxu0
  %v2480 = vadd.f32 %v2400, %v2479
  %v2481 = vpop.f32.mrf.mxu0
  %v2482 = vadd.f32 %v2400, %v2481
  %2483 = vmatmul.bf16.gmra.mxu0 %v135
  %v2484 = vpop.f32.mrf.mxu0
  %v2485 = vadd.f32 %v2400, %v2484
  %v2486 = vpop.f32.mrf.mxu0
  %v2487 = vadd.f32 %v2400, %v2486
  %2488 = vmatmul.bf16.gmra.mxu0 %v136
  %v2489 = vpop.f32.mrf.mxu0
  %v2490 = vadd.f32 %v2400, %v2489
  %v2491 = vpop.f32.mrf.mxu0
  %v2492 = vadd.f32 %v2400, %v2491
  %2493 = vmatmul.bf16.gmra.mxu0 %v137
  %v2494 = vpop.f32.mrf.mxu0
  %v2495 = vadd.f32 %v2400, %v2494
  %v2496 = vpop.f32.mrf.mxu0
  %v2497 = vadd.f32 %v2400, %v2496
  %2498 = vmatmul.bf16.gmra.mxu0 %v138
  %v2499 = vpop.f32.mrf.mxu0
  %v2500 = vadd.f32 %v2400, %v2499
  %v2501 = vpop.f32.mrf.mxu0
  %v2502 = vadd.f32 %v2400, %v2501
  %2503 = vmatmul.bf16.gmra.mxu0 %v139
  %v2504 = vpop.f32.mrf.mxu0
  %v2505 = vadd.f32 %v2400, %v2504
  %v2506 = vpop.f32.mrf.mxu0
  %v2507 = vadd.f32 %v2400, %v2506
  %2508 = vmatmul.bf16.gmra.mxu0 %v140
  %v2509 = vpop.f32.mrf.mxu0
  %v2510 = vadd.f32 %v2400, %v2509
  %v2511 = vpop.f32.mrf.mxu0
  %v2512 = vadd.f32 %v2400, %v2511
  %2513 = vmatmul.bf16.gmra.mxu0 %v141
  %v2514 = vpop.f32.mrf.mxu0
  %v2515 = vadd.f32 %v2400, %v2514
  %v2516 = vpop.f32.mrf.mxu0
  %v2517 = vadd.f32 %v2400, %v2516
  %2518 = vmatmul.bf16.gmra.mxu0 %v142
  %v2519 = vpop.f32.mrf.mxu0
  %v2520 = vadd.f32 %v2400, %v2519
  %v2521 = vpop.f32.mrf.mxu0
  %v2522 = vadd.f32 %v2400, %v2521
  %2523 = vmatmul.bf16.gmra.mxu0 %v143
  %v2524 = vpop.f32.mrf.mxu0
  %v2525 = vadd.f32 %v2400, %v2524
  %v2526 = vpop.f32.mrf.mxu0
  %v2527 = vadd.f32 %v2400, %v2526
  %2528 = vmatmul.bf16.gmra.mxu0 %v144
  %v2529 = vpop.f32.mrf.mxu0
  %v2530 = vadd.f32 %v2400, %v2529
  %v2531 = vpop.f32.mrf.mxu0
  %v2532 = vadd.f32 %v2400, %v2531
  %2533 = vmatmul.bf16.gmra.mxu0 %v145
  %v2534 = vpop.f32.mrf.mxu0
  %v2535 = vadd.f32 %v2400, %v2534
  %v2536 = vpop.f32.mrf.mxu0
  %v2537 = vadd.f32 %v2400, %v2536
  %2538 = vdwg.mxu0
  %v2539 = vpack.c.bf16 %v2460, %v2460
  %v2540 = vpack.c.bf16 %v2462, %v2462
  %v2541 = vpack.c.bf16 %v2465, %v2465
  %v2542 = vpack.c.bf16 %v2467, %v2467
  %v2543 = vpack.c.bf16 %v2470, %v2470
  %v2544 = vpack.c.bf16 %v2472, %v2472
  %v2545 = vpack.c.bf16 %v2475, %v2475
  %v2546 = vpack.c.bf16 %v2477, %v2477
  %v2547 = vpack.c.bf16 %v2480, %v2480
  %v2548 = vpack.c.bf16 %v2482, %v2482
  %v2549 = vpack.c.bf16 %v2485, %v2485
  %v2550 = vpack.c.bf16 %v2487, %v2487
  %v2551 = vpack.c.bf16 %v2490, %v2490
  %v2552 = vpack.c.bf16 %v2492, %v2492
  %v2553 = vpack.c.bf16 %v2495, %v2495
  %v2554 = vpack.c.bf16 %v2497, %v2497
  %v2555 = vpack.c.bf16 %v2500, %v2500
  %v2556 = vpack.c.bf16 %v2502, %v2502
  %v2557 = vpack.c.bf16 %v2505, %v2505
  %v2558 = vpack.c.bf16 %v2507, %v2507
  %v2559 = vpack.c.bf16 %v2510, %v2510
  %v2560 = vpack.c.bf16 %v2512, %v2512
  %v2561 = vpack.c.bf16 %v2515, %v2515
  %v2562 = vpack.c.bf16 %v2517, %v2517
  %v2563 = vpack.c.bf16 %v2520, %v2520
  %v2564 = vpack.c.bf16 %v2522, %v2522
  %v2565 = vpack.c.bf16 %v2525, %v2525
  %v2566 = vpack.c.bf16 %v2527, %v2527
  %v2567 = vpack.c.bf16 %v2530, %v2530
  %v2568 = vpack.c.bf16 %v2532, %v2532
  %v2569 = vpack.c.bf16 %v2535, %v2535
  %v2570 = vpack.c.bf16 %v2537, %v2537
  %s2571 = scalar_lea.vmem %s3, 1280
  %2572 = vst.msk [vmem:[%s2571] sm:$0xf] %vm331, %v2539
  %2573 = vst.msk [vmem:[%s2571 + $0x4] sm:$0xf] %vm331, %v2540
  %2574 = vst.msk [vmem:[%s2571 + $0x8] sm:$0xf] %vm331, %v2541
  %2575 = vst.msk [vmem:[%s2571 + $0xc] sm:$0xf] %vm331, %v2542
  %2576 = vst.msk [vmem:[%s2571 + $0x10] sm:$0xf] %vm331, %v2543
  %2577 = vst.msk [vmem:[%s2571 + $0x14] sm:$0xf] %vm331, %v2544
  %2578 = vst.msk [vmem:[%s2571 + $0x18] sm:$0xf] %vm331, %v2545
  %2579 = vst.msk [vmem:[%s2571 + $0x1c] sm:$0xf] %vm331, %v2546
  %2580 = vst.msk [vmem:[%s2571 + $0x20] sm:$0xf] %vm331, %v2547
  %2581 = vst.msk [vmem:[%s2571 + $0x24] sm:$0xf] %vm331, %v2548
  %2582 = vst.msk [vmem:[%s2571 + $0x28] sm:$0xf] %vm331, %v2549
  %2583 = vst.msk [vmem:[%s2571 + $0x2c] sm:$0xf] %vm331, %v2550
  %2584 = vst.msk [vmem:[%s2571 + $0x30] sm:$0xf] %vm331, %v2551
  %2585 = vst.msk [vmem:[%s2571 + $0x34] sm:$0xf] %vm331, %v2552
  %2586 = vst.msk [vmem:[%s2571 + $0x38] sm:$0xf] %vm331, %v2553
  %2587 = vst.msk [vmem:[%s2571 + $0x3c] sm:$0xf] %vm331, %v2554
  %2588 = vst.msk [vmem:[%s2571 + $0x40] sm:$0xf] %vm331, %v2555
  %2589 = vst.msk [vmem:[%s2571 + $0x44] sm:$0xf] %vm331, %v2556
  %2590 = vst.msk [vmem:[%s2571 + $0x48] sm:$0xf] %vm331, %v2557
  %2591 = vst.msk [vmem:[%s2571 + $0x4c] sm:$0xf] %vm331, %v2558
  %2592 = vst.msk [vmem:[%s2571 + $0x50] sm:$0xf] %vm331, %v2559
  %2593 = vst.msk [vmem:[%s2571 + $0x54] sm:$0xf] %vm331, %v2560
  %2594 = vst.msk [vmem:[%s2571 + $0x58] sm:$0xf] %vm331, %v2561
  %2595 = vst.msk [vmem:[%s2571 + $0x5c] sm:$0xf] %vm331, %v2562
  %2596 = vst.msk [vmem:[%s2571 + $0x60] sm:$0xf] %vm331, %v2563
  %2597 = vst.msk [vmem:[%s2571 + $0x64] sm:$0xf] %vm331, %v2564
  %2598 = vst.msk [vmem:[%s2571 + $0x68] sm:$0xf] %vm331, %v2565
  %2599 = vst.msk [vmem:[%s2571 + $0x6c] sm:$0xf] %vm331, %v2566
  %2600 = vst.msk [vmem:[%s2571 + $0x70] sm:$0xf] %vm331, %v2567
  %2601 = vst.msk [vmem:[%s2571 + $0x74] sm:$0xf] %vm331, %v2568
  %2602 = vst.msk [vmem:[%s2571 + $0x78] sm:$0xf] %vm331, %v2569
  %2603 = vst.msk [vmem:[%s2571 + $0x7c] sm:$0xf] %vm331, %v2570
  %s2604 = scalar_lea.vmem %s1, 704
  %v2605 = vld [vmem:[%s2604] sm:$0xf]
  %v2606 = vld [vmem:[%s2604 + $0x4] sm:$0xf]
  %v2607 = vld [vmem:[%s2604 + $0x8] sm:$0xf]
  %v2608 = vld [vmem:[%s2604 + $0xc] sm:$0xf]
  %v2609 = vld [vmem:[%s2604 + $0x10] sm:$0xf]
  %v2610 = vld [vmem:[%s2604 + $0x14] sm:$0xf]
  %v2611 = vld [vmem:[%s2604 + $0x18] sm:$0xf]
  %v2612 = vld [vmem:[%s2604 + $0x1c] sm:$0xf]
  %v2613 = vld [vmem:[%s2604 + $0x20] sm:$0xf]
  %v2614 = vld [vmem:[%s2604 + $0x24] sm:$0xf]
  %v2615 = vld [vmem:[%s2604 + $0x28] sm:$0xf]
  %v2616 = vld [vmem:[%s2604 + $0x2c] sm:$0xf]
  %v2617 = vld [vmem:[%s2604 + $0x30] sm:$0xf]
  %v2618 = vld [vmem:[%s2604 + $0x34] sm:$0xf]
  %v2619 = vld [vmem:[%s2604 + $0x38] sm:$0xf]
  %v2620 = vld [vmem:[%s2604 + $0x3c] sm:$0xf]
  %s2621 = scalar_lea.vmem %s2, 11
  %v2622 = vld [vmem:[%s2621] sm:$0x1]
  %v2624 = vperm.slane %v2622, 0
  %v2642 = vunpack.c.l.b16 %v2605
  %v2643 = vunpack.c.l.b16 %v2606
  %v2644 = vunpack.c.l.b16 %v2607
  %v2645 = vunpack.c.l.b16 %v2608
  %v2646 = vunpack.c.l.b16 %v2609
  %v2647 = vunpack.c.l.b16 %v2610
  %v2648 = vunpack.c.l.b16 %v2611
  %v2649 = vunpack.c.l.b16 %v2612
  %v2650 = vunpack.c.l.b16 %v2613
  %v2651 = vunpack.c.l.b16 %v2614
  %v2652 = vunpack.c.l.b16 %v2615
  %v2653 = vunpack.c.l.b16 %v2616
  %v2654 = vunpack.c.l.b16 %v2617
  %v2655 = vunpack.c.l.b16 %v2618
  %v2656 = vunpack.c.l.b16 %v2619
  %v2657 = vunpack.c.l.b16 %v2620
  %v2658 = vpack.c.b16 %v2643, %v2642
  %v2659 = vpack.c.b16 %v2645, %v2644
  %v2660 = vpack.c.b16 %v2647, %v2646
  %v2661 = vpack.c.b16 %v2649, %v2648
  %v2662 = vpack.c.b16 %v2651, %v2650
  %v2663 = vpack.c.b16 %v2653, %v2652
  %v2664 = vpack.c.b16 %v2655, %v2654
  %v2665 = vpack.c.b16 %v2657, %v2656
  %2674 = vmatpush.bf16.msra.mxu0 %v2665
  %2675 = vmatpush.bf16.msra.mxu0 %v2664
  %2676 = vmatpush.bf16.msra.mxu0 %v2663
  %2677 = vmatpush.bf16.msra.mxu0 %v2662
  %2678 = vmatpush.bf16.msra.mxu0 %v2661
  %2679 = vmatpush.bf16.msra.mxu0 %v2660
  %2680 = vmatpush.bf16.msra.mxu0 %v2659
  %2681 = vmatpush.bf16.msra.mxu0 %v2658
  %2682 = vmatmul.bf16.gmra.mxu0 %v130
  %v2683 = vpop.f32.mrf.mxu0
  %v2684 = vadd.f32 %v2624, %v2683
  %v2685 = vpop.f32.mrf.mxu0
  %v2686 = vadd.f32 %v2624, %v2685
  %2687 = vmatmul.bf16.gmra.mxu0 %v131
  %v2688 = vpop.f32.mrf.mxu0
  %v2689 = vadd.f32 %v2624, %v2688
  %v2690 = vpop.f32.mrf.mxu0
  %v2691 = vadd.f32 %v2624, %v2690
  %2692 = vmatmul.bf16.gmra.mxu0 %v132
  %v2693 = vpop.f32.mrf.mxu0
  %v2694 = vadd.f32 %v2624, %v2693
  %v2695 = vpop.f32.mrf.mxu0
  %v2696 = vadd.f32 %v2624, %v2695
  %2697 = vmatmul.bf16.gmra.mxu0 %v133
  %v2698 = vpop.f32.mrf.mxu0
  %v2699 = vadd.f32 %v2624, %v2698
  %v2700 = vpop.f32.mrf.mxu0
  %v2701 = vadd.f32 %v2624, %v2700
  %2702 = vmatmul.bf16.gmra.mxu0 %v134
  %v2703 = vpop.f32.mrf.mxu0
  %v2704 = vadd.f32 %v2624, %v2703
  %v2705 = vpop.f32.mrf.mxu0
  %v2706 = vadd.f32 %v2624, %v2705
  %2707 = vmatmul.bf16.gmra.mxu0 %v135
  %v2708 = vpop.f32.mrf.mxu0
  %v2709 = vadd.f32 %v2624, %v2708
  %v2710 = vpop.f32.mrf.mxu0
  %v2711 = vadd.f32 %v2624, %v2710
  %2712 = vmatmul.bf16.gmra.mxu0 %v136
  %v2713 = vpop.f32.mrf.mxu0
  %v2714 = vadd.f32 %v2624, %v2713
  %v2715 = vpop.f32.mrf.mxu0
  %v2716 = vadd.f32 %v2624, %v2715
  %2717 = vmatmul.bf16.gmra.mxu0 %v137
  %v2718 = vpop.f32.mrf.mxu0
  %v2719 = vadd.f32 %v2624, %v2718
  %v2720 = vpop.f32.mrf.mxu0
  %v2721 = vadd.f32 %v2624, %v2720
  %2722 = vmatmul.bf16.gmra.mxu0 %v138
  %v2723 = vpop.f32.mrf.mxu0
  %v2724 = vadd.f32 %v2624, %v2723
  %v2725 = vpop.f32.mrf.mxu0
  %v2726 = vadd.f32 %v2624, %v2725
  %2727 = vmatmul.bf16.gmra.mxu0 %v139
  %v2728 = vpop.f32.mrf.mxu0
  %v2729 = vadd.f32 %v2624, %v2728
  %v2730 = vpop.f32.mrf.mxu0
  %v2731 = vadd.f32 %v2624, %v2730
  %2732 = vmatmul.bf16.gmra.mxu0 %v140
  %v2733 = vpop.f32.mrf.mxu0
  %v2734 = vadd.f32 %v2624, %v2733
  %v2735 = vpop.f32.mrf.mxu0
  %v2736 = vadd.f32 %v2624, %v2735
  %2737 = vmatmul.bf16.gmra.mxu0 %v141
  %v2738 = vpop.f32.mrf.mxu0
  %v2739 = vadd.f32 %v2624, %v2738
  %v2740 = vpop.f32.mrf.mxu0
  %v2741 = vadd.f32 %v2624, %v2740
  %2742 = vmatmul.bf16.gmra.mxu0 %v142
  %v2743 = vpop.f32.mrf.mxu0
  %v2744 = vadd.f32 %v2624, %v2743
  %v2745 = vpop.f32.mrf.mxu0
  %v2746 = vadd.f32 %v2624, %v2745
  %2747 = vmatmul.bf16.gmra.mxu0 %v143
  %v2748 = vpop.f32.mrf.mxu0
  %v2749 = vadd.f32 %v2624, %v2748
  %v2750 = vpop.f32.mrf.mxu0
  %v2751 = vadd.f32 %v2624, %v2750
  %2752 = vmatmul.bf16.gmra.mxu0 %v144
  %v2753 = vpop.f32.mrf.mxu0
  %v2754 = vadd.f32 %v2624, %v2753
  %v2755 = vpop.f32.mrf.mxu0
  %v2756 = vadd.f32 %v2624, %v2755
  %2757 = vmatmul.bf16.gmra.mxu0 %v145
  %v2758 = vpop.f32.mrf.mxu0
  %v2759 = vadd.f32 %v2624, %v2758
  %v2760 = vpop.f32.mrf.mxu0
  %v2761 = vadd.f32 %v2624, %v2760
  %2762 = vdwg.mxu0
  %v2763 = vpack.c.bf16 %v2684, %v2684
  %v2764 = vpack.c.bf16 %v2686, %v2686
  %v2765 = vpack.c.bf16 %v2689, %v2689
  %v2766 = vpack.c.bf16 %v2691, %v2691
  %v2767 = vpack.c.bf16 %v2694, %v2694
  %v2768 = vpack.c.bf16 %v2696, %v2696
  %v2769 = vpack.c.bf16 %v2699, %v2699
  %v2770 = vpack.c.bf16 %v2701, %v2701
  %v2771 = vpack.c.bf16 %v2704, %v2704
  %v2772 = vpack.c.bf16 %v2706, %v2706
  %v2773 = vpack.c.bf16 %v2709, %v2709
  %v2774 = vpack.c.bf16 %v2711, %v2711
  %v2775 = vpack.c.bf16 %v2714, %v2714
  %v2776 = vpack.c.bf16 %v2716, %v2716
  %v2777 = vpack.c.bf16 %v2719, %v2719
  %v2778 = vpack.c.bf16 %v2721, %v2721
  %v2779 = vpack.c.bf16 %v2724, %v2724
  %v2780 = vpack.c.bf16 %v2726, %v2726
  %v2781 = vpack.c.bf16 %v2729, %v2729
  %v2782 = vpack.c.bf16 %v2731, %v2731
  %v2783 = vpack.c.bf16 %v2734, %v2734
  %v2784 = vpack.c.bf16 %v2736, %v2736
  %v2785 = vpack.c.bf16 %v2739, %v2739
  %v2786 = vpack.c.bf16 %v2741, %v2741
  %v2787 = vpack.c.bf16 %v2744, %v2744
  %v2788 = vpack.c.bf16 %v2746, %v2746
  %v2789 = vpack.c.bf16 %v2749, %v2749
  %v2790 = vpack.c.bf16 %v2751, %v2751
  %v2791 = vpack.c.bf16 %v2754, %v2754
  %v2792 = vpack.c.bf16 %v2756, %v2756
  %v2793 = vpack.c.bf16 %v2759, %v2759
  %v2794 = vpack.c.bf16 %v2761, %v2761
  %s2795 = scalar_lea.vmem %s3, 1408
  %2796 = vst.msk [vmem:[%s2795] sm:$0xf] %vm331, %v2763
  %2797 = vst.msk [vmem:[%s2795 + $0x4] sm:$0xf] %vm331, %v2764
  %2798 = vst.msk [vmem:[%s2795 + $0x8] sm:$0xf] %vm331, %v2765
  %2799 = vst.msk [vmem:[%s2795 + $0xc] sm:$0xf] %vm331, %v2766
  %2800 = vst.msk [vmem:[%s2795 + $0x10] sm:$0xf] %vm331, %v2767
  %2801 = vst.msk [vmem:[%s2795 + $0x14] sm:$0xf] %vm331, %v2768
  %2802 = vst.msk [vmem:[%s2795 + $0x18] sm:$0xf] %vm331, %v2769
  %2803 = vst.msk [vmem:[%s2795 + $0x1c] sm:$0xf] %vm331, %v2770
  %2804 = vst.msk [vmem:[%s2795 + $0x20] sm:$0xf] %vm331, %v2771
  %2805 = vst.msk [vmem:[%s2795 + $0x24] sm:$0xf] %vm331, %v2772
  %2806 = vst.msk [vmem:[%s2795 + $0x28] sm:$0xf] %vm331, %v2773
  %2807 = vst.msk [vmem:[%s2795 + $0x2c] sm:$0xf] %vm331, %v2774
  %2808 = vst.msk [vmem:[%s2795 + $0x30] sm:$0xf] %vm331, %v2775
  %2809 = vst.msk [vmem:[%s2795 + $0x34] sm:$0xf] %vm331, %v2776
  %2810 = vst.msk [vmem:[%s2795 + $0x38] sm:$0xf] %vm331, %v2777
  %2811 = vst.msk [vmem:[%s2795 + $0x3c] sm:$0xf] %vm331, %v2778
  %2812 = vst.msk [vmem:[%s2795 + $0x40] sm:$0xf] %vm331, %v2779
  %2813 = vst.msk [vmem:[%s2795 + $0x44] sm:$0xf] %vm331, %v2780
  %2814 = vst.msk [vmem:[%s2795 + $0x48] sm:$0xf] %vm331, %v2781
  %2815 = vst.msk [vmem:[%s2795 + $0x4c] sm:$0xf] %vm331, %v2782
  %2816 = vst.msk [vmem:[%s2795 + $0x50] sm:$0xf] %vm331, %v2783
  %2817 = vst.msk [vmem:[%s2795 + $0x54] sm:$0xf] %vm331, %v2784
  %2818 = vst.msk [vmem:[%s2795 + $0x58] sm:$0xf] %vm331, %v2785
  %2819 = vst.msk [vmem:[%s2795 + $0x5c] sm:$0xf] %vm331, %v2786
  %2820 = vst.msk [vmem:[%s2795 + $0x60] sm:$0xf] %vm331, %v2787
  %2821 = vst.msk [vmem:[%s2795 + $0x64] sm:$0xf] %vm331, %v2788
  %2822 = vst.msk [vmem:[%s2795 + $0x68] sm:$0xf] %vm331, %v2789
  %2823 = vst.msk [vmem:[%s2795 + $0x6c] sm:$0xf] %vm331, %v2790
  %2824 = vst.msk [vmem:[%s2795 + $0x70] sm:$0xf] %vm331, %v2791
  %2825 = vst.msk [vmem:[%s2795 + $0x74] sm:$0xf] %vm331, %v2792
  %2826 = vst.msk [vmem:[%s2795 + $0x78] sm:$0xf] %vm331, %v2793
  %2827 = vst.msk [vmem:[%s2795 + $0x7c] sm:$0xf] %vm331, %v2794
  // Predicated region
  $region14: #{tpu_custom_call.1} parent=0 // pred_check
    _
  $region15: #{tpu_custom_call.1} parent=0 // pred_check_branch
    %2829 = sbr.rel (0) target = $region17
  $region16: #{tpu_custom_call.1} parent=0 // pred_region
    _
  $region17: #{tpu_custom_call.1} parent=0 // pred_fallthru
    _
  // Predicated region
  $region18: #{tpu_custom_call.1} parent=0 // pred_check
    _
  $region19: #{tpu_custom_call.1} parent=0 // pred_check_branch
    %2831 = sbr.rel (0) target = $region21
  $region20: #{tpu_custom_call.1} parent=0 // pred_region
    _
  $region21: #{tpu_custom_call.1} parent=0 // pred_fallthru
    _

</llo_original>
